<compile_context>
chip_gen: v6e
topology: v6e:2x2x1
jax: 0.10.0
libtpu: 0.0.40
codegen_flags: <defaults>
</compile_context>

<pallas_src>
import functools
import math

import jax
import jax.numpy as jnp
from jax import lax
from jax.experimental import pallas as pl
from jax.experimental.pallas import tpu as pltpu


def _round_up(x, m):
    return (x + m - 1) // m * m


_NT = (((1,), (1,)), ((), ()))   # dot_general: contract last dims (A @ B^T)


# ---------------------------------------------------------------------------
# Kernel A: layer-0 projection  x0 = relu(x @ W0^T + b0)   (row-tiled)
# ---------------------------------------------------------------------------
def _init_proj_kernel(x_ref, w_ref, b_ref, o_ref):
    o_ref[...] = jnp.maximum(
        jnp.dot(x_ref[...], w_ref[...], preferred_element_type=jnp.float32)
        + b_ref[...], 0.0)


def init_projection(x_p, w0, b0):
    n_pad, in_pad = x_p.shape
    d_pad = w0.shape[1]
    tile_n = 512 if n_pad % 512 == 0 else (256 if n_pad % 256 == 0 else 128)
    tile_n = min(tile_n, n_pad)
    return pl.pallas_call(
        _init_proj_kernel,
        grid=(n_pad // tile_n,),
        in_specs=[pl.BlockSpec((tile_n, in_pad), lambda i: (i, 0)),
                  pl.BlockSpec((in_pad, d_pad), lambda i: (0, 0)),
                  pl.BlockSpec((1, d_pad), lambda i: (0, 0))],
        out_specs=pl.BlockSpec((tile_n, d_pad), lambda i: (i, 0)),
        out_shape=jax.ShapeDtypeStruct((n_pad, d_pad), jnp.float32),
        compiler_params=pltpu.CompilerParams(dimension_semantics=("parallel",)),
    )(x_p, w0, b0)


# ---------------------------------------------------------------------------
# Kernel B: pairwise dist/degree scores for ALL layers in one pass.
#   out[l, r*K+c] = [dist_feat[r,c] || deg_feat[r,c]] . [w_dist_l || w_deg_l]
# L-major output -> lane dim is the (large) pair index: lane-dense stores.
# ---------------------------------------------------------------------------
def _pair_score_kernel(feat_ref, w_ref, o_ref):
    o_ref[...] = lax.dot_general(
        w_ref[...], feat_ref[...], _NT,
        preferred_element_type=jnp.float32).astype(o_ref.dtype)


def pairwise_scores(feat_cat, w_cat, *, tile_rows=2048):
    r, f = feat_cat.shape
    l_pad = w_cat.shape[0]
    tile_rows = min(tile_rows, _round_up(r, 256))
    r_pad = _round_up(r, tile_rows)
    if r_pad != r:
        feat_cat = jnp.pad(feat_cat, ((0, r_pad - r), (0, 0)))
    return pl.pallas_call(
        _pair_score_kernel,
        grid=(r_pad // tile_rows,),
        in_specs=[pl.BlockSpec((tile_rows, f), lambda i: (i, 0)),
                  pl.BlockSpec((l_pad, f), lambda i: (0, 0))],
        out_specs=pl.BlockSpec((l_pad, tile_rows), lambda i: (0, i)),
        out_shape=jax.ShapeDtypeStruct((l_pad, r_pad), jnp.bfloat16),
        compiler_params=pltpu.CompilerParams(dimension_semantics=("parallel",)),
    )(feat_cat, w_cat)


# ---------------------------------------------------------------------------
# Kernel C: all GeoConv layers fused; grid axis = layer (sequential).
# ---------------------------------------------------------------------------
def _fused_hyper_kernel(beta_s, ba_s,
                        x0_ref, e0_ref, hnm_ref, hmn_ref, degv_ref, dege_ref,
                        pv2e_ref, pe2v_ref, wa_ref, wnode_ref, wedge_ref,
                        xout_ref, eout_ref,
                        x_scr, e_scr,
                        *, alpha, num_layers):
    f32, bf16 = jnp.float32, jnp.bfloat16
    layer = pl.program_id(0)

    @pl.when(layer == 0)
    def _seed():
        x_scr[...] = x0_ref[...]      # x0 = relu(W0 x) (kernel A output)
        e_scr[...] = e0_ref[...]      # e0 = e

    beta = beta_s[layer]
    ba = ba_s[layer]                  # attention bias + dist/deg biases folded
    X = x_scr[...]                    # [N, D] f32
    E = e_scr[...]                    # [M, D] f32
    Xb = X.astype(bf16)
    Eb = E.astype(bf16)
    wa = wa_ref[0]                    # [8, D] bf16; row0 = w_attn[:D], row1 = w_attn[D:]
    wa2 = wa[1:2, :].astype(f32)      # [1, D]
    NEG = f32(-1e30)

    # Per-node / per-edge attention terms.  Row-oriented ([1,*]) terms via a
    # small MXU matmul, column-oriented ([*,1]) terms via a lane reduction.
    rowX = lax.dot_general(wa, Xb, _NT, preferred_element_type=f32)   # [8, N]
    rowE = lax.dot_general(wa, Eb, _NT, preferred_element_type=f32)   # [8, M]
    sxa = rowX[0:1, :]                                    # wa1.X[n] -> [1, N]
    sea = rowE[0:1, :]                                    # wa1.E[m] -> [1, M]
    seb = jnp.sum(E * wa2, axis=1, keepdims=True)         # wa2.E[m] -> [M, 1]
    sxb = jnp.sum(X * wa2, axis=1, keepdims=True)         # wa2.X[n] -> [N, 1]

    # ---- node -> hyperedge softmax (over incident nodes of each edge), [M, N]
    s1 = (seb + ba) + sxa + pv2e_ref[0].astype(f32)
    s1 = jnp.where(hmn_ref[...] > 0, s1, NEG)
    p1 = jnp.exp(s1 - jnp.max(s1, axis=1, keepdims=True))
    l1 = jnp.sum(p1, axis=1, keepdims=True)               # >= 1 always (max shift)
    a_v2e = (p1 * (dege_ref[...] * pl.reciprocal(l1, approx=True))).astype(bf16)

    # ---- hyperedge -> node softmax (over incident edges of each node), [N, M]
    s2 = (sxb + ba) + sea + pe2v_ref[0].astype(f32)
    s2 = jnp.where(hnm_ref[...] > 0, s2, NEG)
    p2 = jnp.exp(s2 - jnp.max(s2, axis=1, keepdims=True))
    l2 = jnp.sum(p2, axis=1, keepdims=True)
    a_e2v = (p2 * (degv_ref[...] * pl.reciprocal(l2, approx=True))).astype(bf16)

    # ---- message passing, ordered so a_v2e streams through the MXU once with
    #      a 256-wide RHS (review item: fuse xe1/xe2 into one matmul).
    d = Xb.shape[1]
    xv2 = jnp.dot(a_e2v, Eb, preferred_element_type=f32)              # [N, D]
    rhs = jnp.concatenate([Xb, xv2.astype(bf16)], axis=1)             # [N, 2D]
    xe12 = jnp.dot(a_v2e, rhs, preferred_element_type=f32)            # [M, 2D]
    xe1 = xe12[:, :d]
    xe2 = xe12[:, d:]
    xv1 = jnp.dot(a_e2v, xe1.astype(bf16), preferred_element_type=f32)  # [N, D]

    xn = (xv1 + xv2) * 0.5
    en = (xe1 + xe2) * 0.5

    # GCNII-style residual + identity-mixed linear maps
    xi = (1.0 - alpha) * xn + alpha * x0_ref[...]
    xo = (1.0 - beta) * xi + beta * jnp.dot(xi.astype(bf16), wnode_ref[0],
                                            preferred_element_type=f32)
    ei = (1.0 - alpha) * en + alpha * e0_ref[...]
    eo = (1.0 - beta) * ei + beta * jnp.dot(ei.astype(bf16), wedge_ref[0],
                                            preferred_element_type=f32)

    # carry ReLU'd state to the next layer; final outputs are the raw last layer
    x_scr[...] = jnp.maximum(xo, 0.0)
    e_scr[...] = jnp.maximum(eo, 0.0)

    @pl.when(layer == num_layers - 1)
    def _finalize():
        xout_ref[...] = xo
        eout_ref[...] = eo


def _fused_vmem_bytes(n_pad, m_pad, d_pad):
    f32b, bf16b = 4, 2
    pinned = (n_pad * d_pad * f32b + m_pad * d_pad * f32b      # x0, e0
              + 2 * n_pad * m_pad * bf16b                      # h_nm, h_mn
              + (n_pad + m_pad) * 128 * f32b)                  # deg scales (lane-padded)
    streamed = 2 * (2 * n_pad * m_pad * bf16b                  # two score slabs
                    + 8 * d_pad * bf16b + 2 * d_pad * d_pad * bf16b)
    carries = (n_pad + m_pad) * d_pad * f32b
    outs = 2 * (n_pad + m_pad) * d_pad * f32b
    live = 6 * n_pad * m_pad * f32b + 6 * (n_pad + m_pad) * d_pad * f32b
    est = pinned + streamed + carries + outs + live
    return int(min(max(2 * est + (8 << 20), 32 << 20), 100 << 20))


def fused_hyper_layers(betas, bas, x0_p, e_p, h_nm, h_mn, degv_s, dege_s,
                       st_pad, wa, wnode, wedge, *, alpha, num_layers):
    n_pad, d_pad = x0_p.shape
    m_pad = e_p.shape[0]
    smem = pl.BlockSpec(memory_space=pltpu.MemorySpace.SMEM)

    def pinned(shape):   # whole array, resident across all layers, single-buffered
        return pl.BlockSpec(shape, lambda l, _s=len(shape): (0,) * _s,
                            pipeline_mode=pl.Buffered(1))

    def per_layer(shape):  # one [1, ...] slab per grid step (layer), double-buffered
        return pl.BlockSpec((1,) + shape, lambda l, _s=len(shape): (l,) + (0,) * _s)

    kern = functools.partial(_fused_hyper_kernel, alpha=float(alpha),
                             num_layers=num_layers)
    return pl.pallas_call(
        kern,
        grid=(num_layers,),
        in_specs=[smem, smem,
                  pinned((n_pad, d_pad)), pinned((m_pad, d_pad)),
                  pinned((n_pad, m_pad)), pinned((m_pad, n_pad)),
                  pinned((n_pad, 1)), pinned((m_pad, 1)),
                  per_layer((m_pad, n_pad)),      # v2e score view of st_pad
                  per_layer((n_pad, m_pad)),      # e2v score view of st_pad
                  per_layer((8, d_pad)),
                  per_layer((d_pad, d_pad)), per_layer((d_pad, d_pad))],
        out_specs=(pl.BlockSpec((n_pad, d_pad), lambda l: (0, 0)),
                   pl.BlockSpec((m_pad, d_pad), lambda l: (0, 0))),
        out_shape=(jax.ShapeDtypeStruct((n_pad, d_pad), jnp.float32),
                   jax.ShapeDtypeStruct((m_pad, d_pad), jnp.float32)),
        scratch_shapes=[pltpu.VMEM((n_pad, d_pad), jnp.float32),   # x carry
                        pltpu.VMEM((m_pad, d_pad), jnp.float32)],  # e carry
        compiler_params=pltpu.CompilerParams(
            dimension_semantics=("arbitrary",),
            vmem_limit_bytes=_fused_vmem_bytes(n_pad, m_pad, d_pad)),
    )(betas, bas, x0_p, e_p, h_nm, h_mn, degv_s, dege_s,
      st_pad, st_pad, wa, wnode, wedge)


# ---------------------------------------------------------------------------
# HyperEncoder forward: padding / packing glue in plain JAX, hot path in the
# three kernels above.
# ---------------------------------------------------------------------------
def hyper_encoder_forward(x, e, H, dist_feat, deg_feat, params, *, num_layers=4,
                          lamda=0.5, alpha=0.1):
    n, in_dim = x.shape
    m, node_dim = e.shape
    k = dist_feat.shape[0]
    nl = num_layers
    assert k >= max(n, m)

    n_pad = _round_up(n, 128)
    m_pad = _round_up(m, 128)
    d_pad = _round_up(node_dim, 128)
    in_pad = _round_up(in_dim, 128)
    p_pad = max(_round_up(k, 128), n_pad, m_pad)
    layers = params["layers"]

    # --- get_degree_of_hypergraph (dense equivalents); row-validity (empty
    #     edges / isolated nodes / padding) is folded into the scales so those
    #     rows aggregate to exactly 0, matching the scatter semantics.
    dv = jnp.sum(H, axis=1)                                   # node degree [N]
    card = jnp.sum(H, axis=0)                                 # nodes per edge [M]
    de = jnp.where(card > 0, (H.T @ dv) / jnp.maximum(card, 1.0), 1.0)
    degv_s = jnp.where(dv > 0, lax.rsqrt(jnp.maximum(dv, 1e-12)), 0.0).reshape(-1, 1)
    dege_s = jnp.where(card > 0, lax.rsqrt(jnp.maximum(de, 1e-12)), 0.0).reshape(-1, 1)
    degv_s = jnp.pad(degv_s, ((0, n_pad - n), (0, 0)))
    dege_s = jnp.pad(dege_s, ((0, m_pad - m), (0, 0)))

    # --- kernel B: dist/degree scores for ALL layers, read from HBM once ---
    feat_cat = jnp.concatenate([dist_feat, deg_feat], axis=-1)
    feat_cat = feat_cat.reshape(k * k, 2 * node_dim).astype(jnp.bfloat16)
    l_pad = max(8, _round_up(nl, 8))
    w_cat = jnp.stack([jnp.concatenate([lp["w_dist"], lp["w_deg"]]) for lp in layers])
    w_cat = jnp.pad(w_cat, ((0, l_pad - nl), (0, 0))).astype(jnp.bfloat16)
    scores = pairwise_scores(feat_cat, w_cat)                 # [l_pad, r_pad] bf16
    s = scores[:nl, :k * k].reshape(nl, k, k)                 # s[l, r, c] = score(r, c)
    # both per-layer slabs are sub-blocks of the transposed tensor st[l, c, r]
    # TODO(synk): at large K fuse this (small bf16) transpose into kernel B.
    st = jnp.transpose(s, (0, 2, 1))
    st_pad = jnp.pad(st, ((0, 0), (0, p_pad - k), (0, p_pad - k)))

    # --- kernel A: layer-0 projection (kept out of the fused kernel) ---
    x_p = jnp.pad(x, ((0, n_pad - n), (0, in_pad - in_dim))).astype(jnp.bfloat16)
    w0 = jnp.pad(params["w0_t"],
                 ((0, in_pad - in_dim), (0, d_pad - node_dim))).astype(jnp.bfloat16)
    b0 = jnp.pad(params["b0"], ((0, 0), (0, d_pad - node_dim)))
    x0_p = init_projection(x_p, w0, b0)                       # [n_pad, d_pad] f32

    # --- pad & stack operands for the fused multi-layer kernel ---
    e_p = jnp.pad(e, ((0, m_pad - m), (0, d_pad - node_dim)))
    h_nm = jnp.pad(H, ((0, n_pad - n), (0, m_pad - m))).astype(jnp.bfloat16)
    h_mn = h_nm.T                                             # [m_pad, n_pad] bf16

    def pad_dd(w):
        return jnp.pad(w, ((0, d_pad - node_dim), (0, d_pad - node_dim)))

    # attention weight halves: wa1 = w_attn[:D] (first concat element),
    # wa2 = w_attn[D:] (second).  v2e scores X with wa1 / E with wa2; e2v
    # scores E with wa1 / X with wa2 -- exactly the PyTorch concat order.
    wa = jnp.stack([
        jnp.pad(jnp.stack([lp["wa1"][:, 0], lp["wa2"][:, 0]], axis=0),
                ((0, 6), (0, d_pad - node_dim)))
        for lp in layers], axis=0).astype(jnp.bfloat16)       # [L, 8, D_pad]
    wnode = jnp.stack([pad_dd(lp["wnode_t"]) for lp in layers],
                      axis=0).astype(jnp.bfloat16)            # [L, D_pad, D_pad]
    wedge = jnp.stack([pad_dd(lp["wedge_t"]) for lp in layers],
                      axis=0).astype(jnp.bfloat16)

    betas = jnp.asarray([math.log(lamda / (i + 1) + 1.0) for i in range(nl)],
                        jnp.float32)
    bas = jnp.stack([(lp["ba"].reshape(()) + lp["b_dist"] + lp["b_deg"])
                     .astype(jnp.float32) for lp in layers])

    x_full, e_full = fused_hyper_layers(
        betas, bas, x0_p, e_p, h_nm, h_mn, degv_s, dege_s,
        st_pad, wa, wnode, wedge, alpha=alpha, num_layers=nl)
    return x_full[:n, :node_dim], e_full[:m, :node_dim]


def init_params(key, in_dim, node_dim, num_layers):
    keys = jax.random.split(key, 2 + num_layers)
    s = 0.1
    params = {
        "w0_t": s * jax.random.normal(keys[0], (in_dim, node_dim), jnp.float32),
        "b0": s * jax.random.normal(keys[1], (1, node_dim), jnp.float32),
        "layers": [],
    }
    for i in range(num_layers):
        lk = jax.random.split(keys[2 + i], 8)
        params["layers"].append({
            "wa1": s * jax.random.normal(lk[0], (node_dim, 1), jnp.float32),
            "wa2": s * jax.random.normal(lk[1], (node_dim, 1), jnp.float32),
            "ba": s * jax.random.normal(lk[2], (1, 1), jnp.float32),
            "wnode_t": s * jax.random.normal(lk[3], (node_dim, node_dim), jnp.float32),
            "wedge_t": s * jax.random.normal(lk[4], (node_dim, node_dim), jnp.float32),
            "w_dist": s * jax.random.normal(lk[5], (node_dim,), jnp.float32),
            "b_dist": s * jax.random.normal(lk[6], (), jnp.float32),
            "w_deg": s * jax.random.normal(lk[7], (node_dim,), jnp.float32),
            "b_deg": jnp.float32(0.0),
        })
    return params


if __name__ == "__main__":
    key = jax.random.PRNGKey(0)
    N, M = 32, 16               # num nodes, num hyperedges
    in_dim, node_dim = 16, 32   # hyperedge features already node_dim-wide
    num_layers = 4

    k_x, k_e, k_h, k_d, k_g, k_p = jax.random.split(key, 6)
    x = jax.random.normal(k_x, (N, in_dim), jnp.float32)
    e = jax.random.normal(k_e, (M, node_dim), jnp.float32)

    # dense incidence matrix (replaces hyperedge_index); every node / hyperedge
    # has at least one incidence so the scatter softmaxes are well-defined
    # (the kernel additionally zeroes empty rows via the folded deg scales).
    H = (jax.random.uniform(k_h, (N, M)) < 0.35).astype(jnp.float32)
    H = H.at[jnp.arange(N), jnp.arange(N) % M].set(1.0)

    K = max(N, M)
    # TODO(synk): the original GeoConv loads int dist/degree matrices from .npy
    # and feeds dist_matrix[row, col] into Linear(in_features, 1); we synthesize
    # [K, K, node_dim] float feature tensors so those Linears are well-typed.
    dist_feat = jax.random.normal(k_d, (K, K, node_dim), jnp.float32)
    deg_feat = jax.random.normal(k_g, (K, K, node_dim), jnp.float32)

    params = init_params(k_p, in_dim, node_dim, num_layers)

    fwd = jax.jit(functools.partial(hyper_encoder_forward, num_layers=num_layers))
    x_out, e_out = fwd(x, e, H, dist_feat, deg_feat, params)
    jax.block_until_ready((x_out, e_out))
    assert x_out.shape == (N, node_dim) and e_out.shape == (M, node_dim)
    assert bool(jnp.all(jnp.isfinite(x_out))) and bool(jnp.all(jnp.isfinite(e_out)))
    print("KERNEL_OK")
</pallas_src>

<mosaic_0001>
module attributes {stable_mosaic.version = 11 : i64} {
  func.func @_pair_score_kernel(%arg0: i32, %arg1: memref<1024x64xbf16, #tpu.memory_space<vmem>>, %arg2: memref<8x64xbf16, #tpu.memory_space<vmem>>, %arg3: memref<8x1024xbf16, #tpu.memory_space<vmem>>) attributes {dimension_semantics = [#tpu.dimension_semantics<parallel>], iteration_bounds = array<i64: 1>, scalar_prefetch = 0 : i64, scratch_operands = 0 : i64, tpu.core_type = #tpu.core_type<tc>, window_params = [{transform_indices = @transform_0, window_bounds = array<i64: 1024, 64>}, {pipeline_mode = #tpu.pipeline_mode<synchronous>, transform_indices = @transform_1, window_bounds = array<i64: 8, 64>}, {transform_indices = @transform_2, window_bounds = array<i64: 8, 1024>}]} {
    %c0 = arith.constant 0 : index
    %c0_0 = arith.constant 0 : index
    %0 = vector.load %arg2[%c0, %c0_0] : memref<8x64xbf16, #tpu.memory_space<vmem>>, vector<8x64xbf16>
    %c0_1 = arith.constant 0 : index
    %c0_2 = arith.constant 0 : index
    %1 = vector.load %arg1[%c0_1, %c0_2] : memref<1024x64xbf16, #tpu.memory_space<vmem>>, vector<1024x64xbf16>
    %cst = arith.constant dense<0.000000e+00> : vector<8x1024xf32>
    %2 = tpu.matmul %0, %1, %cst {dimension_numbers = #tpu.dot_dimension_numbers<[1], [1], [0], [0], [0, 0, 1, 0], [], []>} : vector<8x64xbf16>, vector<1024x64xbf16>, vector<8x1024xf32> -> vector<8x1024xf32>
    %3 = arith.truncf %2 : vector<8x1024xf32> to vector<8x1024xbf16>
    %c0_3 = arith.constant 0 : index
    %c0_4 = arith.constant 0 : index
    %4 = vector.load %arg3[%c0_3, %c0_4] : memref<8x1024xbf16, #tpu.memory_space<vmem>>, vector<8x1024xbf16>
    tpu.vector_store %arg3[%c0_3, %c0_4], %3 {strides = array<i32>} : memref<8x1024xbf16, #tpu.memory_space<vmem>>, vector<8x1024xbf16>,
    return
  }
  func.func @transform_0(%arg0: i32) -> (i32, i32) {
    %c0_i32 = arith.constant 0 : i32
    %c0_i32_0 = arith.constant 0 : i32
    return %arg0, %c0_i32 : i32, i32
  }
  func.func @transform_1(%arg0: i32) -> (i32, i32) {
    %c0_i32 = arith.constant 0 : i32
    %c0_i32_0 = arith.constant 0 : i32
    %c0_i32_1 = arith.constant 0 : i32
    return %c0_i32, %c0_i32_0 : i32, i32
  }
  func.func @transform_2(%arg0: i32) -> (i32, i32) {
    %c0_i32 = arith.constant 0 : i32
    %c0_i32_0 = arith.constant 0 : i32
    return %c0_i32, %arg0 : i32, i32
  }
}

module attributes {stable_mosaic.version = 11 : i64} {
  func.func @_fused_hyper_kernel(%arg0: i32, %arg1: memref<4xf32, #tpu.memory_space<smem>>, %arg2: memref<4xf32, #tpu.memory_space<smem>>, %arg3: memref<128x128xf32, #tpu.memory_space<vmem>>, %arg4: memref<128x128xf32, #tpu.memory_space<vmem>>, %arg5: memref<128x128xbf16, #tpu.memory_space<vmem>>, %arg6: memref<128x128xbf16, #tpu.memory_space<vmem>>, %arg7: memref<128x1xf32, #tpu.memory_space<vmem>>, %arg8: memref<128x1xf32, #tpu.memory_space<vmem>>, %arg9: memref<1x128x128xbf16, #tpu.memory_space<vmem>>, %arg10: memref<1x128x128xbf16, #tpu.memory_space<vmem>>, %arg11: memref<1x8x128xbf16, #tpu.memory_space<vmem>>, %arg12: memref<1x128x128xbf16, #tpu.memory_space<vmem>>, %arg13: memref<1x128x128xbf16, #tpu.memory_space<vmem>>, %arg14: memref<128x128xf32, #tpu.memory_space<vmem>>, %arg15: memref<128x128xf32, #tpu.memory_space<vmem>>, %arg16: memref<128x128xf32, #tpu.memory_space<vmem>>, %arg17: memref<128x128xf32, #tpu.memory_space<vmem>>) attributes {dimension_semantics = [#tpu.dimension_semantics<arbitrary>], iteration_bounds = array<i64: 4>, scalar_prefetch = 0 : i64, scratch_operands = 2 : i64, tpu.core_type = #tpu.core_type<tc>, window_params = [{transform_indices = @transform_0, window_bounds = array<i64: 4>}, {transform_indices = @transform_1, window_bounds = array<i64: 4>}, {pipeline_mode = #tpu.pipeline_mode<synchronous>, transform_indices = @transform_2, window_bounds = array<i64: 128, 128>}, {pipeline_mode = #tpu.pipeline_mode<synchronous>, transform_indices = @transform_3, window_bounds = array<i64: 128, 128>}, {pipeline_mode = #tpu.pipeline_mode<synchronous>, transform_indices = @transform_4, window_bounds = array<i64: 128, 128>}, {pipeline_mode = #tpu.pipeline_mode<synchronous>, transform_indices = @transform_5, window_bounds = array<i64: 128, 128>}, {pipeline_mode = #tpu.pipeline_mode<synchronous>, transform_indices = @transform_6, window_bounds = array<i64: 128, 1>}, {pipeline_mode = #tpu.pipeline_mode<synchronous>, transform_indices = @transform_7, window_bounds = array<i64: 128, 1>}, {transform_indices = @transform_8, window_bounds = array<i64: 1, 128, 128>}, {transform_indices = @transform_9, window_bounds = array<i64: 1, 128, 128>}, {transform_indices = @transform_10, window_bounds = array<i64: 1, 8, 128>}, {transform_indices = @transform_11, window_bounds = array<i64: 1, 128, 128>}, {transform_indices = @transform_12, window_bounds = array<i64: 1, 128, 128>}, {pipeline_mode = #tpu.pipeline_mode<synchronous>, transform_indices = @transform_13, window_bounds = array<i64: 128, 128>}, {pipeline_mode = #tpu.pipeline_mode<synchronous>, transform_indices = @transform_14, window_bounds = array<i64: 128, 128>}]} {
    %c0_i32 = arith.constant 0 : i32
    %0 = arith.cmpi eq, %arg0, %c0_i32 : i32
    %1 = arith.extui %0 : i1 to i32
    %c0_i32_0 = arith.constant 0 : i32
    %2 = arith.cmpi ne, %1, %c0_i32_0 : i32
    scf.if %2 {
      %c0_62 = arith.constant 0 : index
      %c0_63 = arith.constant 0 : index
      %136 = vector.load %arg3[%c0_62, %c0_63] : memref<128x128xf32, #tpu.memory_space<vmem>>, vector<128x128xf32>
      %c0_64 = arith.constant 0 : index
      %c0_65 = arith.constant 0 : index
      %137 = vector.load %arg16[%c0_64, %c0_65] : memref<128x128xf32, #tpu.memory_space<vmem>>, vector<128x128xf32>
      tpu.vector_store %arg16[%c0_64, %c0_65], %136 {strides = array<i32>} : memref<128x128xf32, #tpu.memory_space<vmem>>, vector<128x128xf32>,
      %c0_66 = arith.constant 0 : index
      %c0_67 = arith.constant 0 : index
      %138 = vector.load %arg4[%c0_66, %c0_67] : memref<128x128xf32, #tpu.memory_space<vmem>>, vector<128x128xf32>
      %c0_68 = arith.constant 0 : index
      %c0_69 = arith.constant 0 : index
      %139 = vector.load %arg17[%c0_68, %c0_69] : memref<128x128xf32, #tpu.memory_space<vmem>>, vector<128x128xf32>
      tpu.vector_store %arg17[%c0_68, %c0_69], %138 {strides = array<i32>} : memref<128x128xf32, #tpu.memory_space<vmem>>, vector<128x128xf32>,
    } else {
    }
    %3 = arith.index_cast %arg0 : i32 to index
    %4 = memref.load %arg1[%3] : memref<4xf32, #tpu.memory_space<smem>>
    %5 = arith.index_cast %arg0 : i32 to index
    %6 = memref.load %arg2[%5] : memref<4xf32, #tpu.memory_space<smem>>
    %c0 = arith.constant 0 : index
    %c0_1 = arith.constant 0 : index
    %7 = vector.load %arg16[%c0, %c0_1] : memref<128x128xf32, #tpu.memory_space<vmem>>, vector<128x128xf32>
    %c0_2 = arith.constant 0 : index
    %c0_3 = arith.constant 0 : index
    %8 = vector.load %arg17[%c0_2, %c0_3] : memref<128x128xf32, #tpu.memory_space<vmem>>, vector<128x128xf32>
    %9 = arith.truncf %7 : vector<128x128xf32> to vector<128x128xbf16>
    %10 = arith.truncf %8 : vector<128x128xf32> to vector<128x128xbf16>
    %c0_4 = arith.constant 0 : index
    %c0_5 = arith.constant 0 : index
    %c0_6 = arith.constant 0 : index
    %11 = vector.load %arg11[%c0_4, %c0_5, %c0_6] : memref<1x8x128xbf16, #tpu.memory_space<vmem>>, vector<1x8x128xbf16>
    %12 = vector.shape_cast %11 : vector<1x8x128xbf16> to vector<8x128xbf16>
    %13 = vector.extract_strided_slice %12 {offsets = [1, 0], sizes = [1, 128], strides = [1, 1]} : vector<8x128xbf16> to vector<1x128xbf16>
    %14 = arith.extf %13 : vector<1x128xbf16> to vector<1x128xf32>
    %cst = arith.constant dense<0.000000e+00> : vector<8x128xf32>
    %15 = tpu.matmul %12, %9, %cst {dimension_numbers = #tpu.dot_dimension_numbers<[1], [1], [0], [0], [0, 0, 1, 0], [], []>} : vector<8x128xbf16>, vector<128x128xbf16>, vector<8x128xf32> -> vector<8x128xf32>
    %cst_7 = arith.constant dense<0.000000e+00> : vector<8x128xf32>
    %16 = tpu.matmul %12, %10, %cst_7 {dimension_numbers = #tpu.dot_dimension_numbers<[1], [1], [0], [0], [0, 0, 1, 0], [], []>} : vector<8x128xbf16>, vector<128x128xbf16>, vector<8x128xf32> -> vector<8x128xf32>
    %17 = vector.extract_strided_slice %15 {offsets = [0, 0], sizes = [1, 128], strides = [1, 1]} : vector<8x128xf32> to vector<1x128xf32>
    %18 = vector.extract_strided_slice %16 {offsets = [0, 0], sizes = [1, 128], strides = [1, 1]} : vector<8x128xf32> to vector<1x128xf32>
    %19 = vector.broadcast %14 : vector<1x128xf32> to vector<128x128xf32>
    %20 = arith.mulf %8, %19 : vector<128x128xf32>
    %cst_8 = arith.constant dense<0.000000e+00> : vector<128xf32>
    %21 = vector.multi_reduction <add>, %20, %cst_8 [1] : vector<128x128xf32> to vector<128xf32>
    %22 = vector.shape_cast %21 : vector<128xf32> to vector<128x1xf32>
    %23 = vector.broadcast %14 : vector<1x128xf32> to vector<128x128xf32>
    %24 = arith.mulf %7, %23 : vector<128x128xf32>
    %cst_9 = arith.constant dense<0.000000e+00> : vector<128xf32>
    %25 = vector.multi_reduction <add>, %24, %cst_9 [1] : vector<128x128xf32> to vector<128xf32>
    %26 = vector.shape_cast %25 : vector<128xf32> to vector<128x1xf32>
    %27 = vector.broadcast %6 : f32 to vector<128x1xf32>
    %28 = arith.addf %22, %27 : vector<128x1xf32>
    %29 = vector.broadcast %28 : vector<128x1xf32> to vector<128x128xf32>
    %30 = vector.broadcast %17 : vector<1x128xf32> to vector<128x128xf32>
    %31 = arith.addf %29, %30 : vector<128x128xf32>
    %c0_10 = arith.constant 0 : index
    %c0_11 = arith.constant 0 : index
    %c0_12 = arith.constant 0 : index
    %32 = vector.load %arg9[%c0_10, %c0_11, %c0_12] : memref<1x128x128xbf16, #tpu.memory_space<vmem>>, vector<1x128x128xbf16>
    %33 = vector.shape_cast %32 : vector<1x128x128xbf16> to vector<128x128xbf16>
    %34 = arith.extf %33 : vector<128x128xbf16> to vector<128x128xf32>
    %35 = arith.addf %31, %34 : vector<128x128xf32>
    %c0_13 = arith.constant 0 : index
    %c0_14 = arith.constant 0 : index
    %36 = vector.load %arg6[%c0_13, %c0_14] : memref<128x128xbf16, #tpu.memory_space<vmem>>, vector<128x128xbf16>
    %cst_15 = arith.constant 0.000000e+00 : bf16
    %37 = vector.broadcast %cst_15 : bf16 to vector<128x128xbf16>
    %38 = arith.cmpf ogt, %36, %37 : vector<128x128xbf16>
    %cst_16 = arith.constant -1.000000e+30 : f32
    %39 = vector.broadcast %cst_16 : f32 to vector<128x128xf32>
    %40 = arith.select %38, %35, %39 : vector<128x128xi1>, vector<128x128xf32>
    %cst_17 = arith.constant dense<0xFF800000> : vector<128xf32>
    %41 = vector.multi_reduction <maximumf>, %40, %cst_17 [1] : vector<128x128xf32> to vector<128xf32>
    %42 = vector.shape_cast %41 : vector<128xf32> to vector<128x1xf32>
    %43 = vector.broadcast %42 : vector<128x1xf32> to vector<128x128xf32>
    %44 = arith.subf %40, %43 : vector<128x128xf32>
    %45 = math.exp %44 : vector<128x128xf32>
    %cst_18 = arith.constant dense<0.000000e+00> : vector<128xf32>
    %46 = vector.multi_reduction <add>, %45, %cst_18 [1] : vector<128x128xf32> to vector<128xf32>
    %47 = vector.shape_cast %46 : vector<128xf32> to vector<128x1xf32>
    %c0_19 = arith.constant 0 : index
    %c0_20 = arith.constant 0 : index
    %48 = vector.load %arg8[%c0_19, %c0_20] : memref<128x1xf32, #tpu.memory_space<vmem>>, vector<128x1xf32>
    %49 = tpu.reciprocal %47 {approx = true} : vector<128x1xf32> -> vector<128x1xf32>
    %50 = arith.mulf %48, %49 : vector<128x1xf32>
    %51 = vector.broadcast %50 : vector<128x1xf32> to vector<128x128xf32>
    %52 = arith.mulf %45, %51 : vector<128x128xf32>
    %53 = arith.truncf %52 : vector<128x128xf32> to vector<128x128xbf16>
    %54 = vector.broadcast %6 : f32 to vector<128x1xf32>
    %55 = arith.addf %26, %54 : vector<128x1xf32>
    %56 = vector.broadcast %55 : vector<128x1xf32> to vector<128x128xf32>
    %57 = vector.broadcast %18 : vector<1x128xf32> to vector<128x128xf32>
    %58 = arith.addf %56, %57 : vector<128x128xf32>
    %c0_21 = arith.constant 0 : index
    %c0_22 = arith.constant 0 : index
    %c0_23 = arith.constant 0 : index
    %59 = vector.load %arg10[%c0_21, %c0_22, %c0_23] : memref<1x128x128xbf16, #tpu.memory_space<vmem>>, vector<1x128x128xbf16>
    %60 = vector.shape_cast %59 : vector<1x128x128xbf16> to vector<128x128xbf16>
    %61 = arith.extf %60 : vector<128x128xbf16> to vector<128x128xf32>
    %62 = arith.addf %58, %61 : vector<128x128xf32>
    %c0_24 = arith.constant 0 : index
    %c0_25 = arith.constant 0 : index
    %63 = vector.load %arg5[%c0_24, %c0_25] : memref<128x128xbf16, #tpu.memory_space<vmem>>, vector<128x128xbf16>
    %cst_26 = arith.constant 0.000000e+00 : bf16
    %64 = vector.broadcast %cst_26 : bf16 to vector<128x128xbf16>
    %65 = arith.cmpf ogt, %63, %64 : vector<128x128xbf16>
    %cst_27 = arith.constant -1.000000e+30 : f32
    %66 = vector.broadcast %cst_27 : f32 to vector<128x128xf32>
    %67 = arith.select %65, %62, %66 : vector<128x128xi1>, vector<128x128xf32>
    %cst_28 = arith.constant dense<0xFF800000> : vector<128xf32>
    %68 = vector.multi_reduction <maximumf>, %67, %cst_28 [1] : vector<128x128xf32> to vector<128xf32>
    %69 = vector.shape_cast %68 : vector<128xf32> to vector<128x1xf32>
    %70 = vector.broadcast %69 : vector<128x1xf32> to vector<128x128xf32>
    %71 = arith.subf %67, %70 : vector<128x128xf32>
    %72 = math.exp %71 : vector<128x128xf32>
    %cst_29 = arith.constant dense<0.000000e+00> : vector<128xf32>
    %73 = vector.multi_reduction <add>, %72, %cst_29 [1] : vector<128x128xf32> to vector<128xf32>
    %74 = vector.shape_cast %73 : vector<128xf32> to vector<128x1xf32>
    %c0_30 = arith.constant 0 : index
    %c0_31 = arith.constant 0 : index
    %75 = vector.load %arg7[%c0_30, %c0_31] : memref<128x1xf32, #tpu.memory_space<vmem>>, vector<128x1xf32>
    %76 = tpu.reciprocal %74 {approx = true} : vector<128x1xf32> -> vector<128x1xf32>
    %77 = arith.mulf %75, %76 : vector<128x1xf32>
    %78 = vector.broadcast %77 : vector<128x1xf32> to vector<128x128xf32>
    %79 = arith.mulf %72, %78 : vector<128x128xf32>
    %80 = arith.truncf %79 : vector<128x128xf32> to vector<128x128xbf16>
    %cst_32 = arith.constant dense<0.000000e+00> : vector<128x128xf32>
    %81 = tpu.matmul %80, %10, %cst_32 {dimension_numbers = #tpu.dot_dimension_numbers<[1], [0], [0], [1], [0, 0, 1, 1], [], []>} : vector<128x128xbf16>, vector<128x128xbf16>, vector<128x128xf32> -> vector<128x128xf32>
    %82 = arith.truncf %81 : vector<128x128xf32> to vector<128x128xbf16>
    %83 = tpu.concatenate %9, %82 in 1 : vector<128x128xbf16>, vector<128x128xbf16> -> vector<128x256xbf16>
    %cst_33 = arith.constant dense<0.000000e+00> : vector<128x256xf32>
    %84 = tpu.matmul %53, %83, %cst_33 {dimension_numbers = #tpu.dot_dimension_numbers<[1], [0], [0], [1], [0, 0, 1, 1], [], []>} : vector<128x128xbf16>, vector<128x256xbf16>, vector<128x256xf32> -> vector<128x256xf32>
    %85 = vector.extract_strided_slice %84 {offsets = [0, 0], sizes = [128, 128], strides = [1, 1]} : vector<128x256xf32> to vector<128x128xf32>
    %86 = vector.extract_strided_slice %84 {offsets = [0, 128], sizes = [128, 128], strides = [1, 1]} : vector<128x256xf32> to vector<128x128xf32>
    %87 = arith.truncf %85 : vector<128x128xf32> to vector<128x128xbf16>
    %cst_34 = arith.constant dense<0.000000e+00> : vector<128x128xf32>
    %88 = tpu.matmul %80, %87, %cst_34 {dimension_numbers = #tpu.dot_dimension_numbers<[1], [0], [0], [1], [0, 0, 1, 1], [], []>} : vector<128x128xbf16>, vector<128x128xbf16>, vector<128x128xf32> -> vector<128x128xf32>
    %89 = arith.addf %88, %81 : vector<128x128xf32>
    %cst_35 = arith.constant 5.000000e-01 : f32
    %90 = vector.broadcast %cst_35 : f32 to vector<128x128xf32>
    %91 = arith.mulf %89, %90 : vector<128x128xf32>
    %92 = arith.addf %85, %86 : vector<128x128xf32>
    %cst_36 = arith.constant 5.000000e-01 : f32
    %93 = vector.broadcast %cst_36 : f32 to vector<128x128xf32>
    %94 = arith.mulf %92, %93 : vector<128x128xf32>
    %cst_37 = arith.constant 0.899999976 : f32
    %95 = vector.broadcast %cst_37 : f32 to vector<128x128xf32>
    %96 = arith.mulf %95, %91 : vector<128x128xf32>
    %c0_38 = arith.constant 0 : index
    %c0_39 = arith.constant 0 : index
    %97 = vector.load %arg3[%c0_38, %c0_39] : memref<128x128xf32, #tpu.memory_space<vmem>>, vector<128x128xf32>
    %cst_40 = arith.constant 1.000000e-01 : f32
    %98 = vector.broadcast %cst_40 : f32 to vector<128x128xf32>
    %99 = arith.mulf %98, %97 : vector<128x128xf32>
    %100 = arith.addf %96, %99 : vector<128x128xf32>
    %cst_41 = arith.constant 1.000000e+00 : f32
    %101 = arith.subf %cst_41, %4 : f32
    %102 = vector.broadcast %101 : f32 to vector<128x128xf32>
    %103 = arith.mulf %102, %100 : vector<128x128xf32>
    %104 = arith.truncf %100 : vector<128x128xf32> to vector<128x128xbf16>
    %c0_42 = arith.constant 0 : index
    %c0_43 = arith.constant 0 : index
    %c0_44 = arith.constant 0 : index
    %105 = vector.load %arg12[%c0_42, %c0_43, %c0_44] : memref<1x128x128xbf16, #tpu.memory_space<vmem>>, vector<1x128x128xbf16>
    %106 = vector.shape_cast %105 : vector<1x128x128xbf16> to vector<128x128xbf16>
    %cst_45 = arith.constant dense<0.000000e+00> : vector<128x128xf32>
    %107 = tpu.matmul %104, %106, %cst_45 {dimension_numbers = #tpu.dot_dimension_numbers<[1], [0], [0], [1], [0, 0, 1, 1], [], []>} : vector<128x128xbf16>, vector<128x128xbf16>, vector<128x128xf32> -> vector<128x128xf32>
    %108 = vector.broadcast %4 : f32 to vector<128x128xf32>
    %109 = arith.mulf %108, %107 : vector<128x128xf32>
    %110 = arith.addf %103, %109 : vector<128x128xf32>
    %cst_46 = arith.constant 0.899999976 : f32
    %111 = vector.broadcast %cst_46 : f32 to vector<128x128xf32>
    %112 = arith.mulf %111, %94 : vector<128x128xf32>
    %c0_47 = arith.constant 0 : index
    %c0_48 = arith.constant 0 : index
    %113 = vector.load %arg4[%c0_47, %c0_48] : memref<128x128xf32, #tpu.memory_space<vmem>>, vector<128x128xf32>
    %cst_49 = arith.constant 1.000000e-01 : f32
    %114 = vector.broadcast %cst_49 : f32 to vector<128x128xf32>
    %115 = arith.mulf %114, %113 : vector<128x128xf32>
    %116 = arith.addf %112, %115 : vector<128x128xf32>
    %cst_50 = arith.constant 1.000000e+00 : f32
    %117 = arith.subf %cst_50, %4 : f32
    %118 = vector.broadcast %117 : f32 to vector<128x128xf32>
    %119 = arith.mulf %118, %116 : vector<128x128xf32>
    %120 = arith.truncf %116 : vector<128x128xf32> to vector<128x128xbf16>
    %c0_51 = arith.constant 0 : index
    %c0_52 = arith.constant 0 : index
    %c0_53 = arith.constant 0 : index
    %121 = vector.load %arg13[%c0_51, %c0_52, %c0_53] : memref<1x128x128xbf16, #tpu.memory_space<vmem>>, vector<1x128x128xbf16>
    %122 = vector.shape_cast %121 : vector<1x128x128xbf16> to vector<128x128xbf16>
    %cst_54 = arith.constant dense<0.000000e+00> : vector<128x128xf32>
    %123 = tpu.matmul %120, %122, %cst_54 {dimension_numbers = #tpu.dot_dimension_numbers<[1], [0], [0], [1], [0, 0, 1, 1], [], []>} : vector<128x128xbf16>, vector<128x128xbf16>, vector<128x128xf32> -> vector<128x128xf32>
    %124 = vector.broadcast %4 : f32 to vector<128x128xf32>
    %125 = arith.mulf %124, %123 : vector<128x128xf32>
    %126 = arith.addf %119, %125 : vector<128x128xf32>
    %cst_55 = arith.constant 0.000000e+00 : f32
    %127 = vector.broadcast %cst_55 : f32 to vector<128x128xf32>
    %128 = arith.maximumf %110, %127 : vector<128x128xf32>
    %c0_56 = arith.constant 0 : index
    %c0_57 = arith.constant 0 : index
    %129 = vector.load %arg16[%c0_56, %c0_57] : memref<128x128xf32, #tpu.memory_space<vmem>>, vector<128x128xf32>
    tpu.vector_store %arg16[%c0_56, %c0_57], %128 {strides = array<i32>} : memref<128x128xf32, #tpu.memory_space<vmem>>, vector<128x128xf32>,
    %cst_58 = arith.constant 0.000000e+00 : f32
    %130 = vector.broadcast %cst_58 : f32 to vector<128x128xf32>
    %131 = arith.maximumf %126, %130 : vector<128x128xf32>
    %c0_59 = arith.constant 0 : index
    %c0_60 = arith.constant 0 : index
    %132 = vector.load %arg17[%c0_59, %c0_60] : memref<128x128xf32, #tpu.memory_space<vmem>>, vector<128x128xf32>
    tpu.vector_store %arg17[%c0_59, %c0_60], %131 {strides = array<i32>} : memref<128x128xf32, #tpu.memory_space<vmem>>, vector<128x128xf32>,
    %c3_i32 = arith.constant 3 : i32
    %133 = arith.cmpi eq, %arg0, %c3_i32 : i32
    %134 = arith.extui %133 : i1 to i32
    %c0_i32_61 = arith.constant 0 : i32
    %135 = arith.cmpi ne, %134, %c0_i32_61 : i32
    scf.if %135 {
      %c0_62 = arith.constant 0 : index
      %c0_63 = arith.constant 0 : index
      %136 = vector.load %arg14[%c0_62, %c0_63] : memref<128x128xf32, #tpu.memory_space<vmem>>, vector<128x128xf32>
      tpu.vector_store %arg14[%c0_62, %c0_63], %110 {strides = array<i32>} : memref<128x128xf32, #tpu.memory_space<vmem>>, vector<128x128xf32>,
      %c0_64 = arith.constant 0 : index
      %c0_65 = arith.constant 0 : index
      %137 = vector.load %arg15[%c0_64, %c0_65] : memref<128x128xf32, #tpu.memory_space<vmem>>, vector<128x128xf32>
      tpu.vector_store %arg15[%c0_64, %c0_65], %126 {strides = array<i32>} : memref<128x128xf32, #tpu.memory_space<vmem>>, vector<128x128xf32>,
    } else {
    }
    return
  }
  func.func @transform_0(%arg0: i32) -> i32 {
    %c0_i32 = arith.constant 0 : i32
    %c0_i32_0 = arith.constant 0 : i32
    return %c0_i32 : i32
  }
  func.func @transform_1(%arg0: i32) -> i32 {
    %c0_i32 = arith.constant 0 : i32
    %c0_i32_0 = arith.constant 0 : i32
    return %c0_i32 : i32
  }
  func.func @transform_2(%arg0: i32) -> (i32, i32) {
    %c0_i32 = arith.constant 0 : i32
    %c0_i32_0 = arith.constant 0 : i32
    %c0_i32_1 = arith.constant 0 : i32
    return %c0_i32, %c0_i32_0 : i32, i32
  }
  func.func @transform_3(%arg0: i32) -> (i32, i32) {
    %c0_i32 = arith.constant 0 : i32
    %c0_i32_0 = arith.constant 0 : i32
    %c0_i32_1 = arith.constant 0 : i32
    return %c0_i32, %c0_i32_0 : i32, i32
  }
  func.func @transform_4(%arg0: i32) -> (i32, i32) {
    %c0_i32 = arith.constant 0 : i32
    %c0_i32_0 = arith.constant 0 : i32
    %c0_i32_1 = arith.constant 0 : i32
    return %c0_i32, %c0_i32_0 : i32, i32
  }
  func.func @transform_5(%arg0: i32) -> (i32, i32) {
    %c0_i32 = arith.constant 0 : i32
    %c0_i32_0 = arith.constant 0 : i32
    %c0_i32_1 = arith.constant 0 : i32
    return %c0_i32, %c0_i32_0 : i32, i32
  }
  func.func @transform_6(%arg0: i32) -> (i32, i32) {
    %c0_i32 = arith.constant 0 : i32
    %c0_i32_0 = arith.constant 0 : i32
    %c0_i32_1 = arith.constant 0 : i32
    return %c0_i32, %c0_i32_0 : i32, i32
  }
  func.func @transform_7(%arg0: i32) -> (i32, i32) {
    %c0_i32 = arith.constant 0 : i32
    %c0_i32_0 = arith.constant 0 : i32
    %c0_i32_1 = arith.constant 0 : i32
    return %c0_i32, %c0_i32_0 : i32, i32
  }
  func.func @transform_8(%arg0: i32) -> (i32, i32, i32) {
    %c0_i32 = arith.constant 0 : i32
    %c0_i32_0 = arith.constant 0 : i32
    %c0_i32_1 = arith.constant 0 : i32
    return %arg0, %c0_i32, %c0_i32_0 : i32, i32, i32
  }
  func.func @transform_9(%arg0: i32) -> (i32, i32, i32) {
    %c0_i32 = arith.constant 0 : i32
    %c0_i32_0 = arith.constant 0 : i32
    %c0_i32_1 = arith.constant 0 : i32
    return %arg0, %c0_i32, %c0_i32_0 : i32, i32, i32
  }
  func.func @transform_10(%arg0: i32) -> (i32, i32, i32) {
    %c0_i32 = arith.constant 0 : i32
    %c0_i32_0 = arith.constant 0 : i32
    %c0_i32_1 = arith.constant 0 : i32
    return %arg0, %c0_i32, %c0_i32_0 : i32, i32, i32
  }
  func.func @transform_11(%arg0: i32) -> (i32, i32, i32) {
    %c0_i32 = arith.constant 0 : i32
    %c0_i32_0 = arith.constant 0 : i32
    %c0_i32_1 = arith.constant 0 : i32
    return %arg0, %c0_i32, %c0_i32_0 : i32, i32, i32
  }
  func.func @transform_12(%arg0: i32) -> (i32, i32, i32) {
    %c0_i32 = arith.constant 0 : i32
    %c0_i32_0 = arith.constant 0 : i32
    %c0_i32_1 = arith.constant 0 : i32
    return %arg0, %c0_i32, %c0_i32_0 : i32, i32, i32
  }
  func.func @transform_13(%arg0: i32) -> (i32, i32) {
    %c0_i32 = arith.constant 0 : i32
    %c0_i32_0 = arith.constant 0 : i32
    %c0_i32_1 = arith.constant 0 : i32
    return %c0_i32, %c0_i32_0 : i32, i32
  }
  func.func @transform_14(%arg0: i32) -> (i32, i32) {
    %c0_i32 = arith.constant 0 : i32
    %c0_i32_0 = arith.constant 0 : i32
    %c0_i32_1 = arith.constant 0 : i32
    return %c0_i32, %c0_i32_0 : i32, i32
  }
}

module attributes {stable_mosaic.version = 11 : i64} {
  func.func @_init_proj_kernel(%arg0: i32, %arg1: memref<128x128xbf16, #tpu.memory_space<vmem>>, %arg2: memref<128x128xbf16, #tpu.memory_space<vmem>>, %arg3: memref<1x128xf32, #tpu.memory_space<vmem>>, %arg4: memref<128x128xf32, #tpu.memory_space<vmem>>) attributes {dimension_semantics = [#tpu.dimension_semantics<parallel>], iteration_bounds = array<i64: 1>, scalar_prefetch = 0 : i64, scratch_operands = 0 : i64, tpu.core_type = #tpu.core_type<tc>, window_params = [{transform_indices = @transform_0, window_bounds = array<i64: 128, 128>}, {pipeline_mode = #tpu.pipeline_mode<synchronous>, transform_indices = @transform_1, window_bounds = array<i64: 128, 128>}, {pipeline_mode = #tpu.pipeline_mode<synchronous>, transform_indices = @transform_2, window_bounds = array<i64: 1, 128>}, {transform_indices = @transform_3, window_bounds = array<i64: 128, 128>}]} {
    %c0 = arith.constant 0 : index
    %c0_0 = arith.constant 0 : index
    %0 = vector.load %arg1[%c0, %c0_0] : memref<128x128xbf16, #tpu.memory_space<vmem>>, vector<128x128xbf16>
    %c0_1 = arith.constant 0 : index
    %c0_2 = arith.constant 0 : index
    %1 = vector.load %arg2[%c0_1, %c0_2] : memref<128x128xbf16, #tpu.memory_space<vmem>>, vector<128x128xbf16>
    %cst = arith.constant dense<0.000000e+00> : vector<128x128xf32>
    %2 = tpu.matmul %0, %1, %cst {dimension_numbers = #tpu.dot_dimension_numbers<[1], [0], [0], [1], [0, 0, 1, 1], [], []>} : vector<128x128xbf16>, vector<128x128xbf16>, vector<128x128xf32> -> vector<128x128xf32>
    %c0_3 = arith.constant 0 : index
    %c0_4 = arith.constant 0 : index
    %3 = vector.load %arg3[%c0_3, %c0_4] : memref<1x128xf32, #tpu.memory_space<vmem>>, vector<1x128xf32>
    %4 = vector.broadcast %3 : vector<1x128xf32> to vector<128x128xf32>
    %5 = arith.addf %2, %4 : vector<128x128xf32>
    %cst_5 = arith.constant 0.000000e+00 : f32
    %6 = vector.broadcast %cst_5 : f32 to vector<128x128xf32>
    %7 = arith.maximumf %5, %6 : vector<128x128xf32>
    %c0_6 = arith.constant 0 : index
    %c0_7 = arith.constant 0 : index
    %8 = vector.load %arg4[%c0_6, %c0_7] : memref<128x128xf32, #tpu.memory_space<vmem>>, vector<128x128xf32>
    tpu.vector_store %arg4[%c0_6, %c0_7], %7 {strides = array<i32>} : memref<128x128xf32, #tpu.memory_space<vmem>>, vector<128x128xf32>,
    return
  }
  func.func @transform_0(%arg0: i32) -> (i32, i32) {
    %c0_i32 = arith.constant 0 : i32
    %c0_i32_0 = arith.constant 0 : i32
    return %arg0, %c0_i32 : i32, i32
  }
  func.func @transform_1(%arg0: i32) -> (i32, i32) {
    %c0_i32 = arith.constant 0 : i32
    %c0_i32_0 = arith.constant 0 : i32
    %c0_i32_1 = arith.constant 0 : i32
    return %c0_i32, %c0_i32_0 : i32, i32
  }
  func.func @transform_2(%arg0: i32) -> (i32, i32) {
    %c0_i32 = arith.constant 0 : i32
    %c0_i32_0 = arith.constant 0 : i32
    %c0_i32_1 = arith.constant 0 : i32
    return %c0_i32, %c0_i32_0 : i32, i32
  }
  func.func @transform_3(%arg0: i32) -> (i32, i32) {
    %c0_i32 = arith.constant 0 : i32
    %c0_i32_0 = arith.constant 0 : i32
    return %arg0, %c0_i32 : i32, i32
  }
}

</mosaic_0001>

<llo_original>
// kernel: hyper_encoder_forward.3
$region0: #{hyper_encoder_forward.3}
  #allocation0 [shape = 'u32[]', space=smem, size = 0x4, offset = 0x4, fixed_abs, tag = 'smem constant byte address 0x4 - core index']
  #allocation1 [shape = 'u32[144,128]{1,0:T(1,128)}', space=vmem, size = 0x12000, scoped, tag = 'internal scratch']
  %s0 = inlined_call_operand.vmem [shape: bf16[1024,64], index: 0, kind: input, shape index: {}]
  %s1 = inlined_call_operand.vmem [shape: bf16[8,64], index: 1, kind: input, shape index: {}]
  %s2 = inlined_call_operand.vmem [shape: bf16[8,1024], index: 2, kind: output, shape index: {}]
  %s3 = sld [smem:[#allocation0]]
  $region18: #{hyper_encoder_forward.3} parent=0
    _
  %s5 = ssub.s32 1, %s3
  %s6 = scalar_select 0, %s5, %s3
  // Predicated region
  $region2: #{hyper_encoder_forward.3} parent=0 // pred_check
    _
  $region3: #{hyper_encoder_forward.3} parent=0 // pred_check_branch
    %8 = sbr.rel (0) target = $region5
  $region4: #{hyper_encoder_forward.3} parent=0 // pred_region
    _
  $region5: #{hyper_encoder_forward.3} parent=0 // pred_fallthru
    _
  // Predicated region
  $region6: #{hyper_encoder_forward.3} parent=0 // pred_check
    _
  $region7: #{hyper_encoder_forward.3} parent=0 // pred_check_branch
    %10 = sbr.rel (0) target = $region9
  $region8: #{hyper_encoder_forward.3} parent=0 // pred_region
    _
  $region9: #{hyper_encoder_forward.3} parent=0 // pred_fallthru
    _
  %v12 = vld [vmem:[%s1] sm:$0xf]
  %v13 = vld [vmem:[%s0] sm:$0xf]
  %v14 = vld [vmem:[%s0 + $0x4] sm:$0xf]
  %v15 = vld [vmem:[%s0 + $0x8] sm:$0xf]
  %v16 = vld [vmem:[%s0 + $0xc] sm:$0xf]
  %v17 = vld [vmem:[%s0 + $0x10] sm:$0xf]
  %v18 = vld [vmem:[%s0 + $0x14] sm:$0xf]
  %v19 = vld [vmem:[%s0 + $0x18] sm:$0xf]
  %v20 = vld [vmem:[%s0 + $0x1c] sm:$0xf]
  %v21 = vld [vmem:[%s0 + $0x20] sm:$0xf]
  %v22 = vld [vmem:[%s0 + $0x24] sm:$0xf]
  %v23 = vld [vmem:[%s0 + $0x28] sm:$0xf]
  %v24 = vld [vmem:[%s0 + $0x2c] sm:$0xf]
  %v25 = vld [vmem:[%s0 + $0x30] sm:$0xf]
  %v26 = vld [vmem:[%s0 + $0x34] sm:$0xf]
  %v27 = vld [vmem:[%s0 + $0x38] sm:$0xf]
  %v28 = vld [vmem:[%s0 + $0x3c] sm:$0xf]
  %v29 = vld [vmem:[%s0 + $0x40] sm:$0xf]
  %v30 = vld [vmem:[%s0 + $0x44] sm:$0xf]
  %v31 = vld [vmem:[%s0 + $0x48] sm:$0xf]
  %v32 = vld [vmem:[%s0 + $0x4c] sm:$0xf]
  %v33 = vld [vmem:[%s0 + $0x50] sm:$0xf]
  %v34 = vld [vmem:[%s0 + $0x54] sm:$0xf]
  %v35 = vld [vmem:[%s0 + $0x58] sm:$0xf]
  %v36 = vld [vmem:[%s0 + $0x5c] sm:$0xf]
  %v37 = vld [vmem:[%s0 + $0x60] sm:$0xf]
  %v38 = vld [vmem:[%s0 + $0x64] sm:$0xf]
  %v39 = vld [vmem:[%s0 + $0x68] sm:$0xf]
  %v40 = vld [vmem:[%s0 + $0x6c] sm:$0xf]
  %v41 = vld [vmem:[%s0 + $0x70] sm:$0xf]
  %v42 = vld [vmem:[%s0 + $0x74] sm:$0xf]
  %v43 = vld [vmem:[%s0 + $0x78] sm:$0xf]
  %v44 = vld [vmem:[%s0 + $0x7c] sm:$0xf]
  %v45 = vld [vmem:[%s0 + $0x80] sm:$0xf]
  %v46 = vld [vmem:[%s0 + $0x84] sm:$0xf]
  %v47 = vld [vmem:[%s0 + $0x88] sm:$0xf]
  %v48 = vld [vmem:[%s0 + $0x8c] sm:$0xf]
  %v49 = vld [vmem:[%s0 + $0x90] sm:$0xf]
  %v50 = vld [vmem:[%s0 + $0x94] sm:$0xf]
  %v51 = vld [vmem:[%s0 + $0x98] sm:$0xf]
  %v52 = vld [vmem:[%s0 + $0x9c] sm:$0xf]
  %v53 = vld [vmem:[%s0 + $0xa0] sm:$0xf]
  %v54 = vld [vmem:[%s0 + $0xa4] sm:$0xf]
  %v55 = vld [vmem:[%s0 + $0xa8] sm:$0xf]
  %v56 = vld [vmem:[%s0 + $0xac] sm:$0xf]
  %v57 = vld [vmem:[%s0 + $0xb0] sm:$0xf]
  %v58 = vld [vmem:[%s0 + $0xb4] sm:$0xf]
  %v59 = vld [vmem:[%s0 + $0xb8] sm:$0xf]
  %v60 = vld [vmem:[%s0 + $0xbc] sm:$0xf]
  %v61 = vld [vmem:[%s0 + $0xc0] sm:$0xf]
  %v62 = vld [vmem:[%s0 + $0xc4] sm:$0xf]
  %v63 = vld [vmem:[%s0 + $0xc8] sm:$0xf]
  %v64 = vld [vmem:[%s0 + $0xcc] sm:$0xf]
  %v65 = vld [vmem:[%s0 + $0xd0] sm:$0xf]
  %v66 = vld [vmem:[%s0 + $0xd4] sm:$0xf]
  %v67 = vld [vmem:[%s0 + $0xd8] sm:$0xf]
  %v68 = vld [vmem:[%s0 + $0xdc] sm:$0xf]
  %v69 = vld [vmem:[%s0 + $0xe0] sm:$0xf]
  %v70 = vld [vmem:[%s0 + $0xe4] sm:$0xf]
  %v71 = vld [vmem:[%s0 + $0xe8] sm:$0xf]
  %v72 = vld [vmem:[%s0 + $0xec] sm:$0xf]
  %v73 = vld [vmem:[%s0 + $0xf0] sm:$0xf]
  %v74 = vld [vmem:[%s0 + $0xf4] sm:$0xf]
  %v75 = vld [vmem:[%s0 + $0xf8] sm:$0xf]
  %v76 = vld [vmem:[%s0 + $0xfc] sm:$0xf]
  %v77 = vld [vmem:[%s0 + $0x100] sm:$0xf]
  %v78 = vld [vmem:[%s0 + $0x104] sm:$0xf]
  %v79 = vld [vmem:[%s0 + $0x108] sm:$0xf]
  %v80 = vld [vmem:[%s0 + $0x10c] sm:$0xf]
  %v81 = vld [vmem:[%s0 + $0x110] sm:$0xf]
  %v82 = vld [vmem:[%s0 + $0x114] sm:$0xf]
  %v83 = vld [vmem:[%s0 + $0x118] sm:$0xf]
  %v84 = vld [vmem:[%s0 + $0x11c] sm:$0xf]
  %v85 = vld [vmem:[%s0 + $0x120] sm:$0xf]
  %v86 = vld [vmem:[%s0 + $0x124] sm:$0xf]
  %v87 = vld [vmem:[%s0 + $0x128] sm:$0xf]
  %v88 = vld [vmem:[%s0 + $0x12c] sm:$0xf]
  %v89 = vld [vmem:[%s0 + $0x130] sm:$0xf]
  %v90 = vld [vmem:[%s0 + $0x134] sm:$0xf]
  %v91 = vld [vmem:[%s0 + $0x138] sm:$0xf]
  %v92 = vld [vmem:[%s0 + $0x13c] sm:$0xf]
  %v93 = vld [vmem:[%s0 + $0x140] sm:$0xf]
  %v94 = vld [vmem:[%s0 + $0x144] sm:$0xf]
  %v95 = vld [vmem:[%s0 + $0x148] sm:$0xf]
  %v96 = vld [vmem:[%s0 + $0x14c] sm:$0xf]
  %v97 = vld [vmem:[%s0 + $0x150] sm:$0xf]
  %v98 = vld [vmem:[%s0 + $0x154] sm:$0xf]
  %v99 = vld [vmem:[%s0 + $0x158] sm:$0xf]
  %v100 = vld [vmem:[%s0 + $0x15c] sm:$0xf]
  %v101 = vld [vmem:[%s0 + $0x160] sm:$0xf]
  %v102 = vld [vmem:[%s0 + $0x164] sm:$0xf]
  %v103 = vld [vmem:[%s0 + $0x168] sm:$0xf]
  %v104 = vld [vmem:[%s0 + $0x16c] sm:$0xf]
  %v105 = vld [vmem:[%s0 + $0x170] sm:$0xf]
  %v106 = vld [vmem:[%s0 + $0x174] sm:$0xf]
  %v107 = vld [vmem:[%s0 + $0x178] sm:$0xf]
  %v108 = vld [vmem:[%s0 + $0x17c] sm:$0xf]
  %v109 = vld [vmem:[%s0 + $0x180] sm:$0xf]
  %v110 = vld [vmem:[%s0 + $0x184] sm:$0xf]
  %v111 = vld [vmem:[%s0 + $0x188] sm:$0xf]
  %v112 = vld [vmem:[%s0 + $0x18c] sm:$0xf]
  %v113 = vld [vmem:[%s0 + $0x190] sm:$0xf]
  %v114 = vld [vmem:[%s0 + $0x194] sm:$0xf]
  %v115 = vld [vmem:[%s0 + $0x198] sm:$0xf]
  %v116 = vld [vmem:[%s0 + $0x19c] sm:$0xf]
  %v117 = vld [vmem:[%s0 + $0x1a0] sm:$0xf]
  %v118 = vld [vmem:[%s0 + $0x1a4] sm:$0xf]
  %v119 = vld [vmem:[%s0 + $0x1a8] sm:$0xf]
  %v120 = vld [vmem:[%s0 + $0x1ac] sm:$0xf]
  %v121 = vld [vmem:[%s0 + $0x1b0] sm:$0xf]
  %v122 = vld [vmem:[%s0 + $0x1b4] sm:$0xf]
  %v123 = vld [vmem:[%s0 + $0x1b8] sm:$0xf]
  %v124 = vld [vmem:[%s0 + $0x1bc] sm:$0xf]
  %v125 = vld [vmem:[%s0 + $0x1c0] sm:$0xf]
  %v126 = vld [vmem:[%s0 + $0x1c4] sm:$0xf]
  %v127 = vld [vmem:[%s0 + $0x1c8] sm:$0xf]
  %v128 = vld [vmem:[%s0 + $0x1cc] sm:$0xf]
  %v129 = vld [vmem:[%s0 + $0x1d0] sm:$0xf]
  %v130 = vld [vmem:[%s0 + $0x1d4] sm:$0xf]
  %v131 = vld [vmem:[%s0 + $0x1d8] sm:$0xf]
  %v132 = vld [vmem:[%s0 + $0x1dc] sm:$0xf]
  %v133 = vld [vmem:[%s0 + $0x1e0] sm:$0xf]
  %v134 = vld [vmem:[%s0 + $0x1e4] sm:$0xf]
  %v135 = vld [vmem:[%s0 + $0x1e8] sm:$0xf]
  %v136 = vld [vmem:[%s0 + $0x1ec] sm:$0xf]
  %v137 = vld [vmem:[%s0 + $0x1f0] sm:$0xf]
  %v138 = vld [vmem:[%s0 + $0x1f4] sm:$0xf]
  %v139 = vld [vmem:[%s0 + $0x1f8] sm:$0xf]
  %v140 = vld [vmem:[%s0 + $0x1fc] sm:$0xf]
  %v269 = vunpack.c.l.b16 %v13
  %v270 = vunpack.c.l.b16 %v14
  %v271 = vunpack.c.l.b16 %v15
  %v272 = vunpack.c.l.b16 %v16
  %v273 = vunpack.c.l.b16 %v17
  %v274 = vunpack.c.l.b16 %v18
  %v275 = vunpack.c.l.b16 %v19
  %v276 = vunpack.c.l.b16 %v20
  %v277 = vunpack.c.l.b16 %v21
  %v278 = vunpack.c.l.b16 %v22
  %v279 = vunpack.c.l.b16 %v23
  %v280 = vunpack.c.l.b16 %v24
  %v281 = vunpack.c.l.b16 %v25
  %v282 = vunpack.c.l.b16 %v26
  %v283 = vunpack.c.l.b16 %v27
  %v284 = vunpack.c.l.b16 %v28
  %v285 = vunpack.c.l.b16 %v29
  %v286 = vunpack.c.l.b16 %v30
  %v287 = vunpack.c.l.b16 %v31
  %v288 = vunpack.c.l.b16 %v32
  %v289 = vunpack.c.l.b16 %v33
  %v290 = vunpack.c.l.b16 %v34
  %v291 = vunpack.c.l.b16 %v35
  %v292 = vunpack.c.l.b16 %v36
  %v293 = vunpack.c.l.b16 %v37
  %v294 = vunpack.c.l.b16 %v38
  %v295 = vunpack.c.l.b16 %v39
  %v296 = vunpack.c.l.b16 %v40
  %v297 = vunpack.c.l.b16 %v41
  %v298 = vunpack.c.l.b16 %v42
  %v299 = vunpack.c.l.b16 %v43
  %v300 = vunpack.c.l.b16 %v44
  %v301 = vunpack.c.l.b16 %v45
  %v302 = vunpack.c.l.b16 %v46
  %v303 = vunpack.c.l.b16 %v47
  %v304 = vunpack.c.l.b16 %v48
  %v305 = vunpack.c.l.b16 %v49
  %v306 = vunpack.c.l.b16 %v50
  %v307 = vunpack.c.l.b16 %v51
  %v308 = vunpack.c.l.b16 %v52
  %v309 = vunpack.c.l.b16 %v53
  %v310 = vunpack.c.l.b16 %v54
  %v311 = vunpack.c.l.b16 %v55
  %v312 = vunpack.c.l.b16 %v56
  %v313 = vunpack.c.l.b16 %v57
  %v314 = vunpack.c.l.b16 %v58
  %v315 = vunpack.c.l.b16 %v59
  %v316 = vunpack.c.l.b16 %v60
  %v317 = vunpack.c.l.b16 %v61
  %v318 = vunpack.c.l.b16 %v62
  %v319 = vunpack.c.l.b16 %v63
  %v320 = vunpack.c.l.b16 %v64
  %v321 = vunpack.c.l.b16 %v65
  %v322 = vunpack.c.l.b16 %v66
  %v323 = vunpack.c.l.b16 %v67
  %v324 = vunpack.c.l.b16 %v68
  %v325 = vunpack.c.l.b16 %v69
  %v326 = vunpack.c.l.b16 %v70
  %v327 = vunpack.c.l.b16 %v71
  %v328 = vunpack.c.l.b16 %v72
  %v329 = vunpack.c.l.b16 %v73
  %v330 = vunpack.c.l.b16 %v74
  %v331 = vunpack.c.l.b16 %v75
  %v332 = vunpack.c.l.b16 %v76
  %v333 = vunpack.c.l.b16 %v77
  %v334 = vunpack.c.l.b16 %v78
  %v335 = vunpack.c.l.b16 %v79
  %v336 = vunpack.c.l.b16 %v80
  %v337 = vunpack.c.l.b16 %v81
  %v338 = vunpack.c.l.b16 %v82
  %v339 = vunpack.c.l.b16 %v83
  %v340 = vunpack.c.l.b16 %v84
  %v341 = vunpack.c.l.b16 %v85
  %v342 = vunpack.c.l.b16 %v86
  %v343 = vunpack.c.l.b16 %v87
  %v344 = vunpack.c.l.b16 %v88
  %v345 = vunpack.c.l.b16 %v89
  %v346 = vunpack.c.l.b16 %v90
  %v347 = vunpack.c.l.b16 %v91
  %v348 = vunpack.c.l.b16 %v92
  %v349 = vunpack.c.l.b16 %v93
  %v350 = vunpack.c.l.b16 %v94
  %v351 = vunpack.c.l.b16 %v95
  %v352 = vunpack.c.l.b16 %v96
  %v353 = vunpack.c.l.b16 %v97
  %v354 = vunpack.c.l.b16 %v98
  %v355 = vunpack.c.l.b16 %v99
  %v356 = vunpack.c.l.b16 %v100
  %v357 = vunpack.c.l.b16 %v101
  %v358 = vunpack.c.l.b16 %v102
  %v359 = vunpack.c.l.b16 %v103
  %v360 = vunpack.c.l.b16 %v104
  %v361 = vunpack.c.l.b16 %v105
  %v362 = vunpack.c.l.b16 %v106
  %v363 = vunpack.c.l.b16 %v107
  %v364 = vunpack.c.l.b16 %v108
  %v365 = vunpack.c.l.b16 %v109
  %v366 = vunpack.c.l.b16 %v110
  %v367 = vunpack.c.l.b16 %v111
  %v368 = vunpack.c.l.b16 %v112
  %v369 = vunpack.c.l.b16 %v113
  %v370 = vunpack.c.l.b16 %v114
  %v371 = vunpack.c.l.b16 %v115
  %v372 = vunpack.c.l.b16 %v116
  %v373 = vunpack.c.l.b16 %v117
  %v374 = vunpack.c.l.b16 %v118
  %v375 = vunpack.c.l.b16 %v119
  %v376 = vunpack.c.l.b16 %v120
  %v377 = vunpack.c.l.b16 %v121
  %v378 = vunpack.c.l.b16 %v122
  %v379 = vunpack.c.l.b16 %v123
  %v380 = vunpack.c.l.b16 %v124
  %v381 = vunpack.c.l.b16 %v125
  %v382 = vunpack.c.l.b16 %v126
  %v383 = vunpack.c.l.b16 %v127
  %v384 = vunpack.c.l.b16 %v128
  %v385 = vunpack.c.l.b16 %v129
  %v386 = vunpack.c.l.b16 %v130
  %v387 = vunpack.c.l.b16 %v131
  %v388 = vunpack.c.l.b16 %v132
  %v389 = vunpack.c.l.b16 %v133
  %v390 = vunpack.c.l.b16 %v134
  %v391 = vunpack.c.l.b16 %v135
  %v392 = vunpack.c.l.b16 %v136
  %v393 = vunpack.c.l.b16 %v137
  %v394 = vunpack.c.l.b16 %v138
  %v395 = vunpack.c.l.b16 %v139
  %v396 = vunpack.c.l.b16 %v140
  %v397 = vpack.c.b16 %v270, %v269
  %v398 = vpack.c.b16 %v272, %v271
  %v399 = vpack.c.b16 %v274, %v273
  %v400 = vpack.c.b16 %v276, %v275
  %v401 = vpack.c.b16 %v278, %v277
  %v402 = vpack.c.b16 %v280, %v279
  %v403 = vpack.c.b16 %v282, %v281
  %v404 = vpack.c.b16 %v284, %v283
  %v405 = vpack.c.b16 %v286, %v285
  %v406 = vpack.c.b16 %v288, %v287
  %v407 = vpack.c.b16 %v290, %v289
  %v408 = vpack.c.b16 %v292, %v291
  %v409 = vpack.c.b16 %v294, %v293
  %v410 = vpack.c.b16 %v296, %v295
  %v411 = vpack.c.b16 %v298, %v297
  %v412 = vpack.c.b16 %v300, %v299
  %v413 = vpack.c.b16 %v302, %v301
  %v414 = vpack.c.b16 %v304, %v303
  %v415 = vpack.c.b16 %v306, %v305
  %v416 = vpack.c.b16 %v308, %v307
  %v417 = vpack.c.b16 %v310, %v309
  %v418 = vpack.c.b16 %v312, %v311
  %v419 = vpack.c.b16 %v314, %v313
  %v420 = vpack.c.b16 %v316, %v315
  %v421 = vpack.c.b16 %v318, %v317
  %v422 = vpack.c.b16 %v320, %v319
  %v423 = vpack.c.b16 %v322, %v321
  %v424 = vpack.c.b16 %v324, %v323
  %v425 = vpack.c.b16 %v326, %v325
  %v426 = vpack.c.b16 %v328, %v327
  %v427 = vpack.c.b16 %v330, %v329
  %v428 = vpack.c.b16 %v332, %v331
  %v429 = vpack.c.b16 %v334, %v333
  %v430 = vpack.c.b16 %v336, %v335
  %v431 = vpack.c.b16 %v338, %v337
  %v432 = vpack.c.b16 %v340, %v339
  %v433 = vpack.c.b16 %v342, %v341
  %v434 = vpack.c.b16 %v344, %v343
  %v435 = vpack.c.b16 %v346, %v345
  %v436 = vpack.c.b16 %v348, %v347
  %v437 = vpack.c.b16 %v350, %v349
  %v438 = vpack.c.b16 %v352, %v351
  %v439 = vpack.c.b16 %v354, %v353
  %v440 = vpack.c.b16 %v356, %v355
  %v441 = vpack.c.b16 %v358, %v357
  %v442 = vpack.c.b16 %v360, %v359
  %v443 = vpack.c.b16 %v362, %v361
  %v444 = vpack.c.b16 %v364, %v363
  %v445 = vpack.c.b16 %v366, %v365
  %v446 = vpack.c.b16 %v368, %v367
  %v447 = vpack.c.b16 %v370, %v369
  %v448 = vpack.c.b16 %v372, %v371
  %v449 = vpack.c.b16 %v374, %v373
  %v450 = vpack.c.b16 %v376, %v375
  %v451 = vpack.c.b16 %v378, %v377
  %v452 = vpack.c.b16 %v380, %v379
  %v453 = vpack.c.b16 %v382, %v381
  %v454 = vpack.c.b16 %v384, %v383
  %v455 = vpack.c.b16 %v386, %v385
  %v456 = vpack.c.b16 %v388, %v387
  %v457 = vpack.c.b16 %v390, %v389
  %v458 = vpack.c.b16 %v392, %v391
  %v459 = vpack.c.b16 %v394, %v393
  %v460 = vpack.c.b16 %v396, %v395
  %vm461 = vcmask 523264
  %v463 = vsel %vm461, %v12, 0
  %v466 = vsel %vm461, %v397, 0
  %v469 = vsel %vm461, %v398, 0
  %v472 = vsel %vm461, %v399, 0
  %v475 = vsel %vm461, %v400, 0
  %v478 = vsel %vm461, %v401, 0
  %v481 = vsel %vm461, %v402, 0
  %v484 = vsel %vm461, %v403, 0
  %v487 = vsel %vm461, %v404, 0
  %v490 = vsel %vm461, %v405, 0
  %v493 = vsel %vm461, %v406, 0
  %v496 = vsel %vm461, %v407, 0
  %v499 = vsel %vm461, %v408, 0
  %v502 = vsel %vm461, %v409, 0
  %v505 = vsel %vm461, %v410, 0
  %v508 = vsel %vm461, %v411, 0
  %v511 = vsel %vm461, %v412, 0
  %v514 = vsel %vm461, %v413, 0
  %v517 = vsel %vm461, %v414, 0
  %v520 = vsel %vm461, %v415, 0
  %v523 = vsel %vm461, %v416, 0
  %v526 = vsel %vm461, %v417, 0
  %v529 = vsel %vm461, %v418, 0
  %v532 = vsel %vm461, %v419, 0
  %v535 = vsel %vm461, %v420, 0
  %v538 = vsel %vm461, %v421, 0
  %v541 = vsel %vm461, %v422, 0
  %v544 = vsel %vm461, %v423, 0
  %v547 = vsel %vm461, %v424, 0
  %v550 = vsel %vm461, %v425, 0
  %v553 = vsel %vm461, %v426, 0
  %v556 = vsel %vm461, %v427, 0
  %v559 = vsel %vm461, %v428, 0
  %v562 = vsel %vm461, %v429, 0
  %v565 = vsel %vm461, %v430, 0
  %v568 = vsel %vm461, %v431, 0
  %v571 = vsel %vm461, %v432, 0
  %v574 = vsel %vm461, %v433, 0
  %v577 = vsel %vm461, %v434, 0
  %v580 = vsel %vm461, %v435, 0
  %v583 = vsel %vm461, %v436, 0
  %v586 = vsel %vm461, %v437, 0
  %v589 = vsel %vm461, %v438, 0
  %v592 = vsel %vm461, %v439, 0
  %v595 = vsel %vm461, %v440, 0
  %v598 = vsel %vm461, %v441, 0
  %v601 = vsel %vm461, %v442, 0
  %v604 = vsel %vm461, %v443, 0
  %v607 = vsel %vm461, %v444, 0
  %v610 = vsel %vm461, %v445, 0
  %v613 = vsel %vm461, %v446, 0
  %v616 = vsel %vm461, %v447, 0
  %v619 = vsel %vm461, %v448, 0
  %v622 = vsel %vm461, %v449, 0
  %v625 = vsel %vm461, %v450, 0
  %v628 = vsel %vm461, %v451, 0
  %v631 = vsel %vm461, %v452, 0
  %v634 = vsel %vm461, %v453, 0
  %v637 = vsel %vm461, %v454, 0
  %v640 = vsel %vm461, %v455, 0
  %v643 = vsel %vm461, %v456, 0
  %v646 = vsel %vm461, %v457, 0
  %v649 = vsel %vm461, %v458, 0
  %v652 = vsel %vm461, %v459, 0
  %v655 = vsel %vm461, %v460, 0
  %657 = vmatprep.subr.bf16.mxu0 0
  %658 = vmatpush1.bf16.xpose.msra.mxu0 %v487
  %659 = vmatprep.subr.bf16.mxu0 0
  %660 = vmatpush1.bf16.xpose.msra.mxu0 %v484
  %661 = vmatprep.subr.bf16.mxu0 0
  %662 = vmatpush1.bf16.xpose.msra.mxu0 %v481
  %663 = vmatprep.subr.bf16.mxu0 0
  %664 = vmatpush1.bf16.xpose.msra.mxu0 %v478
  %665 = vmatprep.subr.bf16.mxu0 0
  %666 = vmatpush1.bf16.xpose.msra.mxu0 %v475
  %667 = vmatprep.subr.bf16.mxu0 0
  %668 = vmatpush1.bf16.xpose.msra.mxu0 %v472
  %669 = vmatprep.subr.bf16.mxu0 0
  %670 = vmatpush1.bf16.xpose.msra.mxu0 %v469
  %671 = vmatprep.subr.bf16.mxu0 0
  %672 = vmatpush1.bf16.xpose.msra.mxu0 %v466
  %673 = vmatprep.subr.bf16.mxu0 0
  %674 = vmatpush2.bf16.xpose.msra.mxu0 %v511
  %675 = vmatprep.subr.bf16.mxu0 0
  %676 = vmatpush2.bf16.xpose.msra.mxu0 %v508
  %677 = vmatprep.subr.bf16.mxu0 0
  %678 = vmatpush2.bf16.xpose.msra.mxu0 %v505
  %679 = vmatprep.subr.bf16.mxu0 0
  %680 = vmatpush2.bf16.xpose.msra.mxu0 %v502
  %681 = vmatprep.subr.bf16.mxu0 0
  %682 = vmatpush2.bf16.xpose.msra.mxu0 %v499
  %683 = vmatprep.subr.bf16.mxu0 0
  %684 = vmatpush2.bf16.xpose.msra.mxu0 %v496
  %685 = vmatprep.subr.bf16.mxu0 0
  %686 = vmatpush2.bf16.xpose.msra.mxu0 %v493
  %687 = vmatprep.subr.bf16.mxu0 0
  %688 = vmatpush2.bf16.xpose.msra.mxu0 %v490
  %689 = vmatprep.mubr.bf16.mxu0 0
  %690 = vmatmul.mubr.bf16.gmra.mxu0 %v463
  %v691 = vpop.f32.mrf.mxu0
  %v692 = vadd.f32 0.0, %v691
  %v693 = vpop.f32.mrf.mxu0
  %v694 = vadd.f32 0.0, %v693
  %v695 = vpop.f32.mrf.mxu0
  %v696 = vpop.f32.mrf.mxu0
  %697 = vdwg.mxu0
  %698 = vmatprep.subr.bf16.mxu0 0
  %699 = vmatpush1.bf16.xpose.msra.mxu0 %v535
  %700 = vmatprep.subr.bf16.mxu0 0
  %701 = vmatpush1.bf16.xpose.msra.mxu0 %v532
  %702 = vmatprep.subr.bf16.mxu0 0
  %703 = vmatpush1.bf16.xpose.msra.mxu0 %v529
  %704 = vmatprep.subr.bf16.mxu0 0
  %705 = vmatpush1.bf16.xpose.msra.mxu0 %v526
  %706 = vmatprep.subr.bf16.mxu0 0
  %707 = vmatpush1.bf16.xpose.msra.mxu0 %v523
  %708 = vmatprep.subr.bf16.mxu0 0
  %709 = vmatpush1.bf16.xpose.msra.mxu0 %v520
  %710 = vmatprep.subr.bf16.mxu0 0
  %711 = vmatpush1.bf16.xpose.msra.mxu0 %v517
  %712 = vmatprep.subr.bf16.mxu0 0
  %713 = vmatpush1.bf16.xpose.msra.mxu0 %v514
  %714 = vmatprep.subr.bf16.mxu0 0
  %715 = vmatpush2.bf16.xpose.msra.mxu0 %v559
  %716 = vmatprep.subr.bf16.mxu0 0
  %717 = vmatpush2.bf16.xpose.msra.mxu0 %v556
  %718 = vmatprep.subr.bf16.mxu0 0
  %719 = vmatpush2.bf16.xpose.msra.mxu0 %v553
  %720 = vmatprep.subr.bf16.mxu0 0
  %721 = vmatpush2.bf16.xpose.msra.mxu0 %v550
  %722 = vmatprep.subr.bf16.mxu0 0
  %723 = vmatpush2.bf16.xpose.msra.mxu0 %v547
  %724 = vmatprep.subr.bf16.mxu0 0
  %725 = vmatpush2.bf16.xpose.msra.mxu0 %v544
  %726 = vmatprep.subr.bf16.mxu0 0
  %727 = vmatpush2.bf16.xpose.msra.mxu0 %v541
  %728 = vmatprep.subr.bf16.mxu0 0
  %729 = vmatpush2.bf16.xpose.msra.mxu0 %v538
  %730 = vmatprep.mubr.bf16.mxu0 0
  %731 = vmatmul.mubr.bf16.gmra.mxu0 %v463
  %v732 = vpop.f32.mrf.mxu0
  %v733 = vadd.f32 0.0, %v732
  %v734 = vpop.f32.mrf.mxu0
  %v735 = vadd.f32 0.0, %v734
  %v736 = vpop.f32.mrf.mxu0
  %v737 = vpop.f32.mrf.mxu0
  %738 = vdwg.mxu0
  %739 = vmatprep.subr.bf16.mxu0 0
  %740 = vmatpush1.bf16.xpose.msra.mxu0 %v583
  %741 = vmatprep.subr.bf16.mxu0 0
  %742 = vmatpush1.bf16.xpose.msra.mxu0 %v580
  %743 = vmatprep.subr.bf16.mxu0 0
  %744 = vmatpush1.bf16.xpose.msra.mxu0 %v577
  %745 = vmatprep.subr.bf16.mxu0 0
  %746 = vmatpush1.bf16.xpose.msra.mxu0 %v574
  %747 = vmatprep.subr.bf16.mxu0 0
  %748 = vmatpush1.bf16.xpose.msra.mxu0 %v571
  %749 = vmatprep.subr.bf16.mxu0 0
  %750 = vmatpush1.bf16.xpose.msra.mxu0 %v568
  %751 = vmatprep.subr.bf16.mxu0 0
  %752 = vmatpush1.bf16.xpose.msra.mxu0 %v565
  %753 = vmatprep.subr.bf16.mxu0 0
  %754 = vmatpush1.bf16.xpose.msra.mxu0 %v562
  %755 = vmatprep.subr.bf16.mxu0 0
  %756 = vmatpush2.bf16.xpose.msra.mxu0 %v607
  %757 = vmatprep.subr.bf16.mxu0 0
  %758 = vmatpush2.bf16.xpose.msra.mxu0 %v604
  %759 = vmatprep.subr.bf16.mxu0 0
  %760 = vmatpush2.bf16.xpose.msra.mxu0 %v601
  %761 = vmatprep.subr.bf16.mxu0 0
  %762 = vmatpush2.bf16.xpose.msra.mxu0 %v598
  %763 = vmatprep.subr.bf16.mxu0 0
  %764 = vmatpush2.bf16.xpose.msra.mxu0 %v595
  %765 = vmatprep.subr.bf16.mxu0 0
  %766 = vmatpush2.bf16.xpose.msra.mxu0 %v592
  %767 = vmatprep.subr.bf16.mxu0 0
  %768 = vmatpush2.bf16.xpose.msra.mxu0 %v589
  %769 = vmatprep.subr.bf16.mxu0 0
  %770 = vmatpush2.bf16.xpose.msra.mxu0 %v586
  %771 = vmatprep.mubr.bf16.mxu0 0
  %772 = vmatmul.mubr.bf16.gmra.mxu0 %v463
  %v773 = vpop.f32.mrf.mxu0
  %v774 = vadd.f32 0.0, %v773
  %v775 = vpop.f32.mrf.mxu0
  %v776 = vadd.f32 0.0, %v775
  %v777 = vpop.f32.mrf.mxu0
  %v778 = vpop.f32.mrf.mxu0
  %779 = vdwg.mxu0
  %780 = vmatprep.subr.bf16.mxu0 0
  %781 = vmatpush1.bf16.xpose.msra.mxu0 %v631
  %782 = vmatprep.subr.bf16.mxu0 0
  %783 = vmatpush1.bf16.xpose.msra.mxu0 %v628
  %784 = vmatprep.subr.bf16.mxu0 0
  %785 = vmatpush1.bf16.xpose.msra.mxu0 %v625
  %786 = vmatprep.subr.bf16.mxu0 0
  %787 = vmatpush1.bf16.xpose.msra.mxu0 %v622
  %788 = vmatprep.subr.bf16.mxu0 0
  %789 = vmatpush1.bf16.xpose.msra.mxu0 %v619
  %790 = vmatprep.subr.bf16.mxu0 0
  %791 = vmatpush1.bf16.xpose.msra.mxu0 %v616
  %792 = vmatprep.subr.bf16.mxu0 0
  %793 = vmatpush1.bf16.xpose.msra.mxu0 %v613
  %794 = vmatprep.subr.bf16.mxu0 0
  %795 = vmatpush1.bf16.xpose.msra.mxu0 %v610
  %796 = vmatprep.subr.bf16.mxu0 0
  %797 = vmatpush2.bf16.xpose.msra.mxu0 %v655
  %798 = vmatprep.subr.bf16.mxu0 0
  %799 = vmatpush2.bf16.xpose.msra.mxu0 %v652
  %800 = vmatprep.subr.bf16.mxu0 0
  %801 = vmatpush2.bf16.xpose.msra.mxu0 %v649
  %802 = vmatprep.subr.bf16.mxu0 0
  %803 = vmatpush2.bf16.xpose.msra.mxu0 %v646
  %804 = vmatprep.subr.bf16.mxu0 0
  %805 = vmatpush2.bf16.xpose.msra.mxu0 %v643
  %806 = vmatprep.subr.bf16.mxu0 0
  %807 = vmatpush2.bf16.xpose.msra.mxu0 %v640
  %808 = vmatprep.subr.bf16.mxu0 0
  %809 = vmatpush2.bf16.xpose.msra.mxu0 %v637
  %810 = vmatprep.subr.bf16.mxu0 0
  %811 = vmatpush2.bf16.xpose.msra.mxu0 %v634
  %812 = vmatprep.mubr.bf16.mxu0 0
  %813 = vmatmul.mubr.bf16.gmra.mxu0 %v463
  %v814 = vpop.f32.mrf.mxu0
  %v815 = vadd.f32 0.0, %v814
  %v816 = vpop.f32.mrf.mxu0
  %v817 = vadd.f32 0.0, %v816
  %v818 = vpop.f32.mrf.mxu0
  %v819 = vpop.f32.mrf.mxu0
  %820 = vdwg.mxu0
  %v821 = vpack.c.bf16 %v692, %v692
  %v822 = vpack.c.bf16 %v694, %v694
  %v823 = vpack.c.bf16 %v733, %v733
  %v824 = vpack.c.bf16 %v735, %v735
  %v825 = vpack.c.bf16 %v774, %v774
  %v826 = vpack.c.bf16 %v776, %v776
  %v827 = vpack.c.bf16 %v815, %v815
  %v828 = vpack.c.bf16 %v817, %v817
  %v837 = vunpack.c.l.b16 %v821
  %v838 = vunpack.c.l.b16 %v822
  %v839 = vunpack.c.l.b16 %v823
  %v840 = vunpack.c.l.b16 %v824
  %v841 = vunpack.c.l.b16 %v825
  %v842 = vunpack.c.l.b16 %v826
  %v843 = vunpack.c.l.b16 %v827
  %v844 = vunpack.c.l.b16 %v828
  %v845 = vpack.c.b16 %v838, %v837
  %v846 = vpack.c.b16 %v840, %v839
  %v847 = vpack.c.b16 %v842, %v841
  %v848 = vpack.c.b16 %v844, %v843
  %853 = vst [vmem:[%s2] sm:$0xff] %v845
  %854 = vst [vmem:[%s2 + $0x8] sm:$0xff] %v846
  %855 = vst [vmem:[%s2 + $0x10] sm:$0xff] %v847
  %856 = vst [vmem:[%s2 + $0x18] sm:$0xff] %v848
  // Predicated region
  $region10: #{hyper_encoder_forward.3} parent=0 // pred_check
    _
  $region11: #{hyper_encoder_forward.3} parent=0 // pred_check_branch
    %858 = sbr.rel (0) target = $region13
  $region12: #{hyper_encoder_forward.3} parent=0 // pred_region
    _
  $region13: #{hyper_encoder_forward.3} parent=0 // pred_fallthru
    _
  // Predicated region
  $region14: #{hyper_encoder_forward.3} parent=0 // pred_check
    _
  $region15: #{hyper_encoder_forward.3} parent=0 // pred_check_branch
    %860 = sbr.rel (0) target = $region17
  $region16: #{hyper_encoder_forward.3} parent=0 // pred_region
    _
  $region17: #{hyper_encoder_forward.3} parent=0 // pred_fallthru
    _

// kernel: hyper_encoder_forward.4
$region0: #{hyper_encoder_forward.4}
  #allocation0 [shape = 'u32[]', space=smem, size = 0x4, offset = 0x4, fixed_abs, tag = 'smem constant byte address 0x4 - core index']
  #allocation1 [shape = 'u32[144,128]{1,0:T(1,128)}', space=vmem, size = 0x12000, scoped, tag = 'internal scratch']
  %s0 = inlined_call_operand.vmem [shape: bf16[128,128], index: 0, kind: input, shape index: {}]
  %s1 = inlined_call_operand.vmem [shape: bf16[128,128], index: 1, kind: input, shape index: {}]
  %s2 = inlined_call_operand.vmem [shape: f32[1,128], index: 2, kind: input, shape index: {}]
  %s3 = inlined_call_operand.vmem [shape: f32[128,128], index: 3, kind: output, shape index: {}]
  %s4 = sld [smem:[#allocation0]]
  $region22: #{hyper_encoder_forward.4} parent=0
    _
  %s6 = ssub.s32 1, %s4
  %s7 = scalar_select 0, %s6, %s4
  // Predicated region
  $region2: #{hyper_encoder_forward.4} parent=0 // pred_check
    _
  $region3: #{hyper_encoder_forward.4} parent=0 // pred_check_branch
    %9 = sbr.rel (0) target = $region5
  $region4: #{hyper_encoder_forward.4} parent=0 // pred_region
    _
  $region5: #{hyper_encoder_forward.4} parent=0 // pred_fallthru
    _
  // Predicated region
  $region6: #{hyper_encoder_forward.4} parent=0 // pred_check
    _
  $region7: #{hyper_encoder_forward.4} parent=0 // pred_check_branch
    %11 = sbr.rel (0) target = $region9
  $region8: #{hyper_encoder_forward.4} parent=0 // pred_region
    _
  $region9: #{hyper_encoder_forward.4} parent=0 // pred_fallthru
    _
  // Predicated region
  $region10: #{hyper_encoder_forward.4} parent=0 // pred_check
    _
  $region11: #{hyper_encoder_forward.4} parent=0 // pred_check_branch
    %13 = sbr.rel (0) target = $region13
  $region12: #{hyper_encoder_forward.4} parent=0 // pred_region
    _
  $region13: #{hyper_encoder_forward.4} parent=0 // pred_fallthru
    _
  %v15 = vld [vmem:[%s0] sm:$0xf]
  %v16 = vld [vmem:[%s0 + $0x4] sm:$0xf]
  %v17 = vld [vmem:[%s0 + $0x8] sm:$0xf]
  %v18 = vld [vmem:[%s0 + $0xc] sm:$0xf]
  %v19 = vld [vmem:[%s0 + $0x10] sm:$0xf]
  %v20 = vld [vmem:[%s0 + $0x14] sm:$0xf]
  %v21 = vld [vmem:[%s0 + $0x18] sm:$0xf]
  %v22 = vld [vmem:[%s0 + $0x1c] sm:$0xf]
  %v23 = vld [vmem:[%s0 + $0x20] sm:$0xf]
  %v24 = vld [vmem:[%s0 + $0x24] sm:$0xf]
  %v25 = vld [vmem:[%s0 + $0x28] sm:$0xf]
  %v26 = vld [vmem:[%s0 + $0x2c] sm:$0xf]
  %v27 = vld [vmem:[%s0 + $0x30] sm:$0xf]
  %v28 = vld [vmem:[%s0 + $0x34] sm:$0xf]
  %v29 = vld [vmem:[%s0 + $0x38] sm:$0xf]
  %v30 = vld [vmem:[%s0 + $0x3c] sm:$0xf]
  %v31 = vld [vmem:[%s1] sm:$0xf]
  %v32 = vld [vmem:[%s1 + $0x4] sm:$0xf]
  %v33 = vld [vmem:[%s1 + $0x8] sm:$0xf]
  %v34 = vld [vmem:[%s1 + $0xc] sm:$0xf]
  %v35 = vld [vmem:[%s1 + $0x10] sm:$0xf]
  %v36 = vld [vmem:[%s1 + $0x14] sm:$0xf]
  %v37 = vld [vmem:[%s1 + $0x18] sm:$0xf]
  %v38 = vld [vmem:[%s1 + $0x1c] sm:$0xf]
  %v39 = vld [vmem:[%s1 + $0x20] sm:$0xf]
  %v40 = vld [vmem:[%s1 + $0x24] sm:$0xf]
  %v41 = vld [vmem:[%s1 + $0x28] sm:$0xf]
  %v42 = vld [vmem:[%s1 + $0x2c] sm:$0xf]
  %v43 = vld [vmem:[%s1 + $0x30] sm:$0xf]
  %v44 = vld [vmem:[%s1 + $0x34] sm:$0xf]
  %v45 = vld [vmem:[%s1 + $0x38] sm:$0xf]
  %v46 = vld [vmem:[%s1 + $0x3c] sm:$0xf]
  %v47 = vld [vmem:[%s2] sm:$0x1]
  %v49 = vlaneseq
  %v50 = vshrl.u32 %v49, 7
  %v51 = vsub.s32 0, %v50
  %v52 = vrot.slane %v47, %v51
  %v70 = vunpack.c.l.b16 %v15
  %v71 = vunpack.c.l.b16 %v16
  %v72 = vunpack.c.l.b16 %v17
  %v73 = vunpack.c.l.b16 %v18
  %v74 = vunpack.c.l.b16 %v19
  %v75 = vunpack.c.l.b16 %v20
  %v76 = vunpack.c.l.b16 %v21
  %v77 = vunpack.c.l.b16 %v22
  %v78 = vunpack.c.l.b16 %v23
  %v79 = vunpack.c.l.b16 %v24
  %v80 = vunpack.c.l.b16 %v25
  %v81 = vunpack.c.l.b16 %v26
  %v82 = vunpack.c.l.b16 %v27
  %v83 = vunpack.c.l.b16 %v28
  %v84 = vunpack.c.l.b16 %v29
  %v85 = vunpack.c.l.b16 %v30
  %v86 = vpack.c.b16 %v71, %v70
  %v87 = vpack.c.b16 %v73, %v72
  %v88 = vpack.c.b16 %v75, %v74
  %v89 = vpack.c.b16 %v77, %v76
  %v90 = vpack.c.b16 %v79, %v78
  %v91 = vpack.c.b16 %v81, %v80
  %v92 = vpack.c.b16 %v83, %v82
  %v93 = vpack.c.b16 %v85, %v84
  %v118 = vunpack.c.l.b16 %v31
  %v119 = vunpack.c.l.b16 %v32
  %v120 = vunpack.c.l.b16 %v33
  %v121 = vunpack.c.l.b16 %v34
  %v122 = vunpack.c.l.b16 %v35
  %v123 = vunpack.c.l.b16 %v36
  %v124 = vunpack.c.l.b16 %v37
  %v125 = vunpack.c.l.b16 %v38
  %v126 = vunpack.c.l.b16 %v39
  %v127 = vunpack.c.l.b16 %v40
  %v128 = vunpack.c.l.b16 %v41
  %v129 = vunpack.c.l.b16 %v42
  %v130 = vunpack.c.l.b16 %v43
  %v131 = vunpack.c.l.b16 %v44
  %v132 = vunpack.c.l.b16 %v45
  %v133 = vunpack.c.l.b16 %v46
  %v134 = vpack.c.b16 %v119, %v118
  %v135 = vpack.c.b16 %v121, %v120
  %v136 = vpack.c.b16 %v123, %v122
  %v137 = vpack.c.b16 %v125, %v124
  %v138 = vpack.c.b16 %v127, %v126
  %v139 = vpack.c.b16 %v129, %v128
  %v140 = vpack.c.b16 %v131, %v130
  %v141 = vpack.c.b16 %v133, %v132
  %150 = vmatprep.subr.bf16.mxu0 0
  %151 = vmatpush1.bf16.msra.mxu0 %v141
  %152 = vmatprep.subr.bf16.mxu0 0
  %153 = vmatpush1.bf16.msra.mxu0 %v140
  %154 = vmatprep.subr.bf16.mxu0 0
  %155 = vmatpush1.bf16.msra.mxu0 %v139
  %156 = vmatprep.subr.bf16.mxu0 0
  %157 = vmatpush1.bf16.msra.mxu0 %v138
  %158 = vmatprep.subr.bf16.mxu0 0
  %159 = vmatpush1.bf16.msra.mxu0 %v137
  %160 = vmatprep.subr.bf16.mxu0 0
  %161 = vmatpush1.bf16.msra.mxu0 %v136
  %162 = vmatprep.subr.bf16.mxu0 0
  %163 = vmatpush1.bf16.msra.mxu0 %v135
  %164 = vmatprep.subr.bf16.mxu0 0
  %165 = vmatpush1.bf16.msra.mxu0 %v134
  %166 = vmatprep.subr.bf16.mxu0 0
  %167 = vmatpush2.bf16.msra.mxu0 0
  %168 = vmatprep.subr.bf16.mxu0 0
  %169 = vmatpush2.bf16.msra.mxu0 0
  %170 = vmatprep.subr.bf16.mxu0 0
  %171 = vmatpush2.bf16.msra.mxu0 0
  %172 = vmatprep.subr.bf16.mxu0 0
  %173 = vmatpush2.bf16.msra.mxu0 0
  %174 = vmatprep.subr.bf16.mxu0 0
  %175 = vmatpush2.bf16.msra.mxu0 0
  %176 = vmatprep.subr.bf16.mxu0 0
  %177 = vmatpush2.bf16.msra.mxu0 0
  %178 = vmatprep.subr.bf16.mxu0 0
  %179 = vmatpush2.bf16.msra.mxu0 0
  %180 = vmatprep.subr.bf16.mxu0 0
  %181 = vmatpush2.bf16.msra.mxu0 0
  %182 = vmatprep.mubr.bf16.mxu0 0
  %183 = vmatmul.mubr.bf16.gmra.mxu0 %v86
  %v184 = vpop.f32.mrf.mxu0
  %v185 = vadd.f32 %v52, %v184
  %v186 = vpop.f32.mrf.mxu0
  %v187 = vpop.f32.mrf.mxu0
  %v188 = vadd.f32 %v52, %v187
  %v189 = vpop.f32.mrf.mxu0
  %190 = vmatprep.mubr.bf16.mxu0 0
  %191 = vmatmul.mubr.bf16.gmra.mxu0 %v87
  %v192 = vpop.f32.mrf.mxu0
  %v193 = vadd.f32 %v52, %v192
  %v194 = vpop.f32.mrf.mxu0
  %v195 = vpop.f32.mrf.mxu0
  %v196 = vadd.f32 %v52, %v195
  %v197 = vpop.f32.mrf.mxu0
  %198 = vmatprep.mubr.bf16.mxu0 0
  %199 = vmatmul.mubr.bf16.gmra.mxu0 %v88
  %v200 = vpop.f32.mrf.mxu0
  %v201 = vadd.f32 %v52, %v200
  %v202 = vpop.f32.mrf.mxu0
  %v203 = vpop.f32.mrf.mxu0
  %v204 = vadd.f32 %v52, %v203
  %v205 = vpop.f32.mrf.mxu0
  %206 = vmatprep.mubr.bf16.mxu0 0
  %207 = vmatmul.mubr.bf16.gmra.mxu0 %v89
  %v208 = vpop.f32.mrf.mxu0
  %v209 = vadd.f32 %v52, %v208
  %v210 = vpop.f32.mrf.mxu0
  %v211 = vpop.f32.mrf.mxu0
  %v212 = vadd.f32 %v52, %v211
  %v213 = vpop.f32.mrf.mxu0
  %214 = vmatprep.mubr.bf16.mxu0 0
  %215 = vmatmul.mubr.bf16.gmra.mxu0 %v90
  %v216 = vpop.f32.mrf.mxu0
  %v217 = vadd.f32 %v52, %v216
  %v218 = vpop.f32.mrf.mxu0
  %v219 = vpop.f32.mrf.mxu0
  %v220 = vadd.f32 %v52, %v219
  %v221 = vpop.f32.mrf.mxu0
  %222 = vmatprep.mubr.bf16.mxu0 0
  %223 = vmatmul.mubr.bf16.gmra.mxu0 %v91
  %v224 = vpop.f32.mrf.mxu0
  %v225 = vadd.f32 %v52, %v224
  %v226 = vpop.f32.mrf.mxu0
  %v227 = vpop.f32.mrf.mxu0
  %v228 = vadd.f32 %v52, %v227
  %v229 = vpop.f32.mrf.mxu0
  %230 = vmatprep.mubr.bf16.mxu0 0
  %231 = vmatmul.mubr.bf16.gmra.mxu0 %v92
  %v232 = vpop.f32.mrf.mxu0
  %v233 = vadd.f32 %v52, %v232
  %v234 = vpop.f32.mrf.mxu0
  %v235 = vpop.f32.mrf.mxu0
  %v236 = vadd.f32 %v52, %v235
  %v237 = vpop.f32.mrf.mxu0
  %238 = vmatprep.mubr.bf16.mxu0 0
  %239 = vmatmul.mubr.bf16.gmra.mxu0 %v93
  %v240 = vpop.f32.mrf.mxu0
  %v241 = vadd.f32 %v52, %v240
  %v242 = vpop.f32.mrf.mxu0
  %v243 = vpop.f32.mrf.mxu0
  %v244 = vadd.f32 %v52, %v243
  %v245 = vpop.f32.mrf.mxu0
  %246 = vdwg.mxu0
  %v247 = vmax.f32 %v185, 0.0
  %v248 = vmax.f32 %v188, 0.0
  %v249 = vmax.f32 %v193, 0.0
  %v250 = vmax.f32 %v196, 0.0
  %v251 = vmax.f32 %v201, 0.0
  %v252 = vmax.f32 %v204, 0.0
  %v253 = vmax.f32 %v209, 0.0
  %v254 = vmax.f32 %v212, 0.0
  %v255 = vmax.f32 %v217, 0.0
  %v256 = vmax.f32 %v220, 0.0
  %v257 = vmax.f32 %v225, 0.0
  %v258 = vmax.f32 %v228, 0.0
  %v259 = vmax.f32 %v233, 0.0
  %v260 = vmax.f32 %v236, 0.0
  %v261 = vmax.f32 %v241, 0.0
  %v262 = vmax.f32 %v244, 0.0
  %263 = vst [vmem:[%s3] sm:$0xff] %v247
  %264 = vst [vmem:[%s3 + $0x8] sm:$0xff] %v248
  %265 = vst [vmem:[%s3 + $0x10] sm:$0xff] %v249
  %266 = vst [vmem:[%s3 + $0x18] sm:$0xff] %v250
  %267 = vst [vmem:[%s3 + $0x20] sm:$0xff] %v251
  %268 = vst [vmem:[%s3 + $0x28] sm:$0xff] %v252
  %269 = vst [vmem:[%s3 + $0x30] sm:$0xff] %v253
  %270 = vst [vmem:[%s3 + $0x38] sm:$0xff] %v254
  %271 = vst [vmem:[%s3 + $0x40] sm:$0xff] %v255
  %272 = vst [vmem:[%s3 + $0x48] sm:$0xff] %v256
  %273 = vst [vmem:[%s3 + $0x50] sm:$0xff] %v257
  %274 = vst [vmem:[%s3 + $0x58] sm:$0xff] %v258
  %275 = vst [vmem:[%s3 + $0x60] sm:$0xff] %v259
  %276 = vst [vmem:[%s3 + $0x68] sm:$0xff] %v260
  %277 = vst [vmem:[%s3 + $0x70] sm:$0xff] %v261
  %278 = vst [vmem:[%s3 + $0x78] sm:$0xff] %v262
  // Predicated region
  $region14: #{hyper_encoder_forward.4} parent=0 // pred_check
    _
  $region15: #{hyper_encoder_forward.4} parent=0 // pred_check_branch
    %280 = sbr.rel (0) target = $region17
  $region16: #{hyper_encoder_forward.4} parent=0 // pred_region
    _
  $region17: #{hyper_encoder_forward.4} parent=0 // pred_fallthru
    _
  // Predicated region
  $region18: #{hyper_encoder_forward.4} parent=0 // pred_check
    _
  $region19: #{hyper_encoder_forward.4} parent=0 // pred_check_branch
    %282 = sbr.rel (0) target = $region21
  $region20: #{hyper_encoder_forward.4} parent=0 // pred_region
    _
  $region21: #{hyper_encoder_forward.4} parent=0 // pred_fallthru
    _

// kernel: hyper_encoder_forward.5
$region0: #{hyper_encoder_forward.5}
  #allocation0 [shape = 'u32[]', space=smem, size = 0x4, offset = 0x4, fixed_abs, tag = 'smem constant byte address 0x4 - core index']
  #allocation1 [shape = 'u32[144,128]{1,0:T(1,128)}', space=vmem, size = 0x12000, scoped, tag = 'internal scratch']
  #allocation2 [shape = 'f32[128,128]{1,0:T(8,128)}', space=vmem, size = 0x10000, scoped, tag = 'scratch operand']
  #allocation3 [shape = 'f32[128,128]{1,0:T(8,128)}', space=vmem, size = 0x10000, scoped, tag = 'scratch operand']
  %s0 = inlined_call_operand.vmem [shape: f32[4], index: 0, kind: input, shape index: {}]
  %s1 = inlined_call_operand.vmem [shape: f32[4], index: 1, kind: input, shape index: {}]
  %s2 = inlined_call_operand.vmem [shape: f32[128,128], index: 2, kind: input, shape index: {}]
  %s3 = inlined_call_operand.vmem [shape: f32[128,128], index: 3, kind: input, shape index: {}]
  %s4 = inlined_call_operand.vmem [shape: bf16[128,128], index: 4, kind: input, shape index: {}]
  %s5 = inlined_call_operand.vmem [shape: bf16[128,128], index: 5, kind: input, shape index: {}]
  %s6 = inlined_call_operand.vmem [shape: f32[128,1], index: 6, kind: input, shape index: {}]
  %s7 = inlined_call_operand.vmem [shape: f32[128,1], index: 7, kind: input, shape index: {}]
  %s8 = inlined_call_operand.vmem [shape: bf16[4,128,128], index: 8, kind: input, shape index: {}, may-alias: {8,9}]
  %s9 = inlined_call_operand.vmem [shape: bf16[4,128,128], index: 9, kind: input, shape index: {}, may-alias: {8,9}]
  %s10 = inlined_call_operand.vmem [shape: bf16[4,8,128], index: 10, kind: input, shape index: {}]
  %s11 = inlined_call_operand.vmem [shape: bf16[4,128,128], index: 11, kind: input, shape index: {}]
  %s12 = inlined_call_operand.vmem [shape: bf16[4,128,128], index: 12, kind: input, shape index: {}]
  %s13 = inlined_call_operand.vmem [shape: f32[128,128], index: 13, kind: output, shape index: {0}]
  %s14 = inlined_call_operand.vmem [shape: f32[128,128], index: 14, kind: output, shape index: {1}]
  %15 = xla_tuple %s13, %s14
  %s16 = sld [smem:[#allocation0]]
  $region109: #{hyper_encoder_forward.5} parent=0
    _
  %s18 = ssub.s32 1, %s16
  %s19 = scalar_select 0, %s18, %s16
  $region1: #{hyper_encoder_forward.5} parent=0
    #allocation4 [shape = 'u8[512]{0}', space=smem, size = 0x200, scoped, tag = 'input window, operand 0, single buffered']
    #allocation5 [shape = 's32[2]{0}', space=sflag, size = 0x8, scoped, tag = 'scoped memory for hyper_encoder_forward.5']
    #allocation6 [shape = 'u8[512]{0}', space=smem, size = 0x200, scoped, tag = 'input window, operand 1, single buffered']
    #allocation7 [shape = 's32[1]{0}', space=sflag, size = 0x4, scoped, tag = 'scoped memory for hyper_encoder_forward.5']
    %20 = vsyncpa [#allocation5], 0
    %21 = vsyncpa [#allocation7], 0
    loop: start=0, step=1, limit=6
    $region2: #{hyper_encoder_forward.5} parent=1 // loop_pre_header
      _
    $region3: #{hyper_encoder_forward.5} parent=1 // loop_header
      %s23 = sphi 0, %s27
      %p24 = scmp.ge.s32.totalorder %s23, 6
      %s31 = sphi 0, %s31
      %s33 = sphi 0, %s31
      %s34 = sphi 0, %s33
      %s48 = sphi 0, %s34
      %s52 = sphi 0, %s52
      %s54 = sphi 0, %s52
      %s55 = sphi 0, %s54
      %s69 = sphi 0, %s55
      %s73 = sphi 0, %s73
      %s75 = sphi 0, %s73
      %s76 = sphi 0, %s75
      %s90 = sphi 0, %s76
      %s94 = sphi 0, %s94
      %s96 = sphi 0, %s94
      %s97 = sphi 0, %s96
      %s111 = sphi 0, %s97
      %s115 = sphi 0, %s115
      %s117 = sphi 0, %s115
      %s118 = sphi 0, %s117
      %s132 = sphi 0, %s118
      %s136 = sphi 0, %s136
      %s138 = sphi 0, %s136
      %s139 = sphi 0, %s138
      %s153 = sphi 0, %s139
      %s157 = sphi 0, %s157
      %s159 = sphi 0, %s157
      %s160 = sphi 0, %s159
      %s174 = sphi 0, %s160
      %s178 = sphi 0, %s178
      %s180 = sphi 0, %s178
      %s181 = sphi 0, %s180
      %s195 = sphi 0, %s181
      %s201 = sphi 0, %s203
      %s204 = sphi 0, %s201
      %s205 = sphi 0, %s204
      %s221 = sphi 0, %s205
      %s227 = sphi 0, %s229
      %s230 = sphi 0, %s227
      %s231 = sphi 0, %s230
      %s247 = sphi 0, %s231
      %s253 = sphi 0, %s255
      %s256 = sphi 0, %s253
      %s257 = sphi 0, %s256
      %s273 = sphi 0, %s257
      %s279 = sphi 0, %s281
      %s282 = sphi 0, %s279
      %s283 = sphi 0, %s282
      %s299 = sphi 0, %s283
      %s305 = sphi 0, %s307
      %s308 = sphi 0, %s305
      %s309 = sphi 0, %s308
      %s325 = sphi 0, %s309
      %s329 = sphi 0, %s329
      %s331 = sphi 0, %s329
      %s332 = sphi 0, %s331
      %s346 = sphi 0, %s332
      %s350 = sphi 0, %s350
      %s352 = sphi 0, %s350
      %s353 = sphi 0, %s352
      %s367 = sphi 0, %s353
    $region4: #{hyper_encoder_forward.5} parent=1 // loop_header_branch
      %26 = sbr.rel (%p24) target = $region8
    $region5: #{hyper_encoder_forward.5} parent=1 // loop_body
      %s28 = ssub.s32 %s23, 1
      %s29 = ssub.s32 %s23, 2
      %s30 = sadd.s32 %s23, 1
      %s32 = sadd.s32 %s31, 1
      %p35 = scmp.eq.s32.totalorder %s23, 3
      %p36 = scmp.ne.s32.totalorder %s31, %s33
      %p37 = scmp.eq.s32.totalorder %s23, 0
      %p38 = por %p36, %p37
      %p39 = scmp.ne.s32.totalorder %s31, %s33
      %p40 = scmp.eq.s32.totalorder %s28, 3
      %p41 = por %p39, %p40
      %p42 = scmp.ne.s32.totalorder %s33, %s34
      %p43 = scmp.eq.s32.totalorder %s28, 0
      %p44 = por %p42, %p43
      %p45 = scmp.ne.s32.totalorder %s33, %s34
      %p46 = scmp.eq.s32.totalorder %s29, 3
      %p47 = por %p45, %p46
      %p49 = scmp.ne.s32.totalorder %s34, %s48
      %p50 = scmp.eq.s32.totalorder %s29, 0
      %p51 = por %p49, %p50
      %s53 = sadd.s32 %s52, 1
      %p56 = scmp.eq.s32.totalorder %s23, 3
      %p57 = scmp.ne.s32.totalorder %s52, %s54
      %p58 = scmp.eq.s32.totalorder %s23, 0
      %p59 = por %p57, %p58
      %p60 = scmp.ne.s32.totalorder %s52, %s54
      %p61 = scmp.eq.s32.totalorder %s28, 3
      %p62 = por %p60, %p61
      %p63 = scmp.ne.s32.totalorder %s54, %s55
      %p64 = scmp.eq.s32.totalorder %s28, 0
      %p65 = por %p63, %p64
      %p66 = scmp.ne.s32.totalorder %s54, %s55
      %p67 = scmp.eq.s32.totalorder %s29, 3
      %p68 = por %p66, %p67
      %p70 = scmp.ne.s32.totalorder %s55, %s69
      %p71 = scmp.eq.s32.totalorder %s29, 0
      %p72 = por %p70, %p71
      %s74 = sadd.s32 %s73, 1
      %p77 = scmp.eq.s32.totalorder %s23, 3
      %p78 = scmp.ne.s32.totalorder %s73, %s75
      %p79 = scmp.eq.s32.totalorder %s23, 0
      %p80 = por %p78, %p79
      %p81 = scmp.ne.s32.totalorder %s73, %s75
      %p82 = scmp.eq.s32.totalorder %s28, 3
      %p83 = por %p81, %p82
      %p84 = scmp.ne.s32.totalorder %s75, %s76
      %p85 = scmp.eq.s32.totalorder %s28, 0
      %p86 = por %p84, %p85
      %p87 = scmp.ne.s32.totalorder %s75, %s76
      %p88 = scmp.eq.s32.totalorder %s29, 3
      %p89 = por %p87, %p88
      %p91 = scmp.ne.s32.totalorder %s76, %s90
      %p92 = scmp.eq.s32.totalorder %s29, 0
      %p93 = por %p91, %p92
      %s95 = sadd.s32 %s94, 1
      %p98 = scmp.eq.s32.totalorder %s23, 3
      %p99 = scmp.ne.s32.totalorder %s94, %s96
      %p100 = scmp.eq.s32.totalorder %s23, 0
      %p101 = por %p99, %p100
      %p102 = scmp.ne.s32.totalorder %s94, %s96
      %p103 = scmp.eq.s32.totalorder %s28, 3
      %p104 = por %p102, %p103
      %p105 = scmp.ne.s32.totalorder %s96, %s97
      %p106 = scmp.eq.s32.totalorder %s28, 0
      %p107 = por %p105, %p106
      %p108 = scmp.ne.s32.totalorder %s96, %s97
      %p109 = scmp.eq.s32.totalorder %s29, 3
      %p110 = por %p108, %p109
      %p112 = scmp.ne.s32.totalorder %s97, %s111
      %p113 = scmp.eq.s32.totalorder %s29, 0
      %p114 = por %p112, %p113
      %s116 = sadd.s32 %s115, 1
      %p119 = scmp.eq.s32.totalorder %s23, 3
      %p120 = scmp.ne.s32.totalorder %s115, %s117
      %p121 = scmp.eq.s32.totalorder %s23, 0
      %p122 = por %p120, %p121
      %p123 = scmp.ne.s32.totalorder %s115, %s117
      %p124 = scmp.eq.s32.totalorder %s28, 3
      %p125 = por %p123, %p124
      %p126 = scmp.ne.s32.totalorder %s117, %s118
      %p127 = scmp.eq.s32.totalorder %s28, 0
      %p128 = por %p126, %p127
      %p129 = scmp.ne.s32.totalorder %s117, %s118
      %p130 = scmp.eq.s32.totalorder %s29, 3
      %p131 = por %p129, %p130
      %p133 = scmp.ne.s32.totalorder %s118, %s132
      %p134 = scmp.eq.s32.totalorder %s29, 0
      %p135 = por %p133, %p134
      %s137 = sadd.s32 %s136, 1
      %p140 = scmp.eq.s32.totalorder %s23, 3
      %p141 = scmp.ne.s32.totalorder %s136, %s138
      %p142 = scmp.eq.s32.totalorder %s23, 0
      %p143 = por %p141, %p142
      %p144 = scmp.ne.s32.totalorder %s136, %s138
      %p145 = scmp.eq.s32.totalorder %s28, 3
      %p146 = por %p144, %p145
      %p147 = scmp.ne.s32.totalorder %s138, %s139
      %p148 = scmp.eq.s32.totalorder %s28, 0
      %p149 = por %p147, %p148
      %p150 = scmp.ne.s32.totalorder %s138, %s139
      %p151 = scmp.eq.s32.totalorder %s29, 3
      %p152 = por %p150, %p151
      %p154 = scmp.ne.s32.totalorder %s139, %s153
      %p155 = scmp.eq.s32.totalorder %s29, 0
      %p156 = por %p154, %p155
      %s158 = sadd.s32 %s157, 1
      %p161 = scmp.eq.s32.totalorder %s23, 3
      %p162 = scmp.ne.s32.totalorder %s157, %s159
      %p163 = scmp.eq.s32.totalorder %s23, 0
      %p164 = por %p162, %p163
      %p165 = scmp.ne.s32.totalorder %s157, %s159
      %p166 = scmp.eq.s32.totalorder %s28, 3
      %p167 = por %p165, %p166
      %p168 = scmp.ne.s32.totalorder %s159, %s160
      %p169 = scmp.eq.s32.totalorder %s28, 0
      %p170 = por %p168, %p169
      %p171 = scmp.ne.s32.totalorder %s159, %s160
      %p172 = scmp.eq.s32.totalorder %s29, 3
      %p173 = por %p171, %p172
      %p175 = scmp.ne.s32.totalorder %s160, %s174
      %p176 = scmp.eq.s32.totalorder %s29, 0
      %p177 = por %p175, %p176
      %s179 = sadd.s32 %s178, 1
      %p182 = scmp.eq.s32.totalorder %s23, 3
      %p183 = scmp.ne.s32.totalorder %s178, %s180
      %p184 = scmp.eq.s32.totalorder %s23, 0
      %p185 = por %p183, %p184
      %p186 = scmp.ne.s32.totalorder %s178, %s180
      %p187 = scmp.eq.s32.totalorder %s28, 3
      %p188 = por %p186, %p187
      %p189 = scmp.ne.s32.totalorder %s180, %s181
      %p190 = scmp.eq.s32.totalorder %s28, 0
      %p191 = por %p189, %p190
      %p192 = scmp.ne.s32.totalorder %s180, %s181
      %p193 = scmp.eq.s32.totalorder %s29, 3
      %p194 = por %p192, %p193
      %p196 = scmp.ne.s32.totalorder %s181, %s195
      %p197 = scmp.eq.s32.totalorder %s29, 0
      %p198 = por %p196, %p197
      %s199 = ssub.s32 %s23, %s30
      %p200 = scmp.eq.s32.totalorder %s199, 0
      %s202 = sadd.s32 %s201, 1
      %s203 = scalar_select %p200, %s201, %s202
      %p206 = pneg %p200
      %p207 = scmp.eq.s32.totalorder %s23, 3
      %p208 = por %p206, %p207
      %p209 = scmp.ne.s32.totalorder %s201, %s204
      %p210 = scmp.eq.s32.totalorder %s23, 0
      %p211 = por %p209, %p210
      %p212 = scmp.ne.s32.totalorder %s201, %s204
      %p213 = scmp.eq.s32.totalorder %s28, 3
      %p214 = por %p212, %p213
      %p215 = scmp.ne.s32.totalorder %s204, %s205
      %p216 = scmp.eq.s32.totalorder %s28, 0
      %p217 = por %p215, %p216
      %p218 = scmp.ne.s32.totalorder %s204, %s205
      %p219 = scmp.eq.s32.totalorder %s29, 3
      %p220 = por %p218, %p219
      %p222 = scmp.ne.s32.totalorder %s205, %s221
      %p223 = scmp.eq.s32.totalorder %s29, 0
      %p224 = por %p222, %p223
      %s225 = ssub.s32 %s23, %s30
      %p226 = scmp.eq.s32.totalorder %s225, 0
      %s228 = sadd.s32 %s227, 1
      %s229 = scalar_select %p226, %s227, %s228
      %p232 = pneg %p226
      %p233 = scmp.eq.s32.totalorder %s23, 3
      %p234 = por %p232, %p233
      %p235 = scmp.ne.s32.totalorder %s227, %s230
      %p236 = scmp.eq.s32.totalorder %s23, 0
      %p237 = por %p235, %p236
      %p238 = scmp.ne.s32.totalorder %s227, %s230
      %p239 = scmp.eq.s32.totalorder %s28, 3
      %p240 = por %p238, %p239
      %p241 = scmp.ne.s32.totalorder %s230, %s231
      %p242 = scmp.eq.s32.totalorder %s28, 0
      %p243 = por %p241, %p242
      %p244 = scmp.ne.s32.totalorder %s230, %s231
      %p245 = scmp.eq.s32.totalorder %s29, 3
      %p246 = por %p244, %p245
      %p248 = scmp.ne.s32.totalorder %s231, %s247
      %p249 = scmp.eq.s32.totalorder %s29, 0
      %p250 = por %p248, %p249
      %s251 = ssub.s32 %s23, %s30
      %p252 = scmp.eq.s32.totalorder %s251, 0
      %s254 = sadd.s32 %s253, 1
      %s255 = scalar_select %p252, %s253, %s254
      %p258 = pneg %p252
      %p259 = scmp.eq.s32.totalorder %s23, 3
      %p260 = por %p258, %p259
      %p261 = scmp.ne.s32.totalorder %s253, %s256
      %p262 = scmp.eq.s32.totalorder %s23, 0
      %p263 = por %p261, %p262
      %p264 = scmp.ne.s32.totalorder %s253, %s256
      %p265 = scmp.eq.s32.totalorder %s28, 3
      %p266 = por %p264, %p265
      %p267 = scmp.ne.s32.totalorder %s256, %s257
      %p268 = scmp.eq.s32.totalorder %s28, 0
      %p269 = por %p267, %p268
      %p270 = scmp.ne.s32.totalorder %s256, %s257
      %p271 = scmp.eq.s32.totalorder %s29, 3
      %p272 = por %p270, %p271
      %p274 = scmp.ne.s32.totalorder %s257, %s273
      %p275 = scmp.eq.s32.totalorder %s29, 0
      %p276 = por %p274, %p275
      %s277 = ssub.s32 %s23, %s30
      %p278 = scmp.eq.s32.totalorder %s277, 0
      %s280 = sadd.s32 %s279, 1
      %s281 = scalar_select %p278, %s279, %s280
      %p284 = pneg %p278
      %p285 = scmp.eq.s32.totalorder %s23, 3
      %p286 = por %p284, %p285
      %p287 = scmp.ne.s32.totalorder %s279, %s282
      %p288 = scmp.eq.s32.totalorder %s23, 0
      %p289 = por %p287, %p288
      %p290 = scmp.ne.s32.totalorder %s279, %s282
      %p291 = scmp.eq.s32.totalorder %s28, 3
      %p292 = por %p290, %p291
      %p293 = scmp.ne.s32.totalorder %s282, %s283
      %p294 = scmp.eq.s32.totalorder %s28, 0
      %p295 = por %p293, %p294
      %p296 = scmp.ne.s32.totalorder %s282, %s283
      %p297 = scmp.eq.s32.totalorder %s29, 3
      %p298 = por %p296, %p297
      %p300 = scmp.ne.s32.totalorder %s283, %s299
      %p301 = scmp.eq.s32.totalorder %s29, 0
      %p302 = por %p300, %p301
      %s303 = ssub.s32 %s23, %s30
      %p304 = scmp.eq.s32.totalorder %s303, 0
      %s306 = sadd.s32 %s305, 1
      %s307 = scalar_select %p304, %s305, %s306
      %p310 = pneg %p304
      %p311 = scmp.eq.s32.totalorder %s23, 3
      %p312 = por %p310, %p311
      %p313 = scmp.ne.s32.totalorder %s305, %s308
      %p314 = scmp.eq.s32.totalorder %s23, 0
      %p315 = por %p313, %p314
      %p316 = scmp.ne.s32.totalorder %s305, %s308
      %p317 = scmp.eq.s32.totalorder %s28, 3
      %p318 = por %p316, %p317
      %p319 = scmp.ne.s32.totalorder %s308, %s309
      %p320 = scmp.eq.s32.totalorder %s28, 0
      %p321 = por %p319, %p320
      %p322 = scmp.ne.s32.totalorder %s308, %s309
      %p323 = scmp.eq.s32.totalorder %s29, 3
      %p324 = por %p322, %p323
      %p326 = scmp.ne.s32.totalorder %s309, %s325
      %p327 = scmp.eq.s32.totalorder %s29, 0
      %p328 = por %p326, %p327
      %s330 = sadd.s32 %s329, 1
      %p333 = scmp.eq.s32.totalorder %s23, 3
      %p334 = scmp.ne.s32.totalorder %s329, %s331
      %p335 = scmp.eq.s32.totalorder %s23, 0
      %p336 = por %p334, %p335
      %p337 = scmp.ne.s32.totalorder %s329, %s331
      %p338 = scmp.eq.s32.totalorder %s28, 3
      %p339 = por %p337, %p338
      %p340 = scmp.ne.s32.totalorder %s331, %s332
      %p341 = scmp.eq.s32.totalorder %s28, 0
      %p342 = por %p340, %p341
      %p343 = scmp.ne.s32.totalorder %s331, %s332
      %p344 = scmp.eq.s32.totalorder %s29, 3
      %p345 = por %p343, %p344
      %p347 = scmp.ne.s32.totalorder %s332, %s346
      %p348 = scmp.eq.s32.totalorder %s29, 0
      %p349 = por %p347, %p348
      %s351 = sadd.s32 %s350, 1
      %p354 = scmp.eq.s32.totalorder %s23, 3
      %p355 = scmp.ne.s32.totalorder %s350, %s352
      %p356 = scmp.eq.s32.totalorder %s23, 0
      %p357 = por %p355, %p356
      %p358 = scmp.ne.s32.totalorder %s350, %s352
      %p359 = scmp.eq.s32.totalorder %s28, 3
      %p360 = por %p358, %p359
      %p361 = scmp.ne.s32.totalorder %s352, %s353
      %p362 = scmp.eq.s32.totalorder %s28, 0
      %p363 = por %p361, %p362
      %p364 = scmp.ne.s32.totalorder %s352, %s353
      %p365 = scmp.eq.s32.totalorder %s29, 3
      %p366 = por %p364, %p365
      %p368 = scmp.ne.s32.totalorder %s353, %s367
      %p369 = scmp.eq.s32.totalorder %s29, 0
      %p370 = por %p368, %p369
      %p371 = scmp.le.s32.totalorder 1, %s23
      %p372 = scmp.lt.s32.totalorder %s23, 5
      %p373 = pnand %p371, %p372
      %p374 = pneg %p373
      // Predicated region
      $region9: #{hyper_encoder_forward.5} parent=5 // pred_check
        _
      $region10: #{hyper_encoder_forward.5} parent=5 // pred_check_branch
        %376 = sbr.rel (%p373) target = $region12
      $region11: #{hyper_encoder_forward.5} parent=5 // pred_region
        %s377 = ssub.s32 %s23, 1
        // Predicated region
        $region13: #{hyper_encoder_forward.5} parent=11 // pred_check
          %p378 = pneg %p44
        $region14: #{hyper_encoder_forward.5} parent=11 // pred_check_branch
          %380 = sbr.rel (%p378) target = $region16
        $region15: #{hyper_encoder_forward.5} parent=11 // pred_region
          %s382 = ssub.s32 16, 16
          %383 = vsyncadd [#allocation5], %s382
          %s385 = sshll.u32 %s0, 4
          %s386 = int_to_ptr.vmem [resolvable:$true] %s385
          %388 = dma.vmem_to_smem %s386, 16, [#allocation4], [#allocation5]
        $region16: #{hyper_encoder_forward.5} parent=11 // pred_fallthru
          _
        // Predicated region
        $region17: #{hyper_encoder_forward.5} parent=11 // pred_check
          %p389 = pneg %p65
        $region18: #{hyper_encoder_forward.5} parent=11 // pred_check_branch
          %391 = sbr.rel (%p389) target = $region20
        $region19: #{hyper_encoder_forward.5} parent=11 // pred_region
          %s393 = ssub.s32 16, 16
          %394 = vsyncadd [#allocation7], %s393
          %s396 = sshll.u32 %s1, 4
          %s397 = int_to_ptr.vmem [resolvable:$true] %s396
          %399 = dma.vmem_to_smem %s397, 16, [#allocation6], [#allocation7]
        $region20: #{hyper_encoder_forward.5} parent=11 // pred_fallthru
          _
        // Predicated region
        $region21: #{hyper_encoder_forward.5} parent=11 // pred_check
          %p400 = pneg %p86
        $region22: #{hyper_encoder_forward.5} parent=11 // pred_check_branch
          %402 = sbr.rel (%p400) target = $region24
        $region23: #{hyper_encoder_forward.5} parent=11 // pred_region
          _
        $region24: #{hyper_encoder_forward.5} parent=11 // pred_fallthru
          _
        // Predicated region
        $region25: #{hyper_encoder_forward.5} parent=11 // pred_check
          %p403 = pneg %p107
        $region26: #{hyper_encoder_forward.5} parent=11 // pred_check_branch
          %405 = sbr.rel (%p403) target = $region28
        $region27: #{hyper_encoder_forward.5} parent=11 // pred_region
          _
        $region28: #{hyper_encoder_forward.5} parent=11 // pred_fallthru
          _
        // Predicated region
        $region29: #{hyper_encoder_forward.5} parent=11 // pred_check
          %p406 = pneg %p128
        $region30: #{hyper_encoder_forward.5} parent=11 // pred_check_branch
          %408 = sbr.rel (%p406) target = $region32
        $region31: #{hyper_encoder_forward.5} parent=11 // pred_region
          _
        $region32: #{hyper_encoder_forward.5} parent=11 // pred_fallthru
          _
        // Predicated region
        $region33: #{hyper_encoder_forward.5} parent=11 // pred_check
          %p409 = pneg %p149
        $region34: #{hyper_encoder_forward.5} parent=11 // pred_check_branch
          %411 = sbr.rel (%p409) target = $region36
        $region35: #{hyper_encoder_forward.5} parent=11 // pred_region
          _
        $region36: #{hyper_encoder_forward.5} parent=11 // pred_fallthru
          _
        // Predicated region
        $region37: #{hyper_encoder_forward.5} parent=11 // pred_check
          %p412 = pneg %p170
        $region38: #{hyper_encoder_forward.5} parent=11 // pred_check_branch
          %414 = sbr.rel (%p412) target = $region40
        $region39: #{hyper_encoder_forward.5} parent=11 // pred_region
          _
        $region40: #{hyper_encoder_forward.5} parent=11 // pred_fallthru
          _
        // Predicated region
        $region41: #{hyper_encoder_forward.5} parent=11 // pred_check
          %p415 = pneg %p191
        $region42: #{hyper_encoder_forward.5} parent=11 // pred_check_branch
          %417 = sbr.rel (%p415) target = $region44
        $region43: #{hyper_encoder_forward.5} parent=11 // pred_region
          _
        $region44: #{hyper_encoder_forward.5} parent=11 // pred_fallthru
          _
      $region12: #{hyper_encoder_forward.5} parent=5 // pred_fallthru
        _
      %p418 = scmp.lt.s32.totalorder %s23, 4
      // Predicated region
      $region45: #{hyper_encoder_forward.5} parent=5 // pred_check
        %p419 = pneg %p418
      $region46: #{hyper_encoder_forward.5} parent=5 // pred_check_branch
        %421 = sbr.rel (%p419) target = $region48
      $region47: #{hyper_encoder_forward.5} parent=5 // pred_region
        // Predicated region
        $region49: #{hyper_encoder_forward.5} parent=47 // pred_check
          %p422 = pneg %p211
        $region50: #{hyper_encoder_forward.5} parent=47 // pred_check_branch
          %424 = sbr.rel (%p422) target = $region52
        $region51: #{hyper_encoder_forward.5} parent=47 // pred_region
          %p425 = scmp.lt.s32.totalorder %s23, 3
          %s426 = scalar_select %p425, %s23, 3
          %s427 = smul.addr %s426, 16
          %s428 = smul.addr %s427, 4
          %s429 = scalar_lea.vmem %s8, %s428
        $region52: #{hyper_encoder_forward.5} parent=47 // pred_fallthru
          _
        // Predicated region
        $region53: #{hyper_encoder_forward.5} parent=47 // pred_check
          %p430 = pneg %p237
        $region54: #{hyper_encoder_forward.5} parent=47 // pred_check_branch
          %432 = sbr.rel (%p430) target = $region56
        $region55: #{hyper_encoder_forward.5} parent=47 // pred_region
          %p433 = scmp.lt.s32.totalorder %s23, 3
          %s434 = scalar_select %p433, %s23, 3
          %s435 = smul.addr %s434, 16
          %s436 = smul.addr %s435, 4
          %s437 = scalar_lea.vmem %s9, %s436
        $region56: #{hyper_encoder_forward.5} parent=47 // pred_fallthru
          _
        // Predicated region
        $region57: #{hyper_encoder_forward.5} parent=47 // pred_check
          %p438 = pneg %p263
        $region58: #{hyper_encoder_forward.5} parent=47 // pred_check_branch
          %440 = sbr.rel (%p438) target = $region60
        $region59: #{hyper_encoder_forward.5} parent=47 // pred_region
          %p441 = scmp.lt.s32.totalorder %s23, 3
          %s442 = scalar_select %p441, %s23, 3
          %s443 = smul.addr %s442, 4
          %s444 = scalar_lea.vmem %s10, %s443
        $region60: #{hyper_encoder_forward.5} parent=47 // pred_fallthru
          _
        // Predicated region
        $region61: #{hyper_encoder_forward.5} parent=47 // pred_check
          %p445 = pneg %p289
        $region62: #{hyper_encoder_forward.5} parent=47 // pred_check_branch
          %447 = sbr.rel (%p445) target = $region64
        $region63: #{hyper_encoder_forward.5} parent=47 // pred_region
          %p448 = scmp.lt.s32.totalorder %s23, 3
          %s449 = scalar_select %p448, %s23, 3
          %s450 = smul.addr %s449, 16
          %s451 = smul.addr %s450, 4
          %s452 = scalar_lea.vmem %s11, %s451
        $region64: #{hyper_encoder_forward.5} parent=47 // pred_fallthru
          _
        // Predicated region
        $region65: #{hyper_encoder_forward.5} parent=47 // pred_check
          %p453 = pneg %p315
        $region66: #{hyper_encoder_forward.5} parent=47 // pred_check_branch
          %455 = sbr.rel (%p453) target = $region68
        $region67: #{hyper_encoder_forward.5} parent=47 // pred_region
          %p456 = scmp.lt.s32.totalorder %s23, 3
          %s457 = scalar_select %p456, %s23, 3
          %s458 = smul.addr %s457, 16
          %s459 = smul.addr %s458, 4
          %s460 = scalar_lea.vmem %s12, %s459
        $region68: #{hyper_encoder_forward.5} parent=47 // pred_fallthru
          _
      $region48: #{hyper_encoder_forward.5} parent=5 // pred_fallthru
        _
      %p461 = scmp.le.s32.totalorder 1, %s23
      %p462 = scmp.lt.s32.totalorder %s23, 5
      %p463 = pnand %p461, %p462
      %p464 = pneg %p463
      // Predicated region
      $region69: #{hyper_encoder_forward.5} parent=5 // pred_check
        _
      $region70: #{hyper_encoder_forward.5} parent=5 // pred_check_branch
        %466 = sbr.rel (%p463) target = $region72
      $region71: #{hyper_encoder_forward.5} parent=5 // pred_region
        %s467 = ssub.s32 %s23, 1
        // Predicated region
        $region73: #{hyper_encoder_forward.5} parent=71 // pred_check
          %p468 = pneg %p44
        $region74: #{hyper_encoder_forward.5} parent=71 // pred_check_branch
          %470 = sbr.rel (%p468) target = $region76
        $region75: #{hyper_encoder_forward.5} parent=71 // pred_region
          %471 = dma.done [#allocation5], 16
        $region76: #{hyper_encoder_forward.5} parent=71 // pred_fallthru
          _
        // Predicated region
        $region77: #{hyper_encoder_forward.5} parent=71 // pred_check
          %p472 = pneg %p65
        $region78: #{hyper_encoder_forward.5} parent=71 // pred_check_branch
          %474 = sbr.rel (%p472) target = $region80
        $region79: #{hyper_encoder_forward.5} parent=71 // pred_region
          %475 = dma.done [#allocation7], 16
        $region80: #{hyper_encoder_forward.5} parent=71 // pred_fallthru
          _
        %476 = sfence
        %p477 = pneg %p44
        %p478 = pneg %p41
        %p479 = pneg %p65
        %p480 = pneg %p62
        %p481 = pneg %p86
        %p482 = pneg %p83
        %p483 = pneg %p107
        %p484 = pneg %p104
        %p485 = pneg %p128
        %p486 = pneg %p125
        %p487 = pneg %p149
        %p488 = pneg %p146
        %p489 = pneg %p170
        %p490 = pneg %p167
        %p491 = pneg %p191
        %p492 = pneg %p188
        %p493 = scmp.lt.s32.totalorder %s28, 3
        %s494 = scalar_select %p493, %s28, 3
        %s495 = smul.addr %s494, 16
        %s496 = smul.addr %s495, 4
        %s497 = scalar_lea.vmem %s8, %s496
        %p498 = pneg %p217
        %p499 = pneg %p214
        %p500 = scmp.lt.s32.totalorder %s28, 3
        %s501 = scalar_select %p500, %s28, 3
        %s502 = smul.addr %s501, 16
        %s503 = smul.addr %s502, 4
        %s504 = scalar_lea.vmem %s9, %s503
        %p505 = pneg %p243
        %p506 = pneg %p240
        %p507 = scmp.lt.s32.totalorder %s28, 3
        %s508 = scalar_select %p507, %s28, 3
        %s509 = smul.addr %s508, 4
        %s510 = scalar_lea.vmem %s10, %s509
        %p511 = pneg %p269
        %p512 = pneg %p266
        %p513 = scmp.lt.s32.totalorder %s28, 3
        %s514 = scalar_select %p513, %s28, 3
        %s515 = smul.addr %s514, 16
        %s516 = smul.addr %s515, 4
        %s517 = scalar_lea.vmem %s11, %s516
        %p518 = pneg %p295
        %p519 = pneg %p292
        %p520 = scmp.lt.s32.totalorder %s28, 3
        %s521 = scalar_select %p520, %s28, 3
        %s522 = smul.addr %s521, 16
        %s523 = smul.addr %s522, 4
        %s524 = scalar_lea.vmem %s12, %s523
        %p525 = pneg %p321
        %p526 = pneg %p318
        %p527 = pneg %p342
        %p528 = pneg %p339
        %p529 = pneg %p363
        %p530 = pneg %p360
        %p531 = scmp.lt.s32.totalorder %s28, 3
        %s532 = scalar_select %p531, %s28, 3
        %s533 = smul.addr %s532, 16
        %s534 = smul.addr %s533, 4
        %s535 = scalar_lea.vmem %s8, %s534
        %p536 = scmp.lt.s32.totalorder %s28, 3
        %s537 = scalar_select %p536, %s28, 3
        %s538 = smul.addr %s537, 16
        %s539 = smul.addr %s538, 4
        %s540 = scalar_lea.vmem %s9, %s539
        %p541 = scmp.lt.s32.totalorder %s28, 3
        %s542 = scalar_select %p541, %s28, 3
        %s543 = smul.addr %s542, 4
        %s544 = scalar_lea.vmem %s10, %s543
        %p545 = scmp.lt.s32.totalorder %s28, 3
        %s546 = scalar_select %p545, %s28, 3
        %s547 = smul.addr %s546, 16
        %s548 = smul.addr %s547, 4
        %s549 = scalar_lea.vmem %s11, %s548
        %p550 = scmp.lt.s32.totalorder %s28, 3
        %s551 = scalar_select %p550, %s28, 3
        %s552 = smul.addr %s551, 16
        %s553 = smul.addr %s552, 4
        %s554 = scalar_lea.vmem %s12, %s553
        %p558 = scmp.eq.s32.totalorder %s28, 0
        // Predicated region
        $region81: #{hyper_encoder_forward.5} parent=71 // pred_check
          %p559 = pneg %p558
        $region82: #{hyper_encoder_forward.5} parent=71 // pred_check_branch
          %561 = sbr.rel (%p559) target = $region84
        $region83: #{hyper_encoder_forward.5} parent=71 // pred_region
          %v562 = vld [vmem:[%s2] sm:$0xff]
          %v563 = vld [vmem:[%s2 + $0x8] sm:$0xff]
          %v564 = vld [vmem:[%s2 + $0x10] sm:$0xff]
          %v565 = vld [vmem:[%s2 + $0x18] sm:$0xff]
          %v566 = vld [vmem:[%s2 + $0x20] sm:$0xff]
          %v567 = vld [vmem:[%s2 + $0x28] sm:$0xff]
          %v568 = vld [vmem:[%s2 + $0x30] sm:$0xff]
          %v569 = vld [vmem:[%s2 + $0x38] sm:$0xff]
          %v570 = vld [vmem:[%s2 + $0x40] sm:$0xff]
          %v571 = vld [vmem:[%s2 + $0x48] sm:$0xff]
          %v572 = vld [vmem:[%s2 + $0x50] sm:$0xff]
          %v573 = vld [vmem:[%s2 + $0x58] sm:$0xff]
          %v574 = vld [vmem:[%s2 + $0x60] sm:$0xff]
          %v575 = vld [vmem:[%s2 + $0x68] sm:$0xff]
          %v576 = vld [vmem:[%s2 + $0x70] sm:$0xff]
          %v577 = vld [vmem:[%s2 + $0x78] sm:$0xff]
          %578 = vst [vmem:[#allocation2] sm:$0xff] %v562
          %579 = vst [vmem:[#allocation2 + $0x8] sm:$0xff] %v563
          %580 = vst [vmem:[#allocation2 + $0x10] sm:$0xff] %v564
          %581 = vst [vmem:[#allocation2 + $0x18] sm:$0xff] %v565
          %582 = vst [vmem:[#allocation2 + $0x20] sm:$0xff] %v566
          %583 = vst [vmem:[#allocation2 + $0x28] sm:$0xff] %v567
          %584 = vst [vmem:[#allocation2 + $0x30] sm:$0xff] %v568
          %585 = vst [vmem:[#allocation2 + $0x38] sm:$0xff] %v569
          %586 = vst [vmem:[#allocation2 + $0x40] sm:$0xff] %v570
          %587 = vst [vmem:[#allocation2 + $0x48] sm:$0xff] %v571
          %588 = vst [vmem:[#allocation2 + $0x50] sm:$0xff] %v572
          %589 = vst [vmem:[#allocation2 + $0x58] sm:$0xff] %v573
          %590 = vst [vmem:[#allocation2 + $0x60] sm:$0xff] %v574
          %591 = vst [vmem:[#allocation2 + $0x68] sm:$0xff] %v575
          %592 = vst [vmem:[#allocation2 + $0x70] sm:$0xff] %v576
          %593 = vst [vmem:[#allocation2 + $0x78] sm:$0xff] %v577
          %v594 = vld [vmem:[%s3] sm:$0xff]
          %v595 = vld [vmem:[%s3 + $0x8] sm:$0xff]
          %v596 = vld [vmem:[%s3 + $0x10] sm:$0xff]
          %v597 = vld [vmem:[%s3 + $0x18] sm:$0xff]
          %v598 = vld [vmem:[%s3 + $0x20] sm:$0xff]
          %v599 = vld [vmem:[%s3 + $0x28] sm:$0xff]
          %v600 = vld [vmem:[%s3 + $0x30] sm:$0xff]
          %v601 = vld [vmem:[%s3 + $0x38] sm:$0xff]
          %v602 = vld [vmem:[%s3 + $0x40] sm:$0xff]
          %v603 = vld [vmem:[%s3 + $0x48] sm:$0xff]
          %v604 = vld [vmem:[%s3 + $0x50] sm:$0xff]
          %v605 = vld [vmem:[%s3 + $0x58] sm:$0xff]
          %v606 = vld [vmem:[%s3 + $0x60] sm:$0xff]
          %v607 = vld [vmem:[%s3 + $0x68] sm:$0xff]
          %v608 = vld [vmem:[%s3 + $0x70] sm:$0xff]
          %v609 = vld [vmem:[%s3 + $0x78] sm:$0xff]
          %610 = vst [vmem:[#allocation3] sm:$0xff] %v594
          %611 = vst [vmem:[#allocation3 + $0x8] sm:$0xff] %v595
          %612 = vst [vmem:[#allocation3 + $0x10] sm:$0xff] %v596
          %613 = vst [vmem:[#allocation3 + $0x18] sm:$0xff] %v597
          %614 = vst [vmem:[#allocation3 + $0x20] sm:$0xff] %v598
          %615 = vst [vmem:[#allocation3 + $0x28] sm:$0xff] %v599
          %616 = vst [vmem:[#allocation3 + $0x30] sm:$0xff] %v600
          %617 = vst [vmem:[#allocation3 + $0x38] sm:$0xff] %v601
          %618 = vst [vmem:[#allocation3 + $0x40] sm:$0xff] %v602
          %619 = vst [vmem:[#allocation3 + $0x48] sm:$0xff] %v603
          %620 = vst [vmem:[#allocation3 + $0x50] sm:$0xff] %v604
          %621 = vst [vmem:[#allocation3 + $0x58] sm:$0xff] %v605
          %622 = vst [vmem:[#allocation3 + $0x60] sm:$0xff] %v606
          %623 = vst [vmem:[#allocation3 + $0x68] sm:$0xff] %v607
          %624 = vst [vmem:[#allocation3 + $0x70] sm:$0xff] %v608
          %625 = vst [vmem:[#allocation3 + $0x78] sm:$0xff] %v609
        $region84: #{hyper_encoder_forward.5} parent=71 // pred_fallthru
          _
        %s626 = sld [smem:[#allocation4 + %s28]]
        %s627 = sld [smem:[#allocation6 + %s28]]
        %v628 = vld [vmem:[#allocation2] sm:$0xff]
        %v629 = vld [vmem:[#allocation2 + $0x8] sm:$0xff]
        %v630 = vld [vmem:[#allocation2 + $0x10] sm:$0xff]
        %v631 = vld [vmem:[#allocation2 + $0x18] sm:$0xff]
        %v632 = vld [vmem:[#allocation2 + $0x20] sm:$0xff]
        %v633 = vld [vmem:[#allocation2 + $0x28] sm:$0xff]
        %v634 = vld [vmem:[#allocation2 + $0x30] sm:$0xff]
        %v635 = vld [vmem:[#allocation2 + $0x38] sm:$0xff]
        %v636 = vld [vmem:[#allocation2 + $0x40] sm:$0xff]
        %v637 = vld [vmem:[#allocation2 + $0x48] sm:$0xff]
        %v638 = vld [vmem:[#allocation2 + $0x50] sm:$0xff]
        %v639 = vld [vmem:[#allocation2 + $0x58] sm:$0xff]
        %v640 = vld [vmem:[#allocation2 + $0x60] sm:$0xff]
        %v641 = vld [vmem:[#allocation2 + $0x68] sm:$0xff]
        %v642 = vld [vmem:[#allocation2 + $0x70] sm:$0xff]
        %v643 = vld [vmem:[#allocation2 + $0x78] sm:$0xff]
        %v644 = vld [vmem:[#allocation3] sm:$0xff]
        %v645 = vld [vmem:[#allocation3 + $0x8] sm:$0xff]
        %v646 = vld [vmem:[#allocation3 + $0x10] sm:$0xff]
        %v647 = vld [vmem:[#allocation3 + $0x18] sm:$0xff]
        %v648 = vld [vmem:[#allocation3 + $0x20] sm:$0xff]
        %v649 = vld [vmem:[#allocation3 + $0x28] sm:$0xff]
        %v650 = vld [vmem:[#allocation3 + $0x30] sm:$0xff]
        %v651 = vld [vmem:[#allocation3 + $0x38] sm:$0xff]
        %v652 = vld [vmem:[#allocation3 + $0x40] sm:$0xff]
        %v653 = vld [vmem:[#allocation3 + $0x48] sm:$0xff]
        %v654 = vld [vmem:[#allocation3 + $0x50] sm:$0xff]
        %v655 = vld [vmem:[#allocation3 + $0x58] sm:$0xff]
        %v656 = vld [vmem:[#allocation3 + $0x60] sm:$0xff]
        %v657 = vld [vmem:[#allocation3 + $0x68] sm:$0xff]
        %v658 = vld [vmem:[#allocation3 + $0x70] sm:$0xff]
        %v659 = vld [vmem:[#allocation3 + $0x78] sm:$0xff]
        %v660 = vpack.c.bf16 %v629, %v628
        %v661 = vpack.c.bf16 %v631, %v630
        %v662 = vpack.c.bf16 %v633, %v632
        %v663 = vpack.c.bf16 %v635, %v634
        %v664 = vpack.c.bf16 %v637, %v636
        %v665 = vpack.c.bf16 %v639, %v638
        %v666 = vpack.c.bf16 %v641, %v640
        %v667 = vpack.c.bf16 %v643, %v642
        %v668 = vpack.c.bf16 %v645, %v644
        %v669 = vpack.c.bf16 %v647, %v646
        %v670 = vpack.c.bf16 %v649, %v648
        %v671 = vpack.c.bf16 %v651, %v650
        %v672 = vpack.c.bf16 %v653, %v652
        %v673 = vpack.c.bf16 %v655, %v654
        %v674 = vpack.c.bf16 %v657, %v656
        %v675 = vpack.c.bf16 %v659, %v658
        %v676 = vld [vmem:[%s544] sm:$0xf]
        %v677 = vunpack.c.l.bf16 %v676
        %678 = vmatprep.subr.bf16.mxu0 0
        %679 = vmatpush1.bf16.xpose.msra.mxu0 %v667
        %680 = vmatprep.subr.bf16.mxu0 0
        %681 = vmatpush1.bf16.xpose.msra.mxu0 %v666
        %682 = vmatprep.subr.bf16.mxu0 0
        %683 = vmatpush1.bf16.xpose.msra.mxu0 %v665
        %684 = vmatprep.subr.bf16.mxu0 0
        %685 = vmatpush1.bf16.xpose.msra.mxu0 %v664
        %686 = vmatprep.subr.bf16.mxu0 0
        %687 = vmatpush1.bf16.xpose.msra.mxu0 %v663
        %688 = vmatprep.subr.bf16.mxu0 0
        %689 = vmatpush1.bf16.xpose.msra.mxu0 %v662
        %690 = vmatprep.subr.bf16.mxu0 0
        %691 = vmatpush1.bf16.xpose.msra.mxu0 %v661
        %692 = vmatprep.subr.bf16.mxu0 0
        %693 = vmatpush1.bf16.xpose.msra.mxu0 %v660
        %694 = vmatprep.subr.bf16.mxu0 0
        %695 = vmatpush2.bf16.xpose.msra.mxu0 0
        %696 = vmatprep.subr.bf16.mxu0 0
        %697 = vmatpush2.bf16.xpose.msra.mxu0 0
        %698 = vmatprep.subr.bf16.mxu0 0
        %699 = vmatpush2.bf16.xpose.msra.mxu0 0
        %700 = vmatprep.subr.bf16.mxu0 0
        %701 = vmatpush2.bf16.xpose.msra.mxu0 0
        %702 = vmatprep.subr.bf16.mxu0 0
        %703 = vmatpush2.bf16.xpose.msra.mxu0 0
        %704 = vmatprep.subr.bf16.mxu0 0
        %705 = vmatpush2.bf16.xpose.msra.mxu0 0
        %706 = vmatprep.subr.bf16.mxu0 0
        %707 = vmatpush2.bf16.xpose.msra.mxu0 0
        %708 = vmatprep.subr.bf16.mxu0 0
        %709 = vmatpush2.bf16.xpose.msra.mxu0 0
        %710 = vmatprep.mubr.bf16.mxu0 0
        %711 = vmatmul.mubr.bf16.gmra.mxu0 %v676
        %v712 = vpop.f32.mrf.mxu0
        %v713 = vadd.f32 0.0, %v712
        %v714 = vpop.f32.mrf.mxu0
        %v715 = vpop.f32.mrf.mxu0
        %v716 = vpop.f32.mrf.mxu0
        %717 = vdwg.mxu0
        %718 = vmatprep.subr.bf16.mxu0 0
        %719 = vmatpush1.bf16.xpose.msra.mxu0 %v675
        %720 = vmatprep.subr.bf16.mxu0 0
        %721 = vmatpush1.bf16.xpose.msra.mxu0 %v674
        %722 = vmatprep.subr.bf16.mxu0 0
        %723 = vmatpush1.bf16.xpose.msra.mxu0 %v673
        %724 = vmatprep.subr.bf16.mxu0 0
        %725 = vmatpush1.bf16.xpose.msra.mxu0 %v672
        %726 = vmatprep.subr.bf16.mxu0 0
        %727 = vmatpush1.bf16.xpose.msra.mxu0 %v671
        %728 = vmatprep.subr.bf16.mxu0 0
        %729 = vmatpush1.bf16.xpose.msra.mxu0 %v670
        %730 = vmatprep.subr.bf16.mxu0 0
        %731 = vmatpush1.bf16.xpose.msra.mxu0 %v669
        %732 = vmatprep.subr.bf16.mxu0 0
        %733 = vmatpush1.bf16.xpose.msra.mxu0 %v668
        %734 = vmatprep.subr.bf16.mxu0 0
        %735 = vmatpush2.bf16.xpose.msra.mxu0 0
        %736 = vmatprep.subr.bf16.mxu0 0
        %737 = vmatpush2.bf16.xpose.msra.mxu0 0
        %738 = vmatprep.subr.bf16.mxu0 0
        %739 = vmatpush2.bf16.xpose.msra.mxu0 0
        %740 = vmatprep.subr.bf16.mxu0 0
        %741 = vmatpush2.bf16.xpose.msra.mxu0 0
        %742 = vmatprep.subr.bf16.mxu0 0
        %743 = vmatpush2.bf16.xpose.msra.mxu0 0
        %744 = vmatprep.subr.bf16.mxu0 0
        %745 = vmatpush2.bf16.xpose.msra.mxu0 0
        %746 = vmatprep.subr.bf16.mxu0 0
        %747 = vmatpush2.bf16.xpose.msra.mxu0 0
        %748 = vmatprep.subr.bf16.mxu0 0
        %749 = vmatpush2.bf16.xpose.msra.mxu0 0
        %750 = vmatprep.mubr.bf16.mxu0 0
        %751 = vmatmul.mubr.bf16.gmra.mxu0 %v676
        %v752 = vpop.f32.mrf.mxu0
        %v753 = vadd.f32 0.0, %v752
        %v754 = vpop.f32.mrf.mxu0
        %v755 = vpop.f32.mrf.mxu0
        %v756 = vpop.f32.mrf.mxu0
        %757 = vdwg.mxu0
        %v758 = vlaneseq
        %v759 = vshrl.u32 %v758, 7
        %v760 = vsub.s32 1, %v759
        %v761 = vrot.slane %v677, %v760
        %v762 = vmul.f32 %v644, %v761
        %v763 = vmul.f32 %v645, %v761
        %v764 = vmul.f32 %v646, %v761
        %v765 = vmul.f32 %v647, %v761
        %v766 = vmul.f32 %v648, %v761
        %v767 = vmul.f32 %v649, %v761
        %v768 = vmul.f32 %v650, %v761
        %v769 = vmul.f32 %v651, %v761
        %v770 = vmul.f32 %v652, %v761
        %v771 = vmul.f32 %v653, %v761
        %v772 = vmul.f32 %v654, %v761
        %v773 = vmul.f32 %v655, %v761
        %v774 = vmul.f32 %v656, %v761
        %v775 = vmul.f32 %v657, %v761
        %v776 = vmul.f32 %v658, %v761
        %v777 = vmul.f32 %v659, %v761
        %778 = vadd.xlane.f32.xlu0 %v762
        %v779 = vpop.xlane.xlu0 %778
        %780 = vadd.xlane.f32.xlu0 %v763
        %v781 = vpop.xlane.xlu0 %780
        %782 = vadd.xlane.f32.xlu0 %v764
        %v783 = vpop.xlane.xlu0 %782
        %784 = vadd.xlane.f32.xlu0 %v765
        %v785 = vpop.xlane.xlu0 %784
        %786 = vadd.xlane.f32.xlu0 %v766
        %v787 = vpop.xlane.xlu0 %786
        %788 = vadd.xlane.f32.xlu0 %v767
        %v789 = vpop.xlane.xlu0 %788
        %790 = vadd.xlane.f32.xlu0 %v768
        %v791 = vpop.xlane.xlu0 %790
        %792 = vadd.xlane.f32.xlu0 %v769
        %v793 = vpop.xlane.xlu0 %792
        %794 = vadd.xlane.f32.xlu0 %v770
        %v795 = vpop.xlane.xlu0 %794
        %796 = vadd.xlane.f32.xlu0 %v771
        %v797 = vpop.xlane.xlu0 %796
        %798 = vadd.xlane.f32.xlu0 %v772
        %v799 = vpop.xlane.xlu0 %798
        %800 = vadd.xlane.f32.xlu0 %v773
        %v801 = vpop.xlane.xlu0 %800
        %802 = vadd.xlane.f32.xlu0 %v774
        %v803 = vpop.xlane.xlu0 %802
        %804 = vadd.xlane.f32.xlu0 %v775
        %v805 = vpop.xlane.xlu0 %804
        %806 = vadd.xlane.f32.xlu0 %v776
        %v807 = vpop.xlane.xlu0 %806
        %808 = vadd.xlane.f32.xlu0 %v777
        %v809 = vpop.xlane.xlu0 %808
        %v810 = vmul.f32 %v628, %v761
        %v811 = vmul.f32 %v629, %v761
        %v812 = vmul.f32 %v630, %v761
        %v813 = vmul.f32 %v631, %v761
        %v814 = vmul.f32 %v632, %v761
        %v815 = vmul.f32 %v633, %v761
        %v816 = vmul.f32 %v634, %v761
        %v817 = vmul.f32 %v635, %v761
        %v818 = vmul.f32 %v636, %v761
        %v819 = vmul.f32 %v637, %v761
        %v820 = vmul.f32 %v638, %v761
        %v821 = vmul.f32 %v639, %v761
        %v822 = vmul.f32 %v640, %v761
        %v823 = vmul.f32 %v641, %v761
        %v824 = vmul.f32 %v642, %v761
        %v825 = vmul.f32 %v643, %v761
        %826 = vadd.xlane.f32.xlu0 %v810
        %v827 = vpop.xlane.xlu0 %826
        %828 = vadd.xlane.f32.xlu0 %v811
        %v829 = vpop.xlane.xlu0 %828
        %830 = vadd.xlane.f32.xlu0 %v812
        %v831 = vpop.xlane.xlu0 %830
        %832 = vadd.xlane.f32.xlu0 %v813
        %v833 = vpop.xlane.xlu0 %832
        %834 = vadd.xlane.f32.xlu0 %v814
        %v835 = vpop.xlane.xlu0 %834
        %836 = vadd.xlane.f32.xlu0 %v815
        %v837 = vpop.xlane.xlu0 %836
        %838 = vadd.xlane.f32.xlu0 %v816
        %v839 = vpop.xlane.xlu0 %838
        %840 = vadd.xlane.f32.xlu0 %v817
        %v841 = vpop.xlane.xlu0 %840
        %842 = vadd.xlane.f32.xlu0 %v818
        %v843 = vpop.xlane.xlu0 %842
        %844 = vadd.xlane.f32.xlu0 %v819
        %v845 = vpop.xlane.xlu0 %844
        %846 = vadd.xlane.f32.xlu0 %v820
        %v847 = vpop.xlane.xlu0 %846
        %848 = vadd.xlane.f32.xlu0 %v821
        %v849 = vpop.xlane.xlu0 %848
        %850 = vadd.xlane.f32.xlu0 %v822
        %v851 = vpop.xlane.xlu0 %850
        %852 = vadd.xlane.f32.xlu0 %v823
        %v853 = vpop.xlane.xlu0 %852
        %854 = vadd.xlane.f32.xlu0 %v824
        %v855 = vpop.xlane.xlu0 %854
        %856 = vadd.xlane.f32.xlu0 %v825
        %v857 = vpop.xlane.xlu0 %856
        %v858 = vstv %s627
        %v859 = vadd.f32 %v779, %v858
        %v860 = vadd.f32 %v781, %v858
        %v861 = vadd.f32 %v783, %v858
        %v862 = vadd.f32 %v785, %v858
        %v863 = vadd.f32 %v787, %v858
        %v864 = vadd.f32 %v789, %v858
        %v865 = vadd.f32 %v791, %v858
        %v866 = vadd.f32 %v793, %v858
        %v867 = vadd.f32 %v795, %v858
        %v868 = vadd.f32 %v797, %v858
        %v869 = vadd.f32 %v799, %v858
        %v870 = vadd.f32 %v801, %v858
        %v871 = vadd.f32 %v803, %v858
        %v872 = vadd.f32 %v805, %v858
        %v873 = vadd.f32 %v807, %v858
        %v874 = vadd.f32 %v809, %v858
        %v875 = vlaneseq
        %v876 = vshrl.u32 %v875, 7
        %v877 = vsub.s32 0, %v876
        %v878 = vrot.slane %v713, %v877
        %v879 = vadd.f32 %v859, %v878
        %v880 = vadd.f32 %v860, %v878
        %v881 = vadd.f32 %v861, %v878
        %v882 = vadd.f32 %v862, %v878
        %v883 = vadd.f32 %v863, %v878
        %v884 = vadd.f32 %v864, %v878
        %v885 = vadd.f32 %v865, %v878
        %v886 = vadd.f32 %v866, %v878
        %v887 = vadd.f32 %v867, %v878
        %v888 = vadd.f32 %v868, %v878
        %v889 = vadd.f32 %v869, %v878
        %v890 = vadd.f32 %v870, %v878
        %v891 = vadd.f32 %v871, %v878
        %v892 = vadd.f32 %v872, %v878
        %v893 = vadd.f32 %v873, %v878
        %v894 = vadd.f32 %v874, %v878
        %v895 = vld [vmem:[%s535] sm:$0xf]
        %v896 = vld [vmem:[%s535 + $0x4] sm:$0xf]
        %v897 = vld [vmem:[%s535 + $0x8] sm:$0xf]
        %v898 = vld [vmem:[%s535 + $0xc] sm:$0xf]
        %v899 = vld [vmem:[%s535 + $0x10] sm:$0xf]
        %v900 = vld [vmem:[%s535 + $0x14] sm:$0xf]
        %v901 = vld [vmem:[%s535 + $0x18] sm:$0xf]
        %v902 = vld [vmem:[%s535 + $0x1c] sm:$0xf]
        %v903 = vld [vmem:[%s535 + $0x20] sm:$0xf]
        %v904 = vld [vmem:[%s535 + $0x24] sm:$0xf]
        %v905 = vld [vmem:[%s535 + $0x28] sm:$0xf]
        %v906 = vld [vmem:[%s535 + $0x2c] sm:$0xf]
        %v907 = vld [vmem:[%s535 + $0x30] sm:$0xf]
        %v908 = vld [vmem:[%s535 + $0x34] sm:$0xf]
        %v909 = vld [vmem:[%s535 + $0x38] sm:$0xf]
        %v910 = vld [vmem:[%s535 + $0x3c] sm:$0xf]
        %v911 = vunpack.c.l.bf16 %v895
        %v912 = vunpack.c.l.bf16 %v896
        %v913 = vunpack.c.l.bf16 %v897
        %v914 = vunpack.c.l.bf16 %v898
        %v915 = vunpack.c.l.bf16 %v899
        %v916 = vunpack.c.l.bf16 %v900
        %v917 = vunpack.c.l.bf16 %v901
        %v918 = vunpack.c.l.bf16 %v902
        %v919 = vunpack.c.l.bf16 %v903
        %v920 = vunpack.c.l.bf16 %v904
        %v921 = vunpack.c.l.bf16 %v905
        %v922 = vunpack.c.l.bf16 %v906
        %v923 = vunpack.c.l.bf16 %v907
        %v924 = vunpack.c.l.bf16 %v908
        %v925 = vunpack.c.l.bf16 %v909
        %v926 = vunpack.c.l.bf16 %v910
        %v927 = vadd.f32 %v879, %v911
        %v928 = vadd.f32 %v880, %v912
        %v929 = vadd.f32 %v881, %v913
        %v930 = vadd.f32 %v882, %v914
        %v931 = vadd.f32 %v883, %v915
        %v932 = vadd.f32 %v884, %v916
        %v933 = vadd.f32 %v885, %v917
        %v934 = vadd.f32 %v886, %v918
        %v935 = vadd.f32 %v887, %v919
        %v936 = vadd.f32 %v888, %v920
        %v937 = vadd.f32 %v889, %v921
        %v938 = vadd.f32 %v890, %v922
        %v939 = vadd.f32 %v891, %v923
        %v940 = vadd.f32 %v892, %v924
        %v941 = vadd.f32 %v893, %v925
        %v942 = vadd.f32 %v894, %v926
        %v943 = vld [vmem:[%s5] sm:$0xf]
        %v944 = vld [vmem:[%s5 + $0x4] sm:$0xf]
        %v945 = vld [vmem:[%s5 + $0x8] sm:$0xf]
        %v946 = vld [vmem:[%s5 + $0xc] sm:$0xf]
        %v947 = vld [vmem:[%s5 + $0x10] sm:$0xf]
        %v948 = vld [vmem:[%s5 + $0x14] sm:$0xf]
        %v949 = vld [vmem:[%s5 + $0x18] sm:$0xf]
        %v950 = vld [vmem:[%s5 + $0x1c] sm:$0xf]
        %v951 = vld [vmem:[%s5 + $0x20] sm:$0xf]
        %v952 = vld [vmem:[%s5 + $0x24] sm:$0xf]
        %v953 = vld [vmem:[%s5 + $0x28] sm:$0xf]
        %v954 = vld [vmem:[%s5 + $0x2c] sm:$0xf]
        %v955 = vld [vmem:[%s5 + $0x30] sm:$0xf]
        %v956 = vld [vmem:[%s5 + $0x34] sm:$0xf]
        %v957 = vld [vmem:[%s5 + $0x38] sm:$0xf]
        %v958 = vld [vmem:[%s5 + $0x3c] sm:$0xf]
        %vm959 = vcmp.gt.bf16.partialorder %v943, 0
        %vm960 = vcmp.gt.bf16.partialorder %v944, 0
        %vm961 = vcmp.gt.bf16.partialorder %v945, 0
        %vm962 = vcmp.gt.bf16.partialorder %v946, 0
        %vm963 = vcmp.gt.bf16.partialorder %v947, 0
        %vm964 = vcmp.gt.bf16.partialorder %v948, 0
        %vm965 = vcmp.gt.bf16.partialorder %v949, 0
        %vm966 = vcmp.gt.bf16.partialorder %v950, 0
        %vm967 = vcmp.gt.bf16.partialorder %v951, 0
        %vm968 = vcmp.gt.bf16.partialorder %v952, 0
        %vm969 = vcmp.gt.bf16.partialorder %v953, 0
        %vm970 = vcmp.gt.bf16.partialorder %v954, 0
        %vm971 = vcmp.gt.bf16.partialorder %v955, 0
        %vm972 = vcmp.gt.bf16.partialorder %v956, 0
        %vm973 = vcmp.gt.bf16.partialorder %v957, 0
        %vm974 = vcmp.gt.bf16.partialorder %v958, 0
        %v975 = vsel %vm959, 65537, 0
        %v976 = vsel %vm960, 65537, 0
        %v977 = vsel %vm961, 65537, 0
        %v978 = vsel %vm962, 65537, 0
        %v979 = vsel %vm963, 65537, 0
        %v980 = vsel %vm964, 65537, 0
        %v981 = vsel %vm965, 65537, 0
        %v982 = vsel %vm966, 65537, 0
        %v983 = vsel %vm967, 65537, 0
        %v984 = vsel %vm968, 65537, 0
        %v985 = vsel %vm969, 65537, 0
        %v986 = vsel %vm970, 65537, 0
        %v987 = vsel %vm971, 65537, 0
        %v988 = vsel %vm972, 65537, 0
        %v989 = vsel %vm973, 65537, 0
        %v990 = vsel %vm974, 65537, 0
        %v991 = vunpack.c.l.b16 %v975
        %v992 = vunpack.c.l.b16 %v976
        %v993 = vunpack.c.l.b16 %v977
        %v994 = vunpack.c.l.b16 %v978
        %v995 = vunpack.c.l.b16 %v979
        %v996 = vunpack.c.l.b16 %v980
        %v997 = vunpack.c.l.b16 %v981
        %v998 = vunpack.c.l.b16 %v982
        %v999 = vunpack.c.l.b16 %v983
        %v1000 = vunpack.c.l.b16 %v984
        %v1001 = vunpack.c.l.b16 %v985
        %v1002 = vunpack.c.l.b16 %v986
        %v1003 = vunpack.c.l.b16 %v987
        %v1004 = vunpack.c.l.b16 %v988
        %v1005 = vunpack.c.l.b16 %v989
        %v1006 = vunpack.c.l.b16 %v990
        %vm1007 = vcmp.ne.s32.totalorder %v991, 0
        %vm1008 = vcmp.ne.s32.totalorder %v992, 0
        %vm1009 = vcmp.ne.s32.totalorder %v993, 0
        %vm1010 = vcmp.ne.s32.totalorder %v994, 0
        %vm1011 = vcmp.ne.s32.totalorder %v995, 0
        %vm1012 = vcmp.ne.s32.totalorder %v996, 0
        %vm1013 = vcmp.ne.s32.totalorder %v997, 0
        %vm1014 = vcmp.ne.s32.totalorder %v998, 0
        %vm1015 = vcmp.ne.s32.totalorder %v999, 0
        %vm1016 = vcmp.ne.s32.totalorder %v1000, 0
        %vm1017 = vcmp.ne.s32.totalorder %v1001, 0
        %vm1018 = vcmp.ne.s32.totalorder %v1002, 0
        %vm1019 = vcmp.ne.s32.totalorder %v1003, 0
        %vm1020 = vcmp.ne.s32.totalorder %v1004, 0
        %vm1021 = vcmp.ne.s32.totalorder %v1005, 0
        %vm1022 = vcmp.ne.s32.totalorder %v1006, 0
        %v1023 = vsel %vm1007, %v927, -1e+30
        %v1024 = vsel %vm1008, %v928, -1e+30
        %v1025 = vsel %vm1009, %v929, -1e+30
        %v1026 = vsel %vm1010, %v930, -1e+30
        %v1027 = vsel %vm1011, %v931, -1e+30
        %v1028 = vsel %vm1012, %v932, -1e+30
        %v1029 = vsel %vm1013, %v933, -1e+30
        %v1030 = vsel %vm1014, %v934, -1e+30
        %v1031 = vsel %vm1015, %v935, -1e+30
        %v1032 = vsel %vm1016, %v936, -1e+30
        %v1033 = vsel %vm1017, %v937, -1e+30
        %v1034 = vsel %vm1018, %v938, -1e+30
        %v1035 = vsel %vm1019, %v939, -1e+30
        %v1036 = vsel %vm1020, %v940, -1e+30
        %v1037 = vsel %vm1021, %v941, -1e+30
        %v1038 = vsel %vm1022, %v942, -1e+30
        %1039 = vmax.xlane.f32.xlu0 %v1023
        %v1040 = vpop.xlane.xlu0 %1039
        %1041 = vmax.xlane.f32.xlu0 %v1024
        %v1042 = vpop.xlane.xlu0 %1041
        %1043 = vmax.xlane.f32.xlu0 %v1025
        %v1044 = vpop.xlane.xlu0 %1043
        %1045 = vmax.xlane.f32.xlu0 %v1026
        %v1046 = vpop.xlane.xlu0 %1045
        %1047 = vmax.xlane.f32.xlu0 %v1027
        %v1048 = vpop.xlane.xlu0 %1047
        %1049 = vmax.xlane.f32.xlu0 %v1028
        %v1050 = vpop.xlane.xlu0 %1049
        %1051 = vmax.xlane.f32.xlu0 %v1029
        %v1052 = vpop.xlane.xlu0 %1051
        %1053 = vmax.xlane.f32.xlu0 %v1030
        %v1054 = vpop.xlane.xlu0 %1053
        %1055 = vmax.xlane.f32.xlu0 %v1031
        %v1056 = vpop.xlane.xlu0 %1055
        %1057 = vmax.xlane.f32.xlu0 %v1032
        %v1058 = vpop.xlane.xlu0 %1057
        %1059 = vmax.xlane.f32.xlu0 %v1033
        %v1060 = vpop.xlane.xlu0 %1059
        %1061 = vmax.xlane.f32.xlu0 %v1034
        %v1062 = vpop.xlane.xlu0 %1061
        %1063 = vmax.xlane.f32.xlu0 %v1035
        %v1064 = vpop.xlane.xlu0 %1063
        %1065 = vmax.xlane.f32.xlu0 %v1036
        %v1066 = vpop.xlane.xlu0 %1065
        %1067 = vmax.xlane.f32.xlu0 %v1037
        %v1068 = vpop.xlane.xlu0 %1067
        %1069 = vmax.xlane.f32.xlu0 %v1038
        %v1070 = vpop.xlane.xlu0 %1069
        %v1071 = vsub.f32 %v1023, %v1040
        %v1072 = vsub.f32 %v1024, %v1042
        %v1073 = vsub.f32 %v1025, %v1044
        %v1074 = vsub.f32 %v1026, %v1046
        %v1075 = vsub.f32 %v1027, %v1048
        %v1076 = vsub.f32 %v1028, %v1050
        %v1077 = vsub.f32 %v1029, %v1052
        %v1078 = vsub.f32 %v1030, %v1054
        %v1079 = vsub.f32 %v1031, %v1056
        %v1080 = vsub.f32 %v1032, %v1058
        %v1081 = vsub.f32 %v1033, %v1060
        %v1082 = vsub.f32 %v1034, %v1062
        %v1083 = vsub.f32 %v1035, %v1064
        %v1084 = vsub.f32 %v1036, %v1066
        %v1085 = vsub.f32 %v1037, %v1068
        %v1086 = vsub.f32 %v1038, %v1070
        %v1087 = vmul.f32 %v1071, 1.442695
        %v1088 = vpow.pop %v1087
        %v1089 = vmul.f32 %v1072, 1.442695
        %v1090 = vpow.pop %v1089
        %v1091 = vmul.f32 %v1073, 1.442695
        %v1092 = vpow.pop %v1091
        %v1093 = vmul.f32 %v1074, 1.442695
        %v1094 = vpow.pop %v1093
        %v1095 = vmul.f32 %v1075, 1.442695
        %v1096 = vpow.pop %v1095
        %v1097 = vmul.f32 %v1076, 1.442695
        %v1098 = vpow.pop %v1097
        %v1099 = vmul.f32 %v1077, 1.442695
        %v1100 = vpow.pop %v1099
        %v1101 = vmul.f32 %v1078, 1.442695
        %v1102 = vpow.pop %v1101
        %v1103 = vmul.f32 %v1079, 1.442695
        %v1104 = vpow.pop %v1103
        %v1105 = vmul.f32 %v1080, 1.442695
        %v1106 = vpow.pop %v1105
        %v1107 = vmul.f32 %v1081, 1.442695
        %v1108 = vpow.pop %v1107
        %v1109 = vmul.f32 %v1082, 1.442695
        %v1110 = vpow.pop %v1109
        %v1111 = vmul.f32 %v1083, 1.442695
        %v1112 = vpow.pop %v1111
        %v1113 = vmul.f32 %v1084, 1.442695
        %v1114 = vpow.pop %v1113
        %v1115 = vmul.f32 %v1085, 1.442695
        %v1116 = vpow.pop %v1115
        %v1117 = vmul.f32 %v1086, 1.442695
        %v1118 = vpow.pop %v1117
        %1119 = vadd.xlane.f32.xlu0 %v1088
        %v1120 = vpop.xlane.xlu0 %1119
        %1121 = vadd.xlane.f32.xlu0 %v1090
        %v1122 = vpop.xlane.xlu0 %1121
        %1123 = vadd.xlane.f32.xlu0 %v1092
        %v1124 = vpop.xlane.xlu0 %1123
        %1125 = vadd.xlane.f32.xlu0 %v1094
        %v1126 = vpop.xlane.xlu0 %1125
        %1127 = vadd.xlane.f32.xlu0 %v1096
        %v1128 = vpop.xlane.xlu0 %1127
        %1129 = vadd.xlane.f32.xlu0 %v1098
        %v1130 = vpop.xlane.xlu0 %1129
        %1131 = vadd.xlane.f32.xlu0 %v1100
        %v1132 = vpop.xlane.xlu0 %1131
        %1133 = vadd.xlane.f32.xlu0 %v1102
        %v1134 = vpop.xlane.xlu0 %1133
        %1135 = vadd.xlane.f32.xlu0 %v1104
        %v1136 = vpop.xlane.xlu0 %1135
        %1137 = vadd.xlane.f32.xlu0 %v1106
        %v1138 = vpop.xlane.xlu0 %1137
        %1139 = vadd.xlane.f32.xlu0 %v1108
        %v1140 = vpop.xlane.xlu0 %1139
        %1141 = vadd.xlane.f32.xlu0 %v1110
        %v1142 = vpop.xlane.xlu0 %1141
        %1143 = vadd.xlane.f32.xlu0 %v1112
        %v1144 = vpop.xlane.xlu0 %1143
        %1145 = vadd.xlane.f32.xlu0 %v1114
        %v1146 = vpop.xlane.xlu0 %1145
        %1147 = vadd.xlane.f32.xlu0 %v1116
        %v1148 = vpop.xlane.xlu0 %1147
        %1149 = vadd.xlane.f32.xlu0 %v1118
        %v1150 = vpop.xlane.xlu0 %1149
        %v1151 = vld [vmem:[%s7] sm:$0xff]
        %v1152 = vld [vmem:[%s7 + $0x8] sm:$0xff]
        %v1153 = vld [vmem:[%s7 + $0x10] sm:$0xff]
        %v1154 = vld [vmem:[%s7 + $0x18] sm:$0xff]
        %v1155 = vld [vmem:[%s7 + $0x20] sm:$0xff]
        %v1156 = vld [vmem:[%s7 + $0x28] sm:$0xff]
        %v1157 = vld [vmem:[%s7 + $0x30] sm:$0xff]
        %v1158 = vld [vmem:[%s7 + $0x38] sm:$0xff]
        %v1159 = vld [vmem:[%s7 + $0x40] sm:$0xff]
        %v1160 = vld [vmem:[%s7 + $0x48] sm:$0xff]
        %v1161 = vld [vmem:[%s7 + $0x50] sm:$0xff]
        %v1162 = vld [vmem:[%s7 + $0x58] sm:$0xff]
        %v1163 = vld [vmem:[%s7 + $0x60] sm:$0xff]
        %v1164 = vld [vmem:[%s7 + $0x68] sm:$0xff]
        %v1165 = vld [vmem:[%s7 + $0x70] sm:$0xff]
        %v1166 = vld [vmem:[%s7 + $0x78] sm:$0xff]
        %v1167 = vrcp.pop %v1120
        %v1168 = vrcp.pop %v1122
        %v1169 = vrcp.pop %v1124
        %v1170 = vrcp.pop %v1126
        %v1171 = vrcp.pop %v1128
        %v1172 = vrcp.pop %v1130
        %v1173 = vrcp.pop %v1132
        %v1174 = vrcp.pop %v1134
        %v1175 = vrcp.pop %v1136
        %v1176 = vrcp.pop %v1138
        %v1177 = vrcp.pop %v1140
        %v1178 = vrcp.pop %v1142
        %v1179 = vrcp.pop %v1144
        %v1180 = vrcp.pop %v1146
        %v1181 = vrcp.pop %v1148
        %v1182 = vrcp.pop %v1150
        %v1183 = vmul.f32 %v1151, %v1167
        %v1184 = vmul.f32 %v1152, %v1168
        %v1185 = vmul.f32 %v1153, %v1169
        %v1186 = vmul.f32 %v1154, %v1170
        %v1187 = vmul.f32 %v1155, %v1171
        %v1188 = vmul.f32 %v1156, %v1172
        %v1189 = vmul.f32 %v1157, %v1173
        %v1190 = vmul.f32 %v1158, %v1174
        %v1191 = vmul.f32 %v1159, %v1175
        %v1192 = vmul.f32 %v1160, %v1176
        %v1193 = vmul.f32 %v1161, %v1177
        %v1194 = vmul.f32 %v1162, %v1178
        %v1195 = vmul.f32 %v1163, %v1179
        %v1196 = vmul.f32 %v1164, %v1180
        %v1197 = vmul.f32 %v1165, %v1181
        %v1198 = vmul.f32 %v1166, %v1182
        %1200 = vset.pattern.permute.xlu0 0
        %1201 = vperm.xlu0 %1200, %v1183
        %v1202 = vpop.permute.xlu0 %1201
        %1205 = vset.pattern.permute.xlu0 0
        %1206 = vperm.xlu0 %1205, %v1184
        %v1207 = vpop.permute.xlu0 %1206
        %1210 = vset.pattern.permute.xlu0 0
        %1211 = vperm.xlu0 %1210, %v1185
        %v1212 = vpop.permute.xlu0 %1211
        %1215 = vset.pattern.permute.xlu0 0
        %1216 = vperm.xlu0 %1215, %v1186
        %v1217 = vpop.permute.xlu0 %1216
        %1220 = vset.pattern.permute.xlu0 0
        %1221 = vperm.xlu0 %1220, %v1187
        %v1222 = vpop.permute.xlu0 %1221
        %1225 = vset.pattern.permute.xlu0 0
        %1226 = vperm.xlu0 %1225, %v1188
        %v1227 = vpop.permute.xlu0 %1226
        %1230 = vset.pattern.permute.xlu0 0
        %1231 = vperm.xlu0 %1230, %v1189
        %v1232 = vpop.permute.xlu0 %1231
        %1235 = vset.pattern.permute.xlu0 0
        %1236 = vperm.xlu0 %1235, %v1190
        %v1237 = vpop.permute.xlu0 %1236
        %1240 = vset.pattern.permute.xlu0 0
        %1241 = vperm.xlu0 %1240, %v1191
        %v1242 = vpop.permute.xlu0 %1241
        %1245 = vset.pattern.permute.xlu0 0
        %1246 = vperm.xlu0 %1245, %v1192
        %v1247 = vpop.permute.xlu0 %1246
        %1250 = vset.pattern.permute.xlu0 0
        %1251 = vperm.xlu0 %1250, %v1193
        %v1252 = vpop.permute.xlu0 %1251
        %1255 = vset.pattern.permute.xlu0 0
        %1256 = vperm.xlu0 %1255, %v1194
        %v1257 = vpop.permute.xlu0 %1256
        %1260 = vset.pattern.permute.xlu0 0
        %1261 = vperm.xlu0 %1260, %v1195
        %v1262 = vpop.permute.xlu0 %1261
        %1265 = vset.pattern.permute.xlu0 0
        %1266 = vperm.xlu0 %1265, %v1196
        %v1267 = vpop.permute.xlu0 %1266
        %1270 = vset.pattern.permute.xlu0 0
        %1271 = vperm.xlu0 %1270, %v1197
        %v1272 = vpop.permute.xlu0 %1271
        %1275 = vset.pattern.permute.xlu0 0
        %1276 = vperm.xlu0 %1275, %v1198
        %v1277 = vpop.permute.xlu0 %1276
        %v1279 = vmul.f32 %v1088, %v1202
        %v1280 = vmul.f32 %v1090, %v1207
        %v1281 = vmul.f32 %v1092, %v1212
        %v1282 = vmul.f32 %v1094, %v1217
        %v1283 = vmul.f32 %v1096, %v1222
        %v1284 = vmul.f32 %v1098, %v1227
        %v1285 = vmul.f32 %v1100, %v1232
        %v1286 = vmul.f32 %v1102, %v1237
        %v1287 = vmul.f32 %v1104, %v1242
        %v1288 = vmul.f32 %v1106, %v1247
        %v1289 = vmul.f32 %v1108, %v1252
        %v1290 = vmul.f32 %v1110, %v1257
        %v1291 = vmul.f32 %v1112, %v1262
        %v1292 = vmul.f32 %v1114, %v1267
        %v1293 = vmul.f32 %v1116, %v1272
        %v1294 = vmul.f32 %v1118, %v1277
        %v1295 = vpack.c.bf16 %v1280, %v1279
        %v1296 = vpack.c.bf16 %v1282, %v1281
        %v1297 = vpack.c.bf16 %v1284, %v1283
        %v1298 = vpack.c.bf16 %v1286, %v1285
        %v1299 = vpack.c.bf16 %v1288, %v1287
        %v1300 = vpack.c.bf16 %v1290, %v1289
        %v1301 = vpack.c.bf16 %v1292, %v1291
        %v1302 = vpack.c.bf16 %v1294, %v1293
        %v1303 = vadd.f32 %v827, %v858
        %v1304 = vadd.f32 %v829, %v858
        %v1305 = vadd.f32 %v831, %v858
        %v1306 = vadd.f32 %v833, %v858
        %v1307 = vadd.f32 %v835, %v858
        %v1308 = vadd.f32 %v837, %v858
        %v1309 = vadd.f32 %v839, %v858
        %v1310 = vadd.f32 %v841, %v858
        %v1311 = vadd.f32 %v843, %v858
        %v1312 = vadd.f32 %v845, %v858
        %v1313 = vadd.f32 %v847, %v858
        %v1314 = vadd.f32 %v849, %v858
        %v1315 = vadd.f32 %v851, %v858
        %v1316 = vadd.f32 %v853, %v858
        %v1317 = vadd.f32 %v855, %v858
        %v1318 = vadd.f32 %v857, %v858
        %v1319 = vlaneseq
        %v1320 = vshrl.u32 %v1319, 7
        %v1321 = vsub.s32 0, %v1320
        %v1322 = vrot.slane %v753, %v1321
        %v1323 = vadd.f32 %v1303, %v1322
        %v1324 = vadd.f32 %v1304, %v1322
        %v1325 = vadd.f32 %v1305, %v1322
        %v1326 = vadd.f32 %v1306, %v1322
        %v1327 = vadd.f32 %v1307, %v1322
        %v1328 = vadd.f32 %v1308, %v1322
        %v1329 = vadd.f32 %v1309, %v1322
        %v1330 = vadd.f32 %v1310, %v1322
        %v1331 = vadd.f32 %v1311, %v1322
        %v1332 = vadd.f32 %v1312, %v1322
        %v1333 = vadd.f32 %v1313, %v1322
        %v1334 = vadd.f32 %v1314, %v1322
        %v1335 = vadd.f32 %v1315, %v1322
        %v1336 = vadd.f32 %v1316, %v1322
        %v1337 = vadd.f32 %v1317, %v1322
        %v1338 = vadd.f32 %v1318, %v1322
        %v1339 = vld [vmem:[%s540] sm:$0xf]
        %v1340 = vld [vmem:[%s540 + $0x4] sm:$0xf]
        %v1341 = vld [vmem:[%s540 + $0x8] sm:$0xf]
        %v1342 = vld [vmem:[%s540 + $0xc] sm:$0xf]
        %v1343 = vld [vmem:[%s540 + $0x10] sm:$0xf]
        %v1344 = vld [vmem:[%s540 + $0x14] sm:$0xf]
        %v1345 = vld [vmem:[%s540 + $0x18] sm:$0xf]
        %v1346 = vld [vmem:[%s540 + $0x1c] sm:$0xf]
        %v1347 = vld [vmem:[%s540 + $0x20] sm:$0xf]
        %v1348 = vld [vmem:[%s540 + $0x24] sm:$0xf]
        %v1349 = vld [vmem:[%s540 + $0x28] sm:$0xf]
        %v1350 = vld [vmem:[%s540 + $0x2c] sm:$0xf]
        %v1351 = vld [vmem:[%s540 + $0x30] sm:$0xf]
        %v1352 = vld [vmem:[%s540 + $0x34] sm:$0xf]
        %v1353 = vld [vmem:[%s540 + $0x38] sm:$0xf]
        %v1354 = vld [vmem:[%s540 + $0x3c] sm:$0xf]
        %v1355 = vunpack.c.l.bf16 %v1339
        %v1356 = vunpack.c.l.bf16 %v1340
        %v1357 = vunpack.c.l.bf16 %v1341
        %v1358 = vunpack.c.l.bf16 %v1342
        %v1359 = vunpack.c.l.bf16 %v1343
        %v1360 = vunpack.c.l.bf16 %v1344
        %v1361 = vunpack.c.l.bf16 %v1345
        %v1362 = vunpack.c.l.bf16 %v1346
        %v1363 = vunpack.c.l.bf16 %v1347
        %v1364 = vunpack.c.l.bf16 %v1348
        %v1365 = vunpack.c.l.bf16 %v1349
        %v1366 = vunpack.c.l.bf16 %v1350
        %v1367 = vunpack.c.l.bf16 %v1351
        %v1368 = vunpack.c.l.bf16 %v1352
        %v1369 = vunpack.c.l.bf16 %v1353
        %v1370 = vunpack.c.l.bf16 %v1354
        %v1371 = vadd.f32 %v1323, %v1355
        %v1372 = vadd.f32 %v1324, %v1356
        %v1373 = vadd.f32 %v1325, %v1357
        %v1374 = vadd.f32 %v1326, %v1358
        %v1375 = vadd.f32 %v1327, %v1359
        %v1376 = vadd.f32 %v1328, %v1360
        %v1377 = vadd.f32 %v1329, %v1361
        %v1378 = vadd.f32 %v1330, %v1362
        %v1379 = vadd.f32 %v1331, %v1363
        %v1380 = vadd.f32 %v1332, %v1364
        %v1381 = vadd.f32 %v1333, %v1365
        %v1382 = vadd.f32 %v1334, %v1366
        %v1383 = vadd.f32 %v1335, %v1367
        %v1384 = vadd.f32 %v1336, %v1368
        %v1385 = vadd.f32 %v1337, %v1369
        %v1386 = vadd.f32 %v1338, %v1370
        %v1387 = vld [vmem:[%s4] sm:$0xf]
        %v1388 = vld [vmem:[%s4 + $0x4] sm:$0xf]
        %v1389 = vld [vmem:[%s4 + $0x8] sm:$0xf]
        %v1390 = vld [vmem:[%s4 + $0xc] sm:$0xf]
        %v1391 = vld [vmem:[%s4 + $0x10] sm:$0xf]
        %v1392 = vld [vmem:[%s4 + $0x14] sm:$0xf]
        %v1393 = vld [vmem:[%s4 + $0x18] sm:$0xf]
        %v1394 = vld [vmem:[%s4 + $0x1c] sm:$0xf]
        %v1395 = vld [vmem:[%s4 + $0x20] sm:$0xf]
        %v1396 = vld [vmem:[%s4 + $0x24] sm:$0xf]
        %v1397 = vld [vmem:[%s4 + $0x28] sm:$0xf]
        %v1398 = vld [vmem:[%s4 + $0x2c] sm:$0xf]
        %v1399 = vld [vmem:[%s4 + $0x30] sm:$0xf]
        %v1400 = vld [vmem:[%s4 + $0x34] sm:$0xf]
        %v1401 = vld [vmem:[%s4 + $0x38] sm:$0xf]
        %v1402 = vld [vmem:[%s4 + $0x3c] sm:$0xf]
        %vm1403 = vcmp.gt.bf16.partialorder %v1387, 0
        %vm1404 = vcmp.gt.bf16.partialorder %v1388, 0
        %vm1405 = vcmp.gt.bf16.partialorder %v1389, 0
        %vm1406 = vcmp.gt.bf16.partialorder %v1390, 0
        %vm1407 = vcmp.gt.bf16.partialorder %v1391, 0
        %vm1408 = vcmp.gt.bf16.partialorder %v1392, 0
        %vm1409 = vcmp.gt.bf16.partialorder %v1393, 0
        %vm1410 = vcmp.gt.bf16.partialorder %v1394, 0
        %vm1411 = vcmp.gt.bf16.partialorder %v1395, 0
        %vm1412 = vcmp.gt.bf16.partialorder %v1396, 0
        %vm1413 = vcmp.gt.bf16.partialorder %v1397, 0
        %vm1414 = vcmp.gt.bf16.partialorder %v1398, 0
        %vm1415 = vcmp.gt.bf16.partialorder %v1399, 0
        %vm1416 = vcmp.gt.bf16.partialorder %v1400, 0
        %vm1417 = vcmp.gt.bf16.partialorder %v1401, 0
        %vm1418 = vcmp.gt.bf16.partialorder %v1402, 0
        %v1419 = vsel %vm1403, 65537, 0
        %v1420 = vsel %vm1404, 65537, 0
        %v1421 = vsel %vm1405, 65537, 0
        %v1422 = vsel %vm1406, 65537, 0
        %v1423 = vsel %vm1407, 65537, 0
        %v1424 = vsel %vm1408, 65537, 0
        %v1425 = vsel %vm1409, 65537, 0
        %v1426 = vsel %vm1410, 65537, 0
        %v1427 = vsel %vm1411, 65537, 0
        %v1428 = vsel %vm1412, 65537, 0
        %v1429 = vsel %vm1413, 65537, 0
        %v1430 = vsel %vm1414, 65537, 0
        %v1431 = vsel %vm1415, 65537, 0
        %v1432 = vsel %vm1416, 65537, 0
        %v1433 = vsel %vm1417, 65537, 0
        %v1434 = vsel %vm1418, 65537, 0
        %v1435 = vunpack.c.l.b16 %v1419
        %v1436 = vunpack.c.l.b16 %v1420
        %v1437 = vunpack.c.l.b16 %v1421
        %v1438 = vunpack.c.l.b16 %v1422
        %v1439 = vunpack.c.l.b16 %v1423
        %v1440 = vunpack.c.l.b16 %v1424
        %v1441 = vunpack.c.l.b16 %v1425
        %v1442 = vunpack.c.l.b16 %v1426
        %v1443 = vunpack.c.l.b16 %v1427
        %v1444 = vunpack.c.l.b16 %v1428
        %v1445 = vunpack.c.l.b16 %v1429
        %v1446 = vunpack.c.l.b16 %v1430
        %v1447 = vunpack.c.l.b16 %v1431
        %v1448 = vunpack.c.l.b16 %v1432
        %v1449 = vunpack.c.l.b16 %v1433
        %v1450 = vunpack.c.l.b16 %v1434
        %vm1451 = vcmp.ne.s32.totalorder %v1435, 0
        %vm1452 = vcmp.ne.s32.totalorder %v1436, 0
        %vm1453 = vcmp.ne.s32.totalorder %v1437, 0
        %vm1454 = vcmp.ne.s32.totalorder %v1438, 0
        %vm1455 = vcmp.ne.s32.totalorder %v1439, 0
        %vm1456 = vcmp.ne.s32.totalorder %v1440, 0
        %vm1457 = vcmp.ne.s32.totalorder %v1441, 0
        %vm1458 = vcmp.ne.s32.totalorder %v1442, 0
        %vm1459 = vcmp.ne.s32.totalorder %v1443, 0
        %vm1460 = vcmp.ne.s32.totalorder %v1444, 0
        %vm1461 = vcmp.ne.s32.totalorder %v1445, 0
        %vm1462 = vcmp.ne.s32.totalorder %v1446, 0
        %vm1463 = vcmp.ne.s32.totalorder %v1447, 0
        %vm1464 = vcmp.ne.s32.totalorder %v1448, 0
        %vm1465 = vcmp.ne.s32.totalorder %v1449, 0
        %vm1466 = vcmp.ne.s32.totalorder %v1450, 0
        %v1467 = vsel %vm1451, %v1371, -1e+30
        %v1468 = vsel %vm1452, %v1372, -1e+30
        %v1469 = vsel %vm1453, %v1373, -1e+30
        %v1470 = vsel %vm1454, %v1374, -1e+30
        %v1471 = vsel %vm1455, %v1375, -1e+30
        %v1472 = vsel %vm1456, %v1376, -1e+30
        %v1473 = vsel %vm1457, %v1377, -1e+30
        %v1474 = vsel %vm1458, %v1378, -1e+30
        %v1475 = vsel %vm1459, %v1379, -1e+30
        %v1476 = vsel %vm1460, %v1380, -1e+30
        %v1477 = vsel %vm1461, %v1381, -1e+30
        %v1478 = vsel %vm1462, %v1382, -1e+30
        %v1479 = vsel %vm1463, %v1383, -1e+30
        %v1480 = vsel %vm1464, %v1384, -1e+30
        %v1481 = vsel %vm1465, %v1385, -1e+30
        %v1482 = vsel %vm1466, %v1386, -1e+30
        %1483 = vmax.xlane.f32.xlu0 %v1467
        %v1484 = vpop.xlane.xlu0 %1483
        %1485 = vmax.xlane.f32.xlu0 %v1468
        %v1486 = vpop.xlane.xlu0 %1485
        %1487 = vmax.xlane.f32.xlu0 %v1469
        %v1488 = vpop.xlane.xlu0 %1487
        %1489 = vmax.xlane.f32.xlu0 %v1470
        %v1490 = vpop.xlane.xlu0 %1489
        %1491 = vmax.xlane.f32.xlu0 %v1471
        %v1492 = vpop.xlane.xlu0 %1491
        %1493 = vmax.xlane.f32.xlu0 %v1472
        %v1494 = vpop.xlane.xlu0 %1493
        %1495 = vmax.xlane.f32.xlu0 %v1473
        %v1496 = vpop.xlane.xlu0 %1495
        %1497 = vmax.xlane.f32.xlu0 %v1474
        %v1498 = vpop.xlane.xlu0 %1497
        %1499 = vmax.xlane.f32.xlu0 %v1475
        %v1500 = vpop.xlane.xlu0 %1499
        %1501 = vmax.xlane.f32.xlu0 %v1476
        %v1502 = vpop.xlane.xlu0 %1501
        %1503 = vmax.xlane.f32.xlu0 %v1477
        %v1504 = vpop.xlane.xlu0 %1503
        %1505 = vmax.xlane.f32.xlu0 %v1478
        %v1506 = vpop.xlane.xlu0 %1505
        %1507 = vmax.xlane.f32.xlu0 %v1479
        %v1508 = vpop.xlane.xlu0 %1507
        %1509 = vmax.xlane.f32.xlu0 %v1480
        %v1510 = vpop.xlane.xlu0 %1509
        %1511 = vmax.xlane.f32.xlu0 %v1481
        %v1512 = vpop.xlane.xlu0 %1511
        %1513 = vmax.xlane.f32.xlu0 %v1482
        %v1514 = vpop.xlane.xlu0 %1513
        %v1515 = vsub.f32 %v1467, %v1484
        %v1516 = vsub.f32 %v1468, %v1486
        %v1517 = vsub.f32 %v1469, %v1488
        %v1518 = vsub.f32 %v1470, %v1490
        %v1519 = vsub.f32 %v1471, %v1492
        %v1520 = vsub.f32 %v1472, %v1494
        %v1521 = vsub.f32 %v1473, %v1496
        %v1522 = vsub.f32 %v1474, %v1498
        %v1523 = vsub.f32 %v1475, %v1500
        %v1524 = vsub.f32 %v1476, %v1502
        %v1525 = vsub.f32 %v1477, %v1504
        %v1526 = vsub.f32 %v1478, %v1506
        %v1527 = vsub.f32 %v1479, %v1508
        %v1528 = vsub.f32 %v1480, %v1510
        %v1529 = vsub.f32 %v1481, %v1512
        %v1530 = vsub.f32 %v1482, %v1514
        %v1531 = vmul.f32 %v1515, 1.442695
        %v1532 = vpow.pop %v1531
        %v1533 = vmul.f32 %v1516, 1.442695
        %v1534 = vpow.pop %v1533
        %v1535 = vmul.f32 %v1517, 1.442695
        %v1536 = vpow.pop %v1535
        %v1537 = vmul.f32 %v1518, 1.442695
        %v1538 = vpow.pop %v1537
        %v1539 = vmul.f32 %v1519, 1.442695
        %v1540 = vpow.pop %v1539
        %v1541 = vmul.f32 %v1520, 1.442695
        %v1542 = vpow.pop %v1541
        %v1543 = vmul.f32 %v1521, 1.442695
        %v1544 = vpow.pop %v1543
        %v1545 = vmul.f32 %v1522, 1.442695
        %v1546 = vpow.pop %v1545
        %v1547 = vmul.f32 %v1523, 1.442695
        %v1548 = vpow.pop %v1547
        %v1549 = vmul.f32 %v1524, 1.442695
        %v1550 = vpow.pop %v1549
        %v1551 = vmul.f32 %v1525, 1.442695
        %v1552 = vpow.pop %v1551
        %v1553 = vmul.f32 %v1526, 1.442695
        %v1554 = vpow.pop %v1553
        %v1555 = vmul.f32 %v1527, 1.442695
        %v1556 = vpow.pop %v1555
        %v1557 = vmul.f32 %v1528, 1.442695
        %v1558 = vpow.pop %v1557
        %v1559 = vmul.f32 %v1529, 1.442695
        %v1560 = vpow.pop %v1559
        %v1561 = vmul.f32 %v1530, 1.442695
        %v1562 = vpow.pop %v1561
        %1563 = vadd.xlane.f32.xlu0 %v1532
        %v1564 = vpop.xlane.xlu0 %1563
        %1565 = vadd.xlane.f32.xlu0 %v1534
        %v1566 = vpop.xlane.xlu0 %1565
        %1567 = vadd.xlane.f32.xlu0 %v1536
        %v1568 = vpop.xlane.xlu0 %1567
        %1569 = vadd.xlane.f32.xlu0 %v1538
        %v1570 = vpop.xlane.xlu0 %1569
        %1571 = vadd.xlane.f32.xlu0 %v1540
        %v1572 = vpop.xlane.xlu0 %1571
        %1573 = vadd.xlane.f32.xlu0 %v1542
        %v1574 = vpop.xlane.xlu0 %1573
        %1575 = vadd.xlane.f32.xlu0 %v1544
        %v1576 = vpop.xlane.xlu0 %1575
        %1577 = vadd.xlane.f32.xlu0 %v1546
        %v1578 = vpop.xlane.xlu0 %1577
        %1579 = vadd.xlane.f32.xlu0 %v1548
        %v1580 = vpop.xlane.xlu0 %1579
        %1581 = vadd.xlane.f32.xlu0 %v1550
        %v1582 = vpop.xlane.xlu0 %1581
        %1583 = vadd.xlane.f32.xlu0 %v1552
        %v1584 = vpop.xlane.xlu0 %1583
        %1585 = vadd.xlane.f32.xlu0 %v1554
        %v1586 = vpop.xlane.xlu0 %1585
        %1587 = vadd.xlane.f32.xlu0 %v1556
        %v1588 = vpop.xlane.xlu0 %1587
        %1589 = vadd.xlane.f32.xlu0 %v1558
        %v1590 = vpop.xlane.xlu0 %1589
        %1591 = vadd.xlane.f32.xlu0 %v1560
        %v1592 = vpop.xlane.xlu0 %1591
        %1593 = vadd.xlane.f32.xlu0 %v1562
        %v1594 = vpop.xlane.xlu0 %1593
        %v1595 = vld [vmem:[%s6] sm:$0xff]
        %v1596 = vld [vmem:[%s6 + $0x8] sm:$0xff]
        %v1597 = vld [vmem:[%s6 + $0x10] sm:$0xff]
        %v1598 = vld [vmem:[%s6 + $0x18] sm:$0xff]
        %v1599 = vld [vmem:[%s6 + $0x20] sm:$0xff]
        %v1600 = vld [vmem:[%s6 + $0x28] sm:$0xff]
        %v1601 = vld [vmem:[%s6 + $0x30] sm:$0xff]
        %v1602 = vld [vmem:[%s6 + $0x38] sm:$0xff]
        %v1603 = vld [vmem:[%s6 + $0x40] sm:$0xff]
        %v1604 = vld [vmem:[%s6 + $0x48] sm:$0xff]
        %v1605 = vld [vmem:[%s6 + $0x50] sm:$0xff]
        %v1606 = vld [vmem:[%s6 + $0x58] sm:$0xff]
        %v1607 = vld [vmem:[%s6 + $0x60] sm:$0xff]
        %v1608 = vld [vmem:[%s6 + $0x68] sm:$0xff]
        %v1609 = vld [vmem:[%s6 + $0x70] sm:$0xff]
        %v1610 = vld [vmem:[%s6 + $0x78] sm:$0xff]
        %v1611 = vrcp.pop %v1564
        %v1612 = vrcp.pop %v1566
        %v1613 = vrcp.pop %v1568
        %v1614 = vrcp.pop %v1570
        %v1615 = vrcp.pop %v1572
        %v1616 = vrcp.pop %v1574
        %v1617 = vrcp.pop %v1576
        %v1618 = vrcp.pop %v1578
        %v1619 = vrcp.pop %v1580
        %v1620 = vrcp.pop %v1582
        %v1621 = vrcp.pop %v1584
        %v1622 = vrcp.pop %v1586
        %v1623 = vrcp.pop %v1588
        %v1624 = vrcp.pop %v1590
        %v1625 = vrcp.pop %v1592
        %v1626 = vrcp.pop %v1594
        %v1627 = vmul.f32 %v1595, %v1611
        %v1628 = vmul.f32 %v1596, %v1612
        %v1629 = vmul.f32 %v1597, %v1613
        %v1630 = vmul.f32 %v1598, %v1614
        %v1631 = vmul.f32 %v1599, %v1615
        %v1632 = vmul.f32 %v1600, %v1616
        %v1633 = vmul.f32 %v1601, %v1617
        %v1634 = vmul.f32 %v1602, %v1618
        %v1635 = vmul.f32 %v1603, %v1619
        %v1636 = vmul.f32 %v1604, %v1620
        %v1637 = vmul.f32 %v1605, %v1621
        %v1638 = vmul.f32 %v1606, %v1622
        %v1639 = vmul.f32 %v1607, %v1623
        %v1640 = vmul.f32 %v1608, %v1624
        %v1641 = vmul.f32 %v1609, %v1625
        %v1642 = vmul.f32 %v1610, %v1626
        %1644 = vset.pattern.permute.xlu0 0
        %1645 = vperm.xlu0 %1644, %v1627
        %v1646 = vpop.permute.xlu0 %1645
        %1649 = vset.pattern.permute.xlu0 0
        %1650 = vperm.xlu0 %1649, %v1628
        %v1651 = vpop.permute.xlu0 %1650
        %1654 = vset.pattern.permute.xlu0 0
        %1655 = vperm.xlu0 %1654, %v1629
        %v1656 = vpop.permute.xlu0 %1655
        %1659 = vset.pattern.permute.xlu0 0
        %1660 = vperm.xlu0 %1659, %v1630
        %v1661 = vpop.permute.xlu0 %1660
        %1664 = vset.pattern.permute.xlu0 0
        %1665 = vperm.xlu0 %1664, %v1631
        %v1666 = vpop.permute.xlu0 %1665
        %1669 = vset.pattern.permute.xlu0 0
        %1670 = vperm.xlu0 %1669, %v1632
        %v1671 = vpop.permute.xlu0 %1670
        %1674 = vset.pattern.permute.xlu0 0
        %1675 = vperm.xlu0 %1674, %v1633
        %v1676 = vpop.permute.xlu0 %1675
        %1679 = vset.pattern.permute.xlu0 0
        %1680 = vperm.xlu0 %1679, %v1634
        %v1681 = vpop.permute.xlu0 %1680
        %1684 = vset.pattern.permute.xlu0 0
        %1685 = vperm.xlu0 %1684, %v1635
        %v1686 = vpop.permute.xlu0 %1685
        %1689 = vset.pattern.permute.xlu0 0
        %1690 = vperm.xlu0 %1689, %v1636
        %v1691 = vpop.permute.xlu0 %1690
        %1694 = vset.pattern.permute.xlu0 0
        %1695 = vperm.xlu0 %1694, %v1637
        %v1696 = vpop.permute.xlu0 %1695
        %1699 = vset.pattern.permute.xlu0 0
        %1700 = vperm.xlu0 %1699, %v1638
        %v1701 = vpop.permute.xlu0 %1700
        %1704 = vset.pattern.permute.xlu0 0
        %1705 = vperm.xlu0 %1704, %v1639
        %v1706 = vpop.permute.xlu0 %1705
        %1709 = vset.pattern.permute.xlu0 0
        %1710 = vperm.xlu0 %1709, %v1640
        %v1711 = vpop.permute.xlu0 %1710
        %1714 = vset.pattern.permute.xlu0 0
        %1715 = vperm.xlu0 %1714, %v1641
        %v1716 = vpop.permute.xlu0 %1715
        %1719 = vset.pattern.permute.xlu0 0
        %1720 = vperm.xlu0 %1719, %v1642
        %v1721 = vpop.permute.xlu0 %1720
        %v1723 = vmul.f32 %v1532, %v1646
        %v1724 = vmul.f32 %v1534, %v1651
        %v1725 = vmul.f32 %v1536, %v1656
        %v1726 = vmul.f32 %v1538, %v1661
        %v1727 = vmul.f32 %v1540, %v1666
        %v1728 = vmul.f32 %v1542, %v1671
        %v1729 = vmul.f32 %v1544, %v1676
        %v1730 = vmul.f32 %v1546, %v1681
        %v1731 = vmul.f32 %v1548, %v1686
        %v1732 = vmul.f32 %v1550, %v1691
        %v1733 = vmul.f32 %v1552, %v1696
        %v1734 = vmul.f32 %v1554, %v1701
        %v1735 = vmul.f32 %v1556, %v1706
        %v1736 = vmul.f32 %v1558, %v1711
        %v1737 = vmul.f32 %v1560, %v1716
        %v1738 = vmul.f32 %v1562, %v1721
        %v1739 = vpack.c.bf16 %v1724, %v1723
        %v1740 = vpack.c.bf16 %v1726, %v1725
        %v1741 = vpack.c.bf16 %v1728, %v1727
        %v1742 = vpack.c.bf16 %v1730, %v1729
        %v1743 = vpack.c.bf16 %v1732, %v1731
        %v1744 = vpack.c.bf16 %v1734, %v1733
        %v1745 = vpack.c.bf16 %v1736, %v1735
        %v1746 = vpack.c.bf16 %v1738, %v1737
        %1747 = vmatprep.subr.bf16.mxu0 0
        %1748 = vmatpush1.bf16.msra.mxu0 %v675
        %1749 = vmatprep.subr.bf16.mxu0 0
        %1750 = vmatpush1.bf16.msra.mxu0 %v674
        %1751 = vmatprep.subr.bf16.mxu0 0
        %1752 = vmatpush1.bf16.msra.mxu0 %v673
        %1753 = vmatprep.subr.bf16.mxu0 0
        %1754 = vmatpush1.bf16.msra.mxu0 %v672
        %1755 = vmatprep.subr.bf16.mxu0 0
        %1756 = vmatpush1.bf16.msra.mxu0 %v671
        %1757 = vmatprep.subr.bf16.mxu0 0
        %1758 = vmatpush1.bf16.msra.mxu0 %v670
        %1759 = vmatprep.subr.bf16.mxu0 0
        %1760 = vmatpush1.bf16.msra.mxu0 %v669
        %1761 = vmatprep.subr.bf16.mxu0 0
        %1762 = vmatpush1.bf16.msra.mxu0 %v668
        %1763 = vmatprep.subr.bf16.mxu0 0
        %1764 = vmatpush2.bf16.msra.mxu0 0
        %1765 = vmatprep.subr.bf16.mxu0 0
        %1766 = vmatpush2.bf16.msra.mxu0 0
        %1767 = vmatprep.subr.bf16.mxu0 0
        %1768 = vmatpush2.bf16.msra.mxu0 0
        %1769 = vmatprep.subr.bf16.mxu0 0
        %1770 = vmatpush2.bf16.msra.mxu0 0
        %1771 = vmatprep.subr.bf16.mxu0 0
        %1772 = vmatpush2.bf16.msra.mxu0 0
        %1773 = vmatprep.subr.bf16.mxu0 0
        %1774 = vmatpush2.bf16.msra.mxu0 0
        %1775 = vmatprep.subr.bf16.mxu0 0
        %1776 = vmatpush2.bf16.msra.mxu0 0
        %1777 = vmatprep.subr.bf16.mxu0 0
        %1778 = vmatpush2.bf16.msra.mxu0 0
        %1779 = vmatprep.mubr.bf16.mxu0 0
        %1780 = vmatmul.mubr.bf16.gmra.mxu0 %v1739
        %v1781 = vpop.f32.mrf.mxu0
        %v1782 = vadd.f32 0.0, %v1781
        %v1783 = vpop.f32.mrf.mxu0
        %v1784 = vpop.f32.mrf.mxu0
        %v1785 = vadd.f32 0.0, %v1784
        %v1786 = vpop.f32.mrf.mxu0
        %1787 = vmatprep.mubr.bf16.mxu0 0
        %1788 = vmatmul.mubr.bf16.gmra.mxu0 %v1740
        %v1789 = vpop.f32.mrf.mxu0
        %v1790 = vadd.f32 0.0, %v1789
        %v1791 = vpop.f32.mrf.mxu0
        %v1792 = vpop.f32.mrf.mxu0
        %v1793 = vadd.f32 0.0, %v1792
        %v1794 = vpop.f32.mrf.mxu0
        %1795 = vmatprep.mubr.bf16.mxu0 0
        %1796 = vmatmul.mubr.bf16.gmra.mxu0 %v1741
        %v1797 = vpop.f32.mrf.mxu0
        %v1798 = vadd.f32 0.0, %v1797
        %v1799 = vpop.f32.mrf.mxu0
        %v1800 = vpop.f32.mrf.mxu0
        %v1801 = vadd.f32 0.0, %v1800
        %v1802 = vpop.f32.mrf.mxu0
        %1803 = vmatprep.mubr.bf16.mxu0 0
        %1804 = vmatmul.mubr.bf16.gmra.mxu0 %v1742
        %v1805 = vpop.f32.mrf.mxu0
        %v1806 = vadd.f32 0.0, %v1805
        %v1807 = vpop.f32.mrf.mxu0
        %v1808 = vpop.f32.mrf.mxu0
        %v1809 = vadd.f32 0.0, %v1808
        %v1810 = vpop.f32.mrf.mxu0
        %1811 = vmatprep.mubr.bf16.mxu0 0
        %1812 = vmatmul.mubr.bf16.gmra.mxu0 %v1743
        %v1813 = vpop.f32.mrf.mxu0
        %v1814 = vadd.f32 0.0, %v1813
        %v1815 = vpop.f32.mrf.mxu0
        %v1816 = vpop.f32.mrf.mxu0
        %v1817 = vadd.f32 0.0, %v1816
        %v1818 = vpop.f32.mrf.mxu0
        %1819 = vmatprep.mubr.bf16.mxu0 0
        %1820 = vmatmul.mubr.bf16.gmra.mxu0 %v1744
        %v1821 = vpop.f32.mrf.mxu0
        %v1822 = vadd.f32 0.0, %v1821
        %v1823 = vpop.f32.mrf.mxu0
        %v1824 = vpop.f32.mrf.mxu0
        %v1825 = vadd.f32 0.0, %v1824
        %v1826 = vpop.f32.mrf.mxu0
        %1827 = vmatprep.mubr.bf16.mxu0 0
        %1828 = vmatmul.mubr.bf16.gmra.mxu0 %v1745
        %v1829 = vpop.f32.mrf.mxu0
        %v1830 = vadd.f32 0.0, %v1829
        %v1831 = vpop.f32.mrf.mxu0
        %v1832 = vpop.f32.mrf.mxu0
        %v1833 = vadd.f32 0.0, %v1832
        %v1834 = vpop.f32.mrf.mxu0
        %1835 = vmatprep.mubr.bf16.mxu0 0
        %1836 = vmatmul.mubr.bf16.gmra.mxu0 %v1746
        %v1837 = vpop.f32.mrf.mxu0
        %v1838 = vadd.f32 0.0, %v1837
        %v1839 = vpop.f32.mrf.mxu0
        %v1840 = vpop.f32.mrf.mxu0
        %v1841 = vadd.f32 0.0, %v1840
        %v1842 = vpop.f32.mrf.mxu0
        %1843 = vdwg.mxu0
        %v1844 = vpack.c.bf16 %v1785, %v1782
        %v1845 = vpack.c.bf16 %v1793, %v1790
        %v1846 = vpack.c.bf16 %v1801, %v1798
        %v1847 = vpack.c.bf16 %v1809, %v1806
        %v1848 = vpack.c.bf16 %v1817, %v1814
        %v1849 = vpack.c.bf16 %v1825, %v1822
        %v1850 = vpack.c.bf16 %v1833, %v1830
        %v1851 = vpack.c.bf16 %v1841, %v1838
        %1852 = vmatprep.subr.bf16.mxu0 %v1851
        %1853 = vmatpush1.bf16.msra.mxu0 %v667
        %1854 = vmatprep.subr.bf16.mxu0 %v1850
        %1855 = vmatpush1.bf16.msra.mxu0 %v666
        %1856 = vmatprep.subr.bf16.mxu0 %v1849
        %1857 = vmatpush1.bf16.msra.mxu0 %v665
        %1858 = vmatprep.subr.bf16.mxu0 %v1848
        %1859 = vmatpush1.bf16.msra.mxu0 %v664
        %1860 = vmatprep.subr.bf16.mxu0 %v1847
        %1861 = vmatpush1.bf16.msra.mxu0 %v663
        %1862 = vmatprep.subr.bf16.mxu0 %v1846
        %1863 = vmatpush1.bf16.msra.mxu0 %v662
        %1864 = vmatprep.subr.bf16.mxu0 %v1845
        %1865 = vmatpush1.bf16.msra.mxu0 %v661
        %1866 = vmatprep.subr.bf16.mxu0 %v1844
        %1867 = vmatpush1.bf16.msra.mxu0 %v660
        %1868 = vmatprep.subr.bf16.mxu0 0
        %1869 = vmatpush2.bf16.msra.mxu0 0
        %1870 = vmatprep.subr.bf16.mxu0 0
        %1871 = vmatpush2.bf16.msra.mxu0 0
        %1872 = vmatprep.subr.bf16.mxu0 0
        %1873 = vmatpush2.bf16.msra.mxu0 0
        %1874 = vmatprep.subr.bf16.mxu0 0
        %1875 = vmatpush2.bf16.msra.mxu0 0
        %1876 = vmatprep.subr.bf16.mxu0 0
        %1877 = vmatpush2.bf16.msra.mxu0 0
        %1878 = vmatprep.subr.bf16.mxu0 0
        %1879 = vmatpush2.bf16.msra.mxu0 0
        %1880 = vmatprep.subr.bf16.mxu0 0
        %1881 = vmatpush2.bf16.msra.mxu0 0
        %1882 = vmatprep.subr.bf16.mxu0 0
        %1883 = vmatpush2.bf16.msra.mxu0 0
        %1884 = vmatprep.mubr.bf16.mxu0 0
        %1885 = vmatmul.mubr.bf16.gmra.mxu0 %v1295
        %v1886 = vpop.f32.mrf.mxu0
        %v1887 = vadd.f32 0.0, %v1886
        %v1888 = vpop.f32.mrf.mxu0
        %v1889 = vadd.f32 0.0, %v1888
        %v1890 = vpop.f32.mrf.mxu0
        %v1891 = vadd.f32 0.0, %v1890
        %v1892 = vpop.f32.mrf.mxu0
        %v1893 = vadd.f32 0.0, %v1892
        %1894 = vmatprep.mubr.bf16.mxu0 0
        %1895 = vmatmul.mubr.bf16.gmra.mxu0 %v1296
        %v1896 = vpop.f32.mrf.mxu0
        %v1897 = vadd.f32 0.0, %v1896
        %v1898 = vpop.f32.mrf.mxu0
        %v1899 = vadd.f32 0.0, %v1898
        %v1900 = vpop.f32.mrf.mxu0
        %v1901 = vadd.f32 0.0, %v1900
        %v1902 = vpop.f32.mrf.mxu0
        %v1903 = vadd.f32 0.0, %v1902
        %1904 = vmatprep.mubr.bf16.mxu0 0
        %1905 = vmatmul.mubr.bf16.gmra.mxu0 %v1297
        %v1906 = vpop.f32.mrf.mxu0
        %v1907 = vadd.f32 0.0, %v1906
        %v1908 = vpop.f32.mrf.mxu0
        %v1909 = vadd.f32 0.0, %v1908
        %v1910 = vpop.f32.mrf.mxu0
        %v1911 = vadd.f32 0.0, %v1910
        %v1912 = vpop.f32.mrf.mxu0
        %v1913 = vadd.f32 0.0, %v1912
        %1914 = vmatprep.mubr.bf16.mxu0 0
        %1915 = vmatmul.mubr.bf16.gmra.mxu0 %v1298
        %v1916 = vpop.f32.mrf.mxu0
        %v1917 = vadd.f32 0.0, %v1916
        %v1918 = vpop.f32.mrf.mxu0
        %v1919 = vadd.f32 0.0, %v1918
        %v1920 = vpop.f32.mrf.mxu0
        %v1921 = vadd.f32 0.0, %v1920
        %v1922 = vpop.f32.mrf.mxu0
        %v1923 = vadd.f32 0.0, %v1922
        %1924 = vmatprep.mubr.bf16.mxu0 0
        %1925 = vmatmul.mubr.bf16.gmra.mxu0 %v1299
        %v1926 = vpop.f32.mrf.mxu0
        %v1927 = vadd.f32 0.0, %v1926
        %v1928 = vpop.f32.mrf.mxu0
        %v1929 = vadd.f32 0.0, %v1928
        %v1930 = vpop.f32.mrf.mxu0
        %v1931 = vadd.f32 0.0, %v1930
        %v1932 = vpop.f32.mrf.mxu0
        %v1933 = vadd.f32 0.0, %v1932
        %1934 = vmatprep.mubr.bf16.mxu0 0
        %1935 = vmatmul.mubr.bf16.gmra.mxu0 %v1300
        %v1936 = vpop.f32.mrf.mxu0
        %v1937 = vadd.f32 0.0, %v1936
        %v1938 = vpop.f32.mrf.mxu0
        %v1939 = vadd.f32 0.0, %v1938
        %v1940 = vpop.f32.mrf.mxu0
        %v1941 = vadd.f32 0.0, %v1940
        %v1942 = vpop.f32.mrf.mxu0
        %v1943 = vadd.f32 0.0, %v1942
        %1944 = vmatprep.mubr.bf16.mxu0 0
        %1945 = vmatmul.mubr.bf16.gmra.mxu0 %v1301
        %v1946 = vpop.f32.mrf.mxu0
        %v1947 = vadd.f32 0.0, %v1946
        %v1948 = vpop.f32.mrf.mxu0
        %v1949 = vadd.f32 0.0, %v1948
        %v1950 = vpop.f32.mrf.mxu0
        %v1951 = vadd.f32 0.0, %v1950
        %v1952 = vpop.f32.mrf.mxu0
        %v1953 = vadd.f32 0.0, %v1952
        %1954 = vmatprep.mubr.bf16.mxu0 0
        %1955 = vmatmul.mubr.bf16.gmra.mxu0 %v1302
        %v1956 = vpop.f32.mrf.mxu0
        %v1957 = vadd.f32 0.0, %v1956
        %v1958 = vpop.f32.mrf.mxu0
        %v1959 = vadd.f32 0.0, %v1958
        %v1960 = vpop.f32.mrf.mxu0
        %v1961 = vadd.f32 0.0, %v1960
        %v1962 = vpop.f32.mrf.mxu0
        %v1963 = vadd.f32 0.0, %v1962
        %1964 = vdwg.mxu0
        %v1965 = vpack.c.bf16 %v1891, %v1887
        %v1966 = vpack.c.bf16 %v1901, %v1897
        %v1967 = vpack.c.bf16 %v1911, %v1907
        %v1968 = vpack.c.bf16 %v1921, %v1917
        %v1969 = vpack.c.bf16 %v1931, %v1927
        %v1970 = vpack.c.bf16 %v1941, %v1937
        %v1971 = vpack.c.bf16 %v1951, %v1947
        %v1972 = vpack.c.bf16 %v1961, %v1957
        %1973 = vmatprep.subr.bf16.mxu0 0
        %1974 = vmatpush1.bf16.msra.mxu0 %v1972
        %1975 = vmatprep.subr.bf16.mxu0 0
        %1976 = vmatpush1.bf16.msra.mxu0 %v1971
        %1977 = vmatprep.subr.bf16.mxu0 0
        %1978 = vmatpush1.bf16.msra.mxu0 %v1970
        %1979 = vmatprep.subr.bf16.mxu0 0
        %1980 = vmatpush1.bf16.msra.mxu0 %v1969
        %1981 = vmatprep.subr.bf16.mxu0 0
        %1982 = vmatpush1.bf16.msra.mxu0 %v1968
        %1983 = vmatprep.subr.bf16.mxu0 0
        %1984 = vmatpush1.bf16.msra.mxu0 %v1967
        %1985 = vmatprep.subr.bf16.mxu0 0
        %1986 = vmatpush1.bf16.msra.mxu0 %v1966
        %1987 = vmatprep.subr.bf16.mxu0 0
        %1988 = vmatpush1.bf16.msra.mxu0 %v1965
        %1989 = vmatprep.subr.bf16.mxu0 0
        %1990 = vmatpush2.bf16.msra.mxu0 0
        %1991 = vmatprep.subr.bf16.mxu0 0
        %1992 = vmatpush2.bf16.msra.mxu0 0
        %1993 = vmatprep.subr.bf16.mxu0 0
        %1994 = vmatpush2.bf16.msra.mxu0 0
        %1995 = vmatprep.subr.bf16.mxu0 0
        %1996 = vmatpush2.bf16.msra.mxu0 0
        %1997 = vmatprep.subr.bf16.mxu0 0
        %1998 = vmatpush2.bf16.msra.mxu0 0
        %1999 = vmatprep.subr.bf16.mxu0 0
        %2000 = vmatpush2.bf16.msra.mxu0 0
        %2001 = vmatprep.subr.bf16.mxu0 0
        %2002 = vmatpush2.bf16.msra.mxu0 0
        %2003 = vmatprep.subr.bf16.mxu0 0
        %2004 = vmatpush2.bf16.msra.mxu0 0
        %2005 = vmatprep.mubr.bf16.mxu0 0
        %2006 = vmatmul.mubr.bf16.gmra.mxu0 %v1739
        %v2007 = vpop.f32.mrf.mxu0
        %v2008 = vadd.f32 %v1782, %v2007
        %v2009 = vpop.f32.mrf.mxu0
        %v2010 = vpop.f32.mrf.mxu0
        %v2011 = vadd.f32 %v1785, %v2010
        %v2012 = vpop.f32.mrf.mxu0
        %2013 = vmatprep.mubr.bf16.mxu0 0
        %2014 = vmatmul.mubr.bf16.gmra.mxu0 %v1740
        %v2015 = vpop.f32.mrf.mxu0
        %v2016 = vadd.f32 %v1790, %v2015
        %v2017 = vpop.f32.mrf.mxu0
        %v2018 = vpop.f32.mrf.mxu0
        %v2019 = vadd.f32 %v1793, %v2018
        %v2020 = vpop.f32.mrf.mxu0
        %2021 = vmatprep.mubr.bf16.mxu0 0
        %2022 = vmatmul.mubr.bf16.gmra.mxu0 %v1741
        %v2023 = vpop.f32.mrf.mxu0
        %v2024 = vadd.f32 %v1798, %v2023
        %v2025 = vpop.f32.mrf.mxu0
        %v2026 = vpop.f32.mrf.mxu0
        %v2027 = vadd.f32 %v1801, %v2026
        %v2028 = vpop.f32.mrf.mxu0
        %2029 = vmatprep.mubr.bf16.mxu0 0
        %2030 = vmatmul.mubr.bf16.gmra.mxu0 %v1742
        %v2031 = vpop.f32.mrf.mxu0
        %v2032 = vadd.f32 %v1806, %v2031
        %v2033 = vpop.f32.mrf.mxu0
        %v2034 = vpop.f32.mrf.mxu0
        %v2035 = vadd.f32 %v1809, %v2034
        %v2036 = vpop.f32.mrf.mxu0
        %2037 = vmatprep.mubr.bf16.mxu0 0
        %2038 = vmatmul.mubr.bf16.gmra.mxu0 %v1743
        %v2039 = vpop.f32.mrf.mxu0
        %v2040 = vadd.f32 %v1814, %v2039
        %v2041 = vpop.f32.mrf.mxu0
        %v2042 = vpop.f32.mrf.mxu0
        %v2043 = vadd.f32 %v1817, %v2042
        %v2044 = vpop.f32.mrf.mxu0
        %2045 = vmatprep.mubr.bf16.mxu0 0
        %2046 = vmatmul.mubr.bf16.gmra.mxu0 %v1744
        %v2047 = vpop.f32.mrf.mxu0
        %v2048 = vadd.f32 %v1822, %v2047
        %v2049 = vpop.f32.mrf.mxu0
        %v2050 = vpop.f32.mrf.mxu0
        %v2051 = vadd.f32 %v1825, %v2050
        %v2052 = vpop.f32.mrf.mxu0
        %2053 = vmatprep.mubr.bf16.mxu0 0
        %2054 = vmatmul.mubr.bf16.gmra.mxu0 %v1745
        %v2055 = vpop.f32.mrf.mxu0
        %v2056 = vadd.f32 %v1830, %v2055
        %v2057 = vpop.f32.mrf.mxu0
        %v2058 = vpop.f32.mrf.mxu0
        %v2059 = vadd.f32 %v1833, %v2058
        %v2060 = vpop.f32.mrf.mxu0
        %2061 = vmatprep.mubr.bf16.mxu0 0
        %2062 = vmatmul.mubr.bf16.gmra.mxu0 %v1746
        %v2063 = vpop.f32.mrf.mxu0
        %v2064 = vadd.f32 %v1838, %v2063
        %v2065 = vpop.f32.mrf.mxu0
        %v2066 = vpop.f32.mrf.mxu0
        %v2067 = vadd.f32 %v1841, %v2066
        %v2068 = vpop.f32.mrf.mxu0
        %2069 = vdwg.mxu0
        %v2070 = vmul.f32 %v2008, 0.5
        %v2071 = vmul.f32 %v2011, 0.5
        %v2072 = vmul.f32 %v2016, 0.5
        %v2073 = vmul.f32 %v2019, 0.5
        %v2074 = vmul.f32 %v2024, 0.5
        %v2075 = vmul.f32 %v2027, 0.5
        %v2076 = vmul.f32 %v2032, 0.5
        %v2077 = vmul.f32 %v2035, 0.5
        %v2078 = vmul.f32 %v2040, 0.5
        %v2079 = vmul.f32 %v2043, 0.5
        %v2080 = vmul.f32 %v2048, 0.5
        %v2081 = vmul.f32 %v2051, 0.5
        %v2082 = vmul.f32 %v2056, 0.5
        %v2083 = vmul.f32 %v2059, 0.5
        %v2084 = vmul.f32 %v2064, 0.5
        %v2085 = vmul.f32 %v2067, 0.5
        %v2086 = vadd.f32 %v1887, %v1889
        %v2087 = vadd.f32 %v1891, %v1893
        %v2088 = vadd.f32 %v1897, %v1899
        %v2089 = vadd.f32 %v1901, %v1903
        %v2090 = vadd.f32 %v1907, %v1909
        %v2091 = vadd.f32 %v1911, %v1913
        %v2092 = vadd.f32 %v1917, %v1919
        %v2093 = vadd.f32 %v1921, %v1923
        %v2094 = vadd.f32 %v1927, %v1929
        %v2095 = vadd.f32 %v1931, %v1933
        %v2096 = vadd.f32 %v1937, %v1939
        %v2097 = vadd.f32 %v1941, %v1943
        %v2098 = vadd.f32 %v1947, %v1949
        %v2099 = vadd.f32 %v1951, %v1953
        %v2100 = vadd.f32 %v1957, %v1959
        %v2101 = vadd.f32 %v1961, %v1963
        %v2102 = vmul.f32 %v2086, 0.5
        %v2103 = vmul.f32 %v2087, 0.5
        %v2104 = vmul.f32 %v2088, 0.5
        %v2105 = vmul.f32 %v2089, 0.5
        %v2106 = vmul.f32 %v2090, 0.5
        %v2107 = vmul.f32 %v2091, 0.5
        %v2108 = vmul.f32 %v2092, 0.5
        %v2109 = vmul.f32 %v2093, 0.5
        %v2110 = vmul.f32 %v2094, 0.5
        %v2111 = vmul.f32 %v2095, 0.5
        %v2112 = vmul.f32 %v2096, 0.5
        %v2113 = vmul.f32 %v2097, 0.5
        %v2114 = vmul.f32 %v2098, 0.5
        %v2115 = vmul.f32 %v2099, 0.5
        %v2116 = vmul.f32 %v2100, 0.5
        %v2117 = vmul.f32 %v2101, 0.5
        %v2118 = vmul.f32 %v2070, 0.9
        %v2119 = vmul.f32 %v2071, 0.9
        %v2120 = vmul.f32 %v2072, 0.9
        %v2121 = vmul.f32 %v2073, 0.9
        %v2122 = vmul.f32 %v2074, 0.9
        %v2123 = vmul.f32 %v2075, 0.9
        %v2124 = vmul.f32 %v2076, 0.9
        %v2125 = vmul.f32 %v2077, 0.9
        %v2126 = vmul.f32 %v2078, 0.9
        %v2127 = vmul.f32 %v2079, 0.9
        %v2128 = vmul.f32 %v2080, 0.9
        %v2129 = vmul.f32 %v2081, 0.9
        %v2130 = vmul.f32 %v2082, 0.9
        %v2131 = vmul.f32 %v2083, 0.9
        %v2132 = vmul.f32 %v2084, 0.9
        %v2133 = vmul.f32 %v2085, 0.9
        %v2134 = vld [vmem:[%s2] sm:$0xff]
        %v2135 = vld [vmem:[%s2 + $0x8] sm:$0xff]
        %v2136 = vld [vmem:[%s2 + $0x10] sm:$0xff]
        %v2137 = vld [vmem:[%s2 + $0x18] sm:$0xff]
        %v2138 = vld [vmem:[%s2 + $0x20] sm:$0xff]
        %v2139 = vld [vmem:[%s2 + $0x28] sm:$0xff]
        %v2140 = vld [vmem:[%s2 + $0x30] sm:$0xff]
        %v2141 = vld [vmem:[%s2 + $0x38] sm:$0xff]
        %v2142 = vld [vmem:[%s2 + $0x40] sm:$0xff]
        %v2143 = vld [vmem:[%s2 + $0x48] sm:$0xff]
        %v2144 = vld [vmem:[%s2 + $0x50] sm:$0xff]
        %v2145 = vld [vmem:[%s2 + $0x58] sm:$0xff]
        %v2146 = vld [vmem:[%s2 + $0x60] sm:$0xff]
        %v2147 = vld [vmem:[%s2 + $0x68] sm:$0xff]
        %v2148 = vld [vmem:[%s2 + $0x70] sm:$0xff]
        %v2149 = vld [vmem:[%s2 + $0x78] sm:$0xff]
        %v2150 = vmul.f32 %v2134, 0.1
        %v2151 = vmul.f32 %v2135, 0.1
        %v2152 = vmul.f32 %v2136, 0.1
        %v2153 = vmul.f32 %v2137, 0.1
        %v2154 = vmul.f32 %v2138, 0.1
        %v2155 = vmul.f32 %v2139, 0.1
        %v2156 = vmul.f32 %v2140, 0.1
        %v2157 = vmul.f32 %v2141, 0.1
        %v2158 = vmul.f32 %v2142, 0.1
        %v2159 = vmul.f32 %v2143, 0.1
        %v2160 = vmul.f32 %v2144, 0.1
        %v2161 = vmul.f32 %v2145, 0.1
        %v2162 = vmul.f32 %v2146, 0.1
        %v2163 = vmul.f32 %v2147, 0.1
        %v2164 = vmul.f32 %v2148, 0.1
        %v2165 = vmul.f32 %v2149, 0.1
        %v2166 = vadd.f32 %v2118, %v2150
        %v2167 = vadd.f32 %v2119, %v2151
        %v2168 = vadd.f32 %v2120, %v2152
        %v2169 = vadd.f32 %v2121, %v2153
        %v2170 = vadd.f32 %v2122, %v2154
        %v2171 = vadd.f32 %v2123, %v2155
        %v2172 = vadd.f32 %v2124, %v2156
        %v2173 = vadd.f32 %v2125, %v2157
        %v2174 = vadd.f32 %v2126, %v2158
        %v2175 = vadd.f32 %v2127, %v2159
        %v2176 = vadd.f32 %v2128, %v2160
        %v2177 = vadd.f32 %v2129, %v2161
        %v2178 = vadd.f32 %v2130, %v2162
        %v2179 = vadd.f32 %v2131, %v2163
        %v2180 = vadd.f32 %v2132, %v2164
        %v2181 = vadd.f32 %v2133, %v2165
        %s2182 = ssub.f32 1.0, %s626
        %v2183 = vstv %s2182
        %v2184 = vmul.f32 %v2183, %v2166
        %v2185 = vmul.f32 %v2183, %v2167
        %v2186 = vmul.f32 %v2183, %v2168
        %v2187 = vmul.f32 %v2183, %v2169
        %v2188 = vmul.f32 %v2183, %v2170
        %v2189 = vmul.f32 %v2183, %v2171
        %v2190 = vmul.f32 %v2183, %v2172
        %v2191 = vmul.f32 %v2183, %v2173
        %v2192 = vmul.f32 %v2183, %v2174
        %v2193 = vmul.f32 %v2183, %v2175
        %v2194 = vmul.f32 %v2183, %v2176
        %v2195 = vmul.f32 %v2183, %v2177
        %v2196 = vmul.f32 %v2183, %v2178
        %v2197 = vmul.f32 %v2183, %v2179
        %v2198 = vmul.f32 %v2183, %v2180
        %v2199 = vmul.f32 %v2183, %v2181
        %v2200 = vpack.c.bf16 %v2167, %v2166
        %v2201 = vpack.c.bf16 %v2169, %v2168
        %v2202 = vpack.c.bf16 %v2171, %v2170
        %v2203 = vpack.c.bf16 %v2173, %v2172
        %v2204 = vpack.c.bf16 %v2175, %v2174
        %v2205 = vpack.c.bf16 %v2177, %v2176
        %v2206 = vpack.c.bf16 %v2179, %v2178
        %v2207 = vpack.c.bf16 %v2181, %v2180
        %v2208 = vld [vmem:[%s549] sm:$0xf]
        %v2209 = vld [vmem:[%s549 + $0x4] sm:$0xf]
        %v2210 = vld [vmem:[%s549 + $0x8] sm:$0xf]
        %v2211 = vld [vmem:[%s549 + $0xc] sm:$0xf]
        %v2212 = vld [vmem:[%s549 + $0x10] sm:$0xf]
        %v2213 = vld [vmem:[%s549 + $0x14] sm:$0xf]
        %v2214 = vld [vmem:[%s549 + $0x18] sm:$0xf]
        %v2215 = vld [vmem:[%s549 + $0x1c] sm:$0xf]
        %v2216 = vld [vmem:[%s549 + $0x20] sm:$0xf]
        %v2217 = vld [vmem:[%s549 + $0x24] sm:$0xf]
        %v2218 = vld [vmem:[%s549 + $0x28] sm:$0xf]
        %v2219 = vld [vmem:[%s549 + $0x2c] sm:$0xf]
        %v2220 = vld [vmem:[%s549 + $0x30] sm:$0xf]
        %v2221 = vld [vmem:[%s549 + $0x34] sm:$0xf]
        %v2222 = vld [vmem:[%s549 + $0x38] sm:$0xf]
        %v2223 = vld [vmem:[%s549 + $0x3c] sm:$0xf]
        %v2240 = vunpack.c.l.b16 %v2208
        %v2241 = vunpack.c.l.b16 %v2209
        %v2242 = vunpack.c.l.b16 %v2210
        %v2243 = vunpack.c.l.b16 %v2211
        %v2244 = vunpack.c.l.b16 %v2212
        %v2245 = vunpack.c.l.b16 %v2213
        %v2246 = vunpack.c.l.b16 %v2214
        %v2247 = vunpack.c.l.b16 %v2215
        %v2248 = vunpack.c.l.b16 %v2216
        %v2249 = vunpack.c.l.b16 %v2217
        %v2250 = vunpack.c.l.b16 %v2218
        %v2251 = vunpack.c.l.b16 %v2219
        %v2252 = vunpack.c.l.b16 %v2220
        %v2253 = vunpack.c.l.b16 %v2221
        %v2254 = vunpack.c.l.b16 %v2222
        %v2255 = vunpack.c.l.b16 %v2223
        %v2256 = vpack.c.b16 %v2241, %v2240
        %v2257 = vpack.c.b16 %v2243, %v2242
        %v2258 = vpack.c.b16 %v2245, %v2244
        %v2259 = vpack.c.b16 %v2247, %v2246
        %v2260 = vpack.c.b16 %v2249, %v2248
        %v2261 = vpack.c.b16 %v2251, %v2250
        %v2262 = vpack.c.b16 %v2253, %v2252
        %v2263 = vpack.c.b16 %v2255, %v2254
        %2272 = vmatprep.subr.bf16.mxu0 0
        %2273 = vmatpush1.bf16.msra.mxu0 %v2263
        %2274 = vmatprep.subr.bf16.mxu0 0
        %2275 = vmatpush1.bf16.msra.mxu0 %v2262
        %2276 = vmatprep.subr.bf16.mxu0 0
        %2277 = vmatpush1.bf16.msra.mxu0 %v2261
        %2278 = vmatprep.subr.bf16.mxu0 0
        %2279 = vmatpush1.bf16.msra.mxu0 %v2260
        %2280 = vmatprep.subr.bf16.mxu0 0
        %2281 = vmatpush1.bf16.msra.mxu0 %v2259
        %2282 = vmatprep.subr.bf16.mxu0 0
        %2283 = vmatpush1.bf16.msra.mxu0 %v2258
        %2284 = vmatprep.subr.bf16.mxu0 0
        %2285 = vmatpush1.bf16.msra.mxu0 %v2257
        %2286 = vmatprep.subr.bf16.mxu0 0
        %2287 = vmatpush1.bf16.msra.mxu0 %v2256
        %2288 = vmatprep.subr.bf16.mxu0 0
        %2289 = vmatpush2.bf16.msra.mxu0 0
        %2290 = vmatprep.subr.bf16.mxu0 0
        %2291 = vmatpush2.bf16.msra.mxu0 0
        %2292 = vmatprep.subr.bf16.mxu0 0
        %2293 = vmatpush2.bf16.msra.mxu0 0
        %2294 = vmatprep.subr.bf16.mxu0 0
        %2295 = vmatpush2.bf16.msra.mxu0 0
        %2296 = vmatprep.subr.bf16.mxu0 0
        %2297 = vmatpush2.bf16.msra.mxu0 0
        %2298 = vmatprep.subr.bf16.mxu0 0
        %2299 = vmatpush2.bf16.msra.mxu0 0
        %2300 = vmatprep.subr.bf16.mxu0 0
        %2301 = vmatpush2.bf16.msra.mxu0 0
        %2302 = vmatprep.subr.bf16.mxu0 0
        %2303 = vmatpush2.bf16.msra.mxu0 0
        %2304 = vmatprep.mubr.bf16.mxu0 0
        %2305 = vmatmul.mubr.bf16.gmra.mxu0 %v2200
        %v2306 = vpop.f32.mrf.mxu0
        %v2307 = vadd.f32 0.0, %v2306
        %v2308 = vpop.f32.mrf.mxu0
        %v2309 = vpop.f32.mrf.mxu0
        %v2310 = vadd.f32 0.0, %v2309
        %v2311 = vpop.f32.mrf.mxu0
        %2312 = vmatprep.mubr.bf16.mxu0 0
        %2313 = vmatmul.mubr.bf16.gmra.mxu0 %v2201
        %v2314 = vpop.f32.mrf.mxu0
        %v2315 = vadd.f32 0.0, %v2314
        %v2316 = vpop.f32.mrf.mxu0
        %v2317 = vpop.f32.mrf.mxu0
        %v2318 = vadd.f32 0.0, %v2317
        %v2319 = vpop.f32.mrf.mxu0
        %2320 = vmatprep.mubr.bf16.mxu0 0
        %2321 = vmatmul.mubr.bf16.gmra.mxu0 %v2202
        %v2322 = vpop.f32.mrf.mxu0
        %v2323 = vadd.f32 0.0, %v2322
        %v2324 = vpop.f32.mrf.mxu0
        %v2325 = vpop.f32.mrf.mxu0
        %v2326 = vadd.f32 0.0, %v2325
        %v2327 = vpop.f32.mrf.mxu0
        %2328 = vmatprep.mubr.bf16.mxu0 0
        %2329 = vmatmul.mubr.bf16.gmra.mxu0 %v2203
        %v2330 = vpop.f32.mrf.mxu0
        %v2331 = vadd.f32 0.0, %v2330
        %v2332 = vpop.f32.mrf.mxu0
        %v2333 = vpop.f32.mrf.mxu0
        %v2334 = vadd.f32 0.0, %v2333
        %v2335 = vpop.f32.mrf.mxu0
        %2336 = vmatprep.mubr.bf16.mxu0 0
        %2337 = vmatmul.mubr.bf16.gmra.mxu0 %v2204
        %v2338 = vpop.f32.mrf.mxu0
        %v2339 = vadd.f32 0.0, %v2338
        %v2340 = vpop.f32.mrf.mxu0
        %v2341 = vpop.f32.mrf.mxu0
        %v2342 = vadd.f32 0.0, %v2341
        %v2343 = vpop.f32.mrf.mxu0
        %2344 = vmatprep.mubr.bf16.mxu0 0
        %2345 = vmatmul.mubr.bf16.gmra.mxu0 %v2205
        %v2346 = vpop.f32.mrf.mxu0
        %v2347 = vadd.f32 0.0, %v2346
        %v2348 = vpop.f32.mrf.mxu0
        %v2349 = vpop.f32.mrf.mxu0
        %v2350 = vadd.f32 0.0, %v2349
        %v2351 = vpop.f32.mrf.mxu0
        %2352 = vmatprep.mubr.bf16.mxu0 0
        %2353 = vmatmul.mubr.bf16.gmra.mxu0 %v2206
        %v2354 = vpop.f32.mrf.mxu0
        %v2355 = vadd.f32 0.0, %v2354
        %v2356 = vpop.f32.mrf.mxu0
        %v2357 = vpop.f32.mrf.mxu0
        %v2358 = vadd.f32 0.0, %v2357
        %v2359 = vpop.f32.mrf.mxu0
        %2360 = vmatprep.mubr.bf16.mxu0 0
        %2361 = vmatmul.mubr.bf16.gmra.mxu0 %v2207
        %v2362 = vpop.f32.mrf.mxu0
        %v2363 = vadd.f32 0.0, %v2362
        %v2364 = vpop.f32.mrf.mxu0
        %v2365 = vpop.f32.mrf.mxu0
        %v2366 = vadd.f32 0.0, %v2365
        %v2367 = vpop.f32.mrf.mxu0
        %2368 = vdwg.mxu0
        %v2369 = vstv %s626
        %v2370 = vmul.f32 %v2369, %v2307
        %v2371 = vmul.f32 %v2369, %v2310
        %v2372 = vmul.f32 %v2369, %v2315
        %v2373 = vmul.f32 %v2369, %v2318
        %v2374 = vmul.f32 %v2369, %v2323
        %v2375 = vmul.f32 %v2369, %v2326
        %v2376 = vmul.f32 %v2369, %v2331
        %v2377 = vmul.f32 %v2369, %v2334
        %v2378 = vmul.f32 %v2369, %v2339
        %v2379 = vmul.f32 %v2369, %v2342
        %v2380 = vmul.f32 %v2369, %v2347
        %v2381 = vmul.f32 %v2369, %v2350
        %v2382 = vmul.f32 %v2369, %v2355
        %v2383 = vmul.f32 %v2369, %v2358
        %v2384 = vmul.f32 %v2369, %v2363
        %v2385 = vmul.f32 %v2369, %v2366
        %v2386 = vadd.f32 %v2184, %v2370
        %v2387 = vadd.f32 %v2185, %v2371
        %v2388 = vadd.f32 %v2186, %v2372
        %v2389 = vadd.f32 %v2187, %v2373
        %v2390 = vadd.f32 %v2188, %v2374
        %v2391 = vadd.f32 %v2189, %v2375
        %v2392 = vadd.f32 %v2190, %v2376
        %v2393 = vadd.f32 %v2191, %v2377
        %v2394 = vadd.f32 %v2192, %v2378
        %v2395 = vadd.f32 %v2193, %v2379
        %v2396 = vadd.f32 %v2194, %v2380
        %v2397 = vadd.f32 %v2195, %v2381
        %v2398 = vadd.f32 %v2196, %v2382
        %v2399 = vadd.f32 %v2197, %v2383
        %v2400 = vadd.f32 %v2198, %v2384
        %v2401 = vadd.f32 %v2199, %v2385
        %v2402 = vmul.f32 %v2102, 0.9
        %v2403 = vmul.f32 %v2103, 0.9
        %v2404 = vmul.f32 %v2104, 0.9
        %v2405 = vmul.f32 %v2105, 0.9
        %v2406 = vmul.f32 %v2106, 0.9
        %v2407 = vmul.f32 %v2107, 0.9
        %v2408 = vmul.f32 %v2108, 0.9
        %v2409 = vmul.f32 %v2109, 0.9
        %v2410 = vmul.f32 %v2110, 0.9
        %v2411 = vmul.f32 %v2111, 0.9
        %v2412 = vmul.f32 %v2112, 0.9
        %v2413 = vmul.f32 %v2113, 0.9
        %v2414 = vmul.f32 %v2114, 0.9
        %v2415 = vmul.f32 %v2115, 0.9
        %v2416 = vmul.f32 %v2116, 0.9
        %v2417 = vmul.f32 %v2117, 0.9
        %v2418 = vld [vmem:[%s3] sm:$0xff]
        %v2419 = vld [vmem:[%s3 + $0x8] sm:$0xff]
        %v2420 = vld [vmem:[%s3 + $0x10] sm:$0xff]
        %v2421 = vld [vmem:[%s3 + $0x18] sm:$0xff]
        %v2422 = vld [vmem:[%s3 + $0x20] sm:$0xff]
        %v2423 = vld [vmem:[%s3 + $0x28] sm:$0xff]
        %v2424 = vld [vmem:[%s3 + $0x30] sm:$0xff]
        %v2425 = vld [vmem:[%s3 + $0x38] sm:$0xff]
        %v2426 = vld [vmem:[%s3 + $0x40] sm:$0xff]
        %v2427 = vld [vmem:[%s3 + $0x48] sm:$0xff]
        %v2428 = vld [vmem:[%s3 + $0x50] sm:$0xff]
        %v2429 = vld [vmem:[%s3 + $0x58] sm:$0xff]
        %v2430 = vld [vmem:[%s3 + $0x60] sm:$0xff]
        %v2431 = vld [vmem:[%s3 + $0x68] sm:$0xff]
        %v2432 = vld [vmem:[%s3 + $0x70] sm:$0xff]
        %v2433 = vld [vmem:[%s3 + $0x78] sm:$0xff]
        %v2434 = vmul.f32 %v2418, 0.1
        %v2435 = vmul.f32 %v2419, 0.1
        %v2436 = vmul.f32 %v2420, 0.1
        %v2437 = vmul.f32 %v2421, 0.1
        %v2438 = vmul.f32 %v2422, 0.1
        %v2439 = vmul.f32 %v2423, 0.1
        %v2440 = vmul.f32 %v2424, 0.1
        %v2441 = vmul.f32 %v2425, 0.1
        %v2442 = vmul.f32 %v2426, 0.1
        %v2443 = vmul.f32 %v2427, 0.1
        %v2444 = vmul.f32 %v2428, 0.1
        %v2445 = vmul.f32 %v2429, 0.1
        %v2446 = vmul.f32 %v2430, 0.1
        %v2447 = vmul.f32 %v2431, 0.1
        %v2448 = vmul.f32 %v2432, 0.1
        %v2449 = vmul.f32 %v2433, 0.1
        %v2450 = vadd.f32 %v2402, %v2434
        %v2451 = vadd.f32 %v2403, %v2435
        %v2452 = vadd.f32 %v2404, %v2436
        %v2453 = vadd.f32 %v2405, %v2437
        %v2454 = vadd.f32 %v2406, %v2438
        %v2455 = vadd.f32 %v2407, %v2439
        %v2456 = vadd.f32 %v2408, %v2440
        %v2457 = vadd.f32 %v2409, %v2441
        %v2458 = vadd.f32 %v2410, %v2442
        %v2459 = vadd.f32 %v2411, %v2443
        %v2460 = vadd.f32 %v2412, %v2444
        %v2461 = vadd.f32 %v2413, %v2445
        %v2462 = vadd.f32 %v2414, %v2446
        %v2463 = vadd.f32 %v2415, %v2447
        %v2464 = vadd.f32 %v2416, %v2448
        %v2465 = vadd.f32 %v2417, %v2449
        %v2466 = vmul.f32 %v2183, %v2450
        %v2467 = vmul.f32 %v2183, %v2451
        %v2468 = vmul.f32 %v2183, %v2452
        %v2469 = vmul.f32 %v2183, %v2453
        %v2470 = vmul.f32 %v2183, %v2454
        %v2471 = vmul.f32 %v2183, %v2455
        %v2472 = vmul.f32 %v2183, %v2456
        %v2473 = vmul.f32 %v2183, %v2457
        %v2474 = vmul.f32 %v2183, %v2458
        %v2475 = vmul.f32 %v2183, %v2459
        %v2476 = vmul.f32 %v2183, %v2460
        %v2477 = vmul.f32 %v2183, %v2461
        %v2478 = vmul.f32 %v2183, %v2462
        %v2479 = vmul.f32 %v2183, %v2463
        %v2480 = vmul.f32 %v2183, %v2464
        %v2481 = vmul.f32 %v2183, %v2465
        %v2482 = vpack.c.bf16 %v2451, %v2450
        %v2483 = vpack.c.bf16 %v2453, %v2452
        %v2484 = vpack.c.bf16 %v2455, %v2454
        %v2485 = vpack.c.bf16 %v2457, %v2456
        %v2486 = vpack.c.bf16 %v2459, %v2458
        %v2487 = vpack.c.bf16 %v2461, %v2460
        %v2488 = vpack.c.bf16 %v2463, %v2462
        %v2489 = vpack.c.bf16 %v2465, %v2464
        %v2490 = vld [vmem:[%s554] sm:$0xf]
        %v2491 = vld [vmem:[%s554 + $0x4] sm:$0xf]
        %v2492 = vld [vmem:[%s554 + $0x8] sm:$0xf]
        %v2493 = vld [vmem:[%s554 + $0xc] sm:$0xf]
        %v2494 = vld [vmem:[%s554 + $0x10] sm:$0xf]
        %v2495 = vld [vmem:[%s554 + $0x14] sm:$0xf]
        %v2496 = vld [vmem:[%s554 + $0x18] sm:$0xf]
        %v2497 = vld [vmem:[%s554 + $0x1c] sm:$0xf]
        %v2498 = vld [vmem:[%s554 + $0x20] sm:$0xf]
        %v2499 = vld [vmem:[%s554 + $0x24] sm:$0xf]
        %v2500 = vld [vmem:[%s554 + $0x28] sm:$0xf]
        %v2501 = vld [vmem:[%s554 + $0x2c] sm:$0xf]
        %v2502 = vld [vmem:[%s554 + $0x30] sm:$0xf]
        %v2503 = vld [vmem:[%s554 + $0x34] sm:$0xf]
        %v2504 = vld [vmem:[%s554 + $0x38] sm:$0xf]
        %v2505 = vld [vmem:[%s554 + $0x3c] sm:$0xf]
        %v2522 = vunpack.c.l.b16 %v2490
        %v2523 = vunpack.c.l.b16 %v2491
        %v2524 = vunpack.c.l.b16 %v2492
        %v2525 = vunpack.c.l.b16 %v2493
        %v2526 = vunpack.c.l.b16 %v2494
        %v2527 = vunpack.c.l.b16 %v2495
        %v2528 = vunpack.c.l.b16 %v2496
        %v2529 = vunpack.c.l.b16 %v2497
        %v2530 = vunpack.c.l.b16 %v2498
        %v2531 = vunpack.c.l.b16 %v2499
        %v2532 = vunpack.c.l.b16 %v2500
        %v2533 = vunpack.c.l.b16 %v2501
        %v2534 = vunpack.c.l.b16 %v2502
        %v2535 = vunpack.c.l.b16 %v2503
        %v2536 = vunpack.c.l.b16 %v2504
        %v2537 = vunpack.c.l.b16 %v2505
        %v2538 = vpack.c.b16 %v2523, %v2522
        %v2539 = vpack.c.b16 %v2525, %v2524
        %v2540 = vpack.c.b16 %v2527, %v2526
        %v2541 = vpack.c.b16 %v2529, %v2528
        %v2542 = vpack.c.b16 %v2531, %v2530
        %v2543 = vpack.c.b16 %v2533, %v2532
        %v2544 = vpack.c.b16 %v2535, %v2534
        %v2545 = vpack.c.b16 %v2537, %v2536
        %2554 = vmatprep.subr.bf16.mxu0 0
        %2555 = vmatpush1.bf16.msra.mxu0 %v2545
        %2556 = vmatprep.subr.bf16.mxu0 0
        %2557 = vmatpush1.bf16.msra.mxu0 %v2544
        %2558 = vmatprep.subr.bf16.mxu0 0
        %2559 = vmatpush1.bf16.msra.mxu0 %v2543
        %2560 = vmatprep.subr.bf16.mxu0 0
        %2561 = vmatpush1.bf16.msra.mxu0 %v2542
        %2562 = vmatprep.subr.bf16.mxu0 0
        %2563 = vmatpush1.bf16.msra.mxu0 %v2541
        %2564 = vmatprep.subr.bf16.mxu0 0
        %2565 = vmatpush1.bf16.msra.mxu0 %v2540
        %2566 = vmatprep.subr.bf16.mxu0 0
        %2567 = vmatpush1.bf16.msra.mxu0 %v2539
        %2568 = vmatprep.subr.bf16.mxu0 0
        %2569 = vmatpush1.bf16.msra.mxu0 %v2538
        %2570 = vmatprep.subr.bf16.mxu0 0
        %2571 = vmatpush2.bf16.msra.mxu0 0
        %2572 = vmatprep.subr.bf16.mxu0 0
        %2573 = vmatpush2.bf16.msra.mxu0 0
        %2574 = vmatprep.subr.bf16.mxu0 0
        %2575 = vmatpush2.bf16.msra.mxu0 0
        %2576 = vmatprep.subr.bf16.mxu0 0
        %2577 = vmatpush2.bf16.msra.mxu0 0
        %2578 = vmatprep.subr.bf16.mxu0 0
        %2579 = vmatpush2.bf16.msra.mxu0 0
        %2580 = vmatprep.subr.bf16.mxu0 0
        %2581 = vmatpush2.bf16.msra.mxu0 0
        %2582 = vmatprep.subr.bf16.mxu0 0
        %2583 = vmatpush2.bf16.msra.mxu0 0
        %2584 = vmatprep.subr.bf16.mxu0 0
        %2585 = vmatpush2.bf16.msra.mxu0 0
        %2586 = vmatprep.mubr.bf16.mxu0 0
        %2587 = vmatmul.mubr.bf16.gmra.mxu0 %v2482
        %v2588 = vpop.f32.mrf.mxu0
        %v2589 = vadd.f32 0.0, %v2588
        %v2590 = vpop.f32.mrf.mxu0
        %v2591 = vpop.f32.mrf.mxu0
        %v2592 = vadd.f32 0.0, %v2591
        %v2593 = vpop.f32.mrf.mxu0
        %2594 = vmatprep.mubr.bf16.mxu0 0
        %2595 = vmatmul.mubr.bf16.gmra.mxu0 %v2483
        %v2596 = vpop.f32.mrf.mxu0
        %v2597 = vadd.f32 0.0, %v2596
        %v2598 = vpop.f32.mrf.mxu0
        %v2599 = vpop.f32.mrf.mxu0
        %v2600 = vadd.f32 0.0, %v2599
        %v2601 = vpop.f32.mrf.mxu0
        %2602 = vmatprep.mubr.bf16.mxu0 0
        %2603 = vmatmul.mubr.bf16.gmra.mxu0 %v2484
        %v2604 = vpop.f32.mrf.mxu0
        %v2605 = vadd.f32 0.0, %v2604
        %v2606 = vpop.f32.mrf.mxu0
        %v2607 = vpop.f32.mrf.mxu0
        %v2608 = vadd.f32 0.0, %v2607
        %v2609 = vpop.f32.mrf.mxu0
        %2610 = vmatprep.mubr.bf16.mxu0 0
        %2611 = vmatmul.mubr.bf16.gmra.mxu0 %v2485
        %v2612 = vpop.f32.mrf.mxu0
        %v2613 = vadd.f32 0.0, %v2612
        %v2614 = vpop.f32.mrf.mxu0
        %v2615 = vpop.f32.mrf.mxu0
        %v2616 = vadd.f32 0.0, %v2615
        %v2617 = vpop.f32.mrf.mxu0
        %2618 = vmatprep.mubr.bf16.mxu0 0
        %2619 = vmatmul.mubr.bf16.gmra.mxu0 %v2486
        %v2620 = vpop.f32.mrf.mxu0
        %v2621 = vadd.f32 0.0, %v2620
        %v2622 = vpop.f32.mrf.mxu0
        %v2623 = vpop.f32.mrf.mxu0
        %v2624 = vadd.f32 0.0, %v2623
        %v2625 = vpop.f32.mrf.mxu0
        %2626 = vmatprep.mubr.bf16.mxu0 0
        %2627 = vmatmul.mubr.bf16.gmra.mxu0 %v2487
        %v2628 = vpop.f32.mrf.mxu0
        %v2629 = vadd.f32 0.0, %v2628
        %v2630 = vpop.f32.mrf.mxu0
        %v2631 = vpop.f32.mrf.mxu0
        %v2632 = vadd.f32 0.0, %v2631
        %v2633 = vpop.f32.mrf.mxu0
        %2634 = vmatprep.mubr.bf16.mxu0 0
        %2635 = vmatmul.mubr.bf16.gmra.mxu0 %v2488
        %v2636 = vpop.f32.mrf.mxu0
        %v2637 = vadd.f32 0.0, %v2636
        %v2638 = vpop.f32.mrf.mxu0
        %v2639 = vpop.f32.mrf.mxu0
        %v2640 = vadd.f32 0.0, %v2639
        %v2641 = vpop.f32.mrf.mxu0
        %2642 = vmatprep.mubr.bf16.mxu0 0
        %2643 = vmatmul.mubr.bf16.gmra.mxu0 %v2489
        %v2644 = vpop.f32.mrf.mxu0
        %v2645 = vadd.f32 0.0, %v2644
        %v2646 = vpop.f32.mrf.mxu0
        %v2647 = vpop.f32.mrf.mxu0
        %v2648 = vadd.f32 0.0, %v2647
        %v2649 = vpop.f32.mrf.mxu0
        %2650 = vdwg.mxu0
        %v2651 = vmul.f32 %v2369, %v2589
        %v2652 = vmul.f32 %v2369, %v2592
        %v2653 = vmul.f32 %v2369, %v2597
        %v2654 = vmul.f32 %v2369, %v2600
        %v2655 = vmul.f32 %v2369, %v2605
        %v2656 = vmul.f32 %v2369, %v2608
        %v2657 = vmul.f32 %v2369, %v2613
        %v2658 = vmul.f32 %v2369, %v2616
        %v2659 = vmul.f32 %v2369, %v2621
        %v2660 = vmul.f32 %v2369, %v2624
        %v2661 = vmul.f32 %v2369, %v2629
        %v2662 = vmul.f32 %v2369, %v2632
        %v2663 = vmul.f32 %v2369, %v2637
        %v2664 = vmul.f32 %v2369, %v2640
        %v2665 = vmul.f32 %v2369, %v2645
        %v2666 = vmul.f32 %v2369, %v2648
        %v2667 = vadd.f32 %v2466, %v2651
        %v2668 = vadd.f32 %v2467, %v2652
        %v2669 = vadd.f32 %v2468, %v2653
        %v2670 = vadd.f32 %v2469, %v2654
        %v2671 = vadd.f32 %v2470, %v2655
        %v2672 = vadd.f32 %v2471, %v2656
        %v2673 = vadd.f32 %v2472, %v2657
        %v2674 = vadd.f32 %v2473, %v2658
        %v2675 = vadd.f32 %v2474, %v2659
        %v2676 = vadd.f32 %v2475, %v2660
        %v2677 = vadd.f32 %v2476, %v2661
        %v2678 = vadd.f32 %v2477, %v2662
        %v2679 = vadd.f32 %v2478, %v2663
        %v2680 = vadd.f32 %v2479, %v2664
        %v2681 = vadd.f32 %v2480, %v2665
        %v2682 = vadd.f32 %v2481, %v2666
        %v2683 = vmax.f32 %v2386, 0.0
        %v2684 = vmax.f32 %v2387, 0.0
        %v2685 = vmax.f32 %v2388, 0.0
        %v2686 = vmax.f32 %v2389, 0.0
        %v2687 = vmax.f32 %v2390, 0.0
        %v2688 = vmax.f32 %v2391, 0.0
        %v2689 = vmax.f32 %v2392, 0.0
        %v2690 = vmax.f32 %v2393, 0.0
        %v2691 = vmax.f32 %v2394, 0.0
        %v2692 = vmax.f32 %v2395, 0.0
        %v2693 = vmax.f32 %v2396, 0.0
        %v2694 = vmax.f32 %v2397, 0.0
        %v2695 = vmax.f32 %v2398, 0.0
        %v2696 = vmax.f32 %v2399, 0.0
        %v2697 = vmax.f32 %v2400, 0.0
        %v2698 = vmax.f32 %v2401, 0.0
        %2699 = vst [vmem:[#allocation2] sm:$0xff] %v2683
        %2700 = vst [vmem:[#allocation2 + $0x8] sm:$0xff] %v2684
        %2701 = vst [vmem:[#allocation2 + $0x10] sm:$0xff] %v2685
        %2702 = vst [vmem:[#allocation2 + $0x18] sm:$0xff] %v2686
        %2703 = vst [vmem:[#allocation2 + $0x20] sm:$0xff] %v2687
        %2704 = vst [vmem:[#allocation2 + $0x28] sm:$0xff] %v2688
        %2705 = vst [vmem:[#allocation2 + $0x30] sm:$0xff] %v2689
        %2706 = vst [vmem:[#allocation2 + $0x38] sm:$0xff] %v2690
        %2707 = vst [vmem:[#allocation2 + $0x40] sm:$0xff] %v2691
        %2708 = vst [vmem:[#allocation2 + $0x48] sm:$0xff] %v2692
        %2709 = vst [vmem:[#allocation2 + $0x50] sm:$0xff] %v2693
        %2710 = vst [vmem:[#allocation2 + $0x58] sm:$0xff] %v2694
        %2711 = vst [vmem:[#allocation2 + $0x60] sm:$0xff] %v2695
        %2712 = vst [vmem:[#allocation2 + $0x68] sm:$0xff] %v2696
        %2713 = vst [vmem:[#allocation2 + $0x70] sm:$0xff] %v2697
        %2714 = vst [vmem:[#allocation2 + $0x78] sm:$0xff] %v2698
        %v2715 = vmax.f32 %v2667, 0.0
        %v2716 = vmax.f32 %v2668, 0.0
        %v2717 = vmax.f32 %v2669, 0.0
        %v2718 = vmax.f32 %v2670, 0.0
        %v2719 = vmax.f32 %v2671, 0.0
        %v2720 = vmax.f32 %v2672, 0.0
        %v2721 = vmax.f32 %v2673, 0.0
        %v2722 = vmax.f32 %v2674, 0.0
        %v2723 = vmax.f32 %v2675, 0.0
        %v2724 = vmax.f32 %v2676, 0.0
        %v2725 = vmax.f32 %v2677, 0.0
        %v2726 = vmax.f32 %v2678, 0.0
        %v2727 = vmax.f32 %v2679, 0.0
        %v2728 = vmax.f32 %v2680, 0.0
        %v2729 = vmax.f32 %v2681, 0.0
        %v2730 = vmax.f32 %v2682, 0.0
        %2731 = vst [vmem:[#allocation3] sm:$0xff] %v2715
        %2732 = vst [vmem:[#allocation3 + $0x8] sm:$0xff] %v2716
        %2733 = vst [vmem:[#allocation3 + $0x10] sm:$0xff] %v2717
        %2734 = vst [vmem:[#allocation3 + $0x18] sm:$0xff] %v2718
        %2735 = vst [vmem:[#allocation3 + $0x20] sm:$0xff] %v2719
        %2736 = vst [vmem:[#allocation3 + $0x28] sm:$0xff] %v2720
        %2737 = vst [vmem:[#allocation3 + $0x30] sm:$0xff] %v2721
        %2738 = vst [vmem:[#allocation3 + $0x38] sm:$0xff] %v2722
        %2739 = vst [vmem:[#allocation3 + $0x40] sm:$0xff] %v2723
        %2740 = vst [vmem:[#allocation3 + $0x48] sm:$0xff] %v2724
        %2741 = vst [vmem:[#allocation3 + $0x50] sm:$0xff] %v2725
        %2742 = vst [vmem:[#allocation3 + $0x58] sm:$0xff] %v2726
        %2743 = vst [vmem:[#allocation3 + $0x60] sm:$0xff] %v2727
        %2744 = vst [vmem:[#allocation3 + $0x68] sm:$0xff] %v2728
        %2745 = vst [vmem:[#allocation3 + $0x70] sm:$0xff] %v2729
        %2746 = vst [vmem:[#allocation3 + $0x78] sm:$0xff] %v2730
        %p2747 = scmp.eq.s32.totalorder %s28, 3
        // Predicated region
        $region85: #{hyper_encoder_forward.5} parent=71 // pred_check
          %p2748 = pneg %p2747
        $region86: #{hyper_encoder_forward.5} parent=71 // pred_check_branch
          %2750 = sbr.rel (%p2748) target = $region88
        $region87: #{hyper_encoder_forward.5} parent=71 // pred_region
          %2751 = vst [vmem:[%s13] sm:$0xff] %v2386
          %2752 = vst [vmem:[%s13 + $0x8] sm:$0xff] %v2387
          %2753 = vst [vmem:[%s13 + $0x10] sm:$0xff] %v2388
          %2754 = vst [vmem:[%s13 + $0x18] sm:$0xff] %v2389
          %2755 = vst [vmem:[%s13 + $0x20] sm:$0xff] %v2390
          %2756 = vst [vmem:[%s13 + $0x28] sm:$0xff] %v2391
          %2757 = vst [vmem:[%s13 + $0x30] sm:$0xff] %v2392
          %2758 = vst [vmem:[%s13 + $0x38] sm:$0xff] %v2393
          %2759 = vst [vmem:[%s13 + $0x40] sm:$0xff] %v2394
          %2760 = vst [vmem:[%s13 + $0x48] sm:$0xff] %v2395
          %2761 = vst [vmem:[%s13 + $0x50] sm:$0xff] %v2396
          %2762 = vst [vmem:[%s13 + $0x58] sm:$0xff] %v2397
          %2763 = vst [vmem:[%s13 + $0x60] sm:$0xff] %v2398
          %2764 = vst [vmem:[%s13 + $0x68] sm:$0xff] %v2399
          %2765 = vst [vmem:[%s13 + $0x70] sm:$0xff] %v2400
          %2766 = vst [vmem:[%s13 + $0x78] sm:$0xff] %v2401
          %2767 = vst [vmem:[%s14] sm:$0xff] %v2667
          %2768 = vst [vmem:[%s14 + $0x8] sm:$0xff] %v2668
          %2769 = vst [vmem:[%s14 + $0x10] sm:$0xff] %v2669
          %2770 = vst [vmem:[%s14 + $0x18] sm:$0xff] %v2670
          %2771 = vst [vmem:[%s14 + $0x20] sm:$0xff] %v2671
          %2772 = vst [vmem:[%s14 + $0x28] sm:$0xff] %v2672
          %2773 = vst [vmem:[%s14 + $0x30] sm:$0xff] %v2673
          %2774 = vst [vmem:[%s14 + $0x38] sm:$0xff] %v2674
          %2775 = vst [vmem:[%s14 + $0x40] sm:$0xff] %v2675
          %2776 = vst [vmem:[%s14 + $0x48] sm:$0xff] %v2676
          %2777 = vst [vmem:[%s14 + $0x50] sm:$0xff] %v2677
          %2778 = vst [vmem:[%s14 + $0x58] sm:$0xff] %v2678
          %2779 = vst [vmem:[%s14 + $0x60] sm:$0xff] %v2679
          %2780 = vst [vmem:[%s14 + $0x68] sm:$0xff] %v2680
          %2781 = vst [vmem:[%s14 + $0x70] sm:$0xff] %v2681
          %2782 = vst [vmem:[%s14 + $0x78] sm:$0xff] %v2682
        $region88: #{hyper_encoder_forward.5} parent=71 // pred_fallthru
          _
        // Predicated region
        $region89: #{hyper_encoder_forward.5} parent=71 // pred_check
          %p2783 = pneg %p339
        $region90: #{hyper_encoder_forward.5} parent=71 // pred_check_branch
          %2785 = sbr.rel (%p2783) target = $region92
        $region91: #{hyper_encoder_forward.5} parent=71 // pred_region
          _
        $region92: #{hyper_encoder_forward.5} parent=71 // pred_fallthru
          _
        // Predicated region
        $region93: #{hyper_encoder_forward.5} parent=71 // pred_check
          %p2786 = pneg %p360
        $region94: #{hyper_encoder_forward.5} parent=71 // pred_check_branch
          %2788 = sbr.rel (%p2786) target = $region96
        $region95: #{hyper_encoder_forward.5} parent=71 // pred_region
          _
        $region96: #{hyper_encoder_forward.5} parent=71 // pred_fallthru
          _
        // Predicated region
        $region97: #{hyper_encoder_forward.5} parent=71 // pred_check
          %p2789 = pneg %p339
        $region98: #{hyper_encoder_forward.5} parent=71 // pred_check_branch
          %2791 = sbr.rel (%p2789) target = $region100
        $region99: #{hyper_encoder_forward.5} parent=71 // pred_region
          _
        $region100: #{hyper_encoder_forward.5} parent=71 // pred_fallthru
          _
        // Predicated region
        $region101: #{hyper_encoder_forward.5} parent=71 // pred_check
          %p2792 = pneg %p360
        $region102: #{hyper_encoder_forward.5} parent=71 // pred_check_branch
          %2794 = sbr.rel (%p2792) target = $region104
        $region103: #{hyper_encoder_forward.5} parent=71 // pred_region
          _
        $region104: #{hyper_encoder_forward.5} parent=71 // pred_fallthru
          _
      $region72: #{hyper_encoder_forward.5} parent=5 // pred_fallthru
        _
      %p2795 = scmp.le.s32.totalorder 2, %s23
      // Predicated region
      $region105: #{hyper_encoder_forward.5} parent=5 // pred_check
        %p2796 = pneg %p2795
      $region106: #{hyper_encoder_forward.5} parent=5 // pred_check_branch
        %2798 = sbr.rel (%p2796) target = $region108
      $region107: #{hyper_encoder_forward.5} parent=5 // pred_region
        %s2799 = ssub.s32 %s23, 2
      $region108: #{hyper_encoder_forward.5} parent=5 // pred_fallthru
        _
    $region6: #{hyper_encoder_forward.5} parent=1 // loop_footer
      %s27 = sadd.s32 1, %s23
    $region7: #{hyper_encoder_forward.5} parent=1 // loop_footer_branch
      %22 = sbr.rel target = $region3
    $region8: #{hyper_encoder_forward.5} parent=1 // loop_exit
      _
    %2800 = vsyncpa [#allocation5], 1
    %s2801 = scalar_lea.sflag [#allocation5], 1
    %2802 = vsyncpa %s2801, 1
    %2803 = vsyncpa [#allocation7], 1

</llo_original>
